<compile_context>
chip_gen: v7x
topology: tpu7x:2x2x1
jax: 0.10.0
libtpu: 0.0.40
codegen_flags: <defaults>
</compile_context>

<pallas_src>
import numpy as np
import jax
import jax.numpy as jnp
from jax.experimental import pallas as pl
from jax.experimental.pallas import tpu as pltpu

# ---------------- config (matches the PyTorch module) ----------------
LATENT_DIM = 16
FC_DIM = 256                      # fc output == deconv1 input channels
D1_CH = 128                       # deconv1 output channels
OUT_CH = 3                        # reconstruction channels
K = 5                             # kernel size of both transposed convs
S1 = K                            # deconv1 spatial output: 1x1 -> 5x5
S2 = S1 + K - 1                   # deconv2 spatial output: 5x5 -> 9x9
D1_FLAT = S1 * S1 * D1_CH         # 3200 = 25 * 128 (lane dense)
OUT_FLAT = OUT_CH * S2 * S2       # 243 real outputs, NCHW flatten order (oc, y, x)
OUT_PAD = 256                     # lane-padded output width (243 -> 256)
MAX_TB = 256                      # batch tile (MXU M dim); 128 also fine on v5e


# ---------------- fused Pallas kernel ----------------
def image_decoder_kernel(z_ref, wfc_ref, bfc_ref, w1_ref, b1_ref, w2_ref, b2_ref,
                         out_ref, a1_ref):
    # fc + ReLU (tiny matmul, f32)
    h = jnp.dot(z_ref[...], wfc_ref[...],
                preferred_element_type=jnp.float32) + bfc_ref[...]
    h = jnp.maximum(h, 0.0)                                            # (TB, 256) f32

    # deconv1 folded into one matmul (bf16 operands, f32 accumulate) + ReLU.
    # Columns ordered (py, px, c1): 128 channels per pixel, lane-dense (3200 = 25*128).
    a1 = jnp.dot(h.astype(jnp.bfloat16), w1_ref[...],
                 preferred_element_type=jnp.float32) + b1_ref[...]
    a1_ref[...] = jnp.maximum(a1, 0.0).astype(jnp.bfloat16)           # (TB, 3200) VMEM

    # deconv2 folded into one matmul; columns 0..242 are NCHW (oc, y, x), 243..255 are
    # zero padding so the store is a full 256-lane (unmasked) vst.
    o = jnp.dot(a1_ref[...], w2_ref[...],
                preferred_element_type=jnp.float32) + b2_ref[...]      # (TB, 256) f32

    # sigmoid: exp and approx reciprocal both issue on the EUP slot.
    out_ref[...] = pl.reciprocal(1.0 + jnp.exp(-o), approx=True)


# ---------------- jitted wrapper ----------------
@jax.jit
def image_decoder_forward(packed, z):
    B = z.shape[0]
    tb = min(MAX_TB, B)                      # batch tile
    nb = pl.cdiv(B, tb)
    out_padded = pl.pallas_call(
        image_decoder_kernel,
        out_shape=jax.ShapeDtypeStruct((B, OUT_PAD), jnp.float32),
        grid=(nb,),
        in_specs=[
            pl.BlockSpec((tb, LATENT_DIM), lambda b: (b, 0)),
            pl.BlockSpec((LATENT_DIM, FC_DIM), lambda b: (0, 0)),
            pl.BlockSpec((1, FC_DIM), lambda b: (0, 0)),
            pl.BlockSpec((FC_DIM, D1_FLAT), lambda b: (0, 0)),
            pl.BlockSpec((1, D1_FLAT), lambda b: (0, 0)),
            pl.BlockSpec((D1_FLAT, OUT_PAD), lambda b: (0, 0)),
            pl.BlockSpec((1, OUT_PAD), lambda b: (0, 0)),
        ],
        out_specs=pl.BlockSpec((tb, OUT_PAD), lambda b: (b, 0)),
        scratch_shapes=[pltpu.VMEM((tb, D1_FLAT), jnp.bfloat16)],
        compiler_params=pltpu.CompilerParams(
            dimension_semantics=("parallel",),
            vmem_limit_bytes=32 * 1024 * 1024,
        ),
    )(z, packed["wfc"], packed["bfc"], packed["w1m"], packed["b1m"],
      packed["w2m"], packed["b2m"])
    return out_padded[:, :OUT_FLAT].reshape(B, OUT_CH, S2, S2)


# ---------------- one-time parameter repacking (init-time, never per forward) --------
def pack_params(raw):
    # fc: torch Linear weight is (out, in); kernel wants (in, out).  Kept f32 (tiny).
    wfc = jnp.asarray(raw["fc_w"], jnp.float32).T                         # (L, 256)
    bfc = jnp.asarray(raw["fc_b"], jnp.float32).reshape(1, FC_DIM)

    # deconv1: ConvTranspose2d weight (in=256, out=128, K, K). With a 1x1 input:
    #   a1[b, c1, py, px] = sum_c0 h[b, c0] * W1[c0, c1, py, px] + b1[c1]
    # -> columns ordered (py, px, c1).  Stored bf16 (matmul operand).
    w1 = np.asarray(raw["w1"], np.float32)                                # (256,128,5,5)
    w1m = jnp.asarray(np.transpose(w1, (0, 2, 3, 1)).reshape(FC_DIM, D1_FLAT),
                      jnp.bfloat16)
    b1m = jnp.asarray(np.tile(np.asarray(raw["b1"], np.float32), S1 * S1)
                      .reshape(1, D1_FLAT))

    # deconv2: fold the whole 5x5 -> 9x9 transposed conv (stride 1, pad 0) into a
    # (3200, 256) matrix (last 13 columns zero padding):
    #   W2m[(py*5+px)*128 + c1, oc*81 + y*9 + x] = W2[c1, oc, y-py, x-px]
    w2 = np.asarray(raw["w2"], np.float32)                                # (128,3,5,5)
    w2m = np.zeros((D1_FLAT, OUT_PAD), np.float32)
    for py in range(S1):
        for px in range(S1):
            r0 = (py * S1 + px) * D1_CH
            for ky in range(K):
                for kx in range(K):
                    y, x = py + ky, px + kx
                    for oc in range(OUT_CH):
                        w2m[r0:r0 + D1_CH, oc * S2 * S2 + y * S2 + x] = w2[:, oc, ky, kx]
    b2m = np.zeros((1, OUT_PAD), np.float32)
    b2m[0, :OUT_FLAT] = np.repeat(np.asarray(raw["b2"], np.float32), S2 * S2)

    return dict(wfc=wfc, bfc=bfc, w1m=w1m, b1m=b1m,
                w2m=jnp.asarray(w2m, jnp.bfloat16), b2m=jnp.asarray(b2m))


# ---------------- independent pure-JAX reference (same math as PyTorch) ----------------
def _conv_transpose_nchw(x, w, b):
    # ConvTranspose2d(stride=1, padding=0) == conv of the (K-1)-zero-padded input with
    # the spatially-flipped kernel and in/out channels swapped.
    k = w.shape[-1]
    w_conv = jnp.transpose(w[:, :, ::-1, ::-1], (1, 0, 2, 3))             # (out,in,K,K)
    y = jax.lax.conv_general_dilated(
        x, w_conv, window_strides=(1, 1),
        padding=[(k - 1, k - 1), (k - 1, k - 1)],
        dimension_numbers=("NCHW", "OIHW", "NCHW"))
    return y + b[None, :, None, None]


def reference_forward(raw, z):
    h = jax.nn.relu(z @ raw["fc_w"].T + raw["fc_b"])
    x = h.reshape(h.shape[0], FC_DIM, 1, 1)
    x = jax.nn.relu(_conv_transpose_nchw(x, raw["w1"], raw["b1"]))
    return jax.nn.sigmoid(_conv_transpose_nchw(x, raw["w2"], raw["b2"]))


if __name__ == "__main__":
    key = jax.random.PRNGKey(0)
    ks = jax.random.split(key, 7)
    raw = dict(
        fc_w=0.2 * jax.random.normal(ks[0], (FC_DIM, LATENT_DIM), jnp.float32),
        fc_b=0.1 * jax.random.normal(ks[1], (FC_DIM,), jnp.float32),
        w1=0.1 * jax.random.normal(ks[2], (FC_DIM, D1_CH, K, K), jnp.float32),
        b1=0.1 * jax.random.normal(ks[3], (D1_CH,), jnp.float32),
        w2=0.1 * jax.random.normal(ks[4], (D1_CH, OUT_CH, K, K), jnp.float32),
        b2=0.1 * jax.random.normal(ks[5], (OUT_CH,), jnp.float32),
    )
    packed = pack_params(raw)

    B = 2
    z = jax.random.normal(ks[6], (B, LATENT_DIM), jnp.float32)

    out = jax.block_until_ready(image_decoder_forward(packed, z))
    ref = jax.block_until_ready(reference_forward(raw, z))

    assert out.shape == (B, OUT_CH, S2, S2), out.shape
    assert bool(jnp.all(jnp.isfinite(out)))
    # bf16 matmul weights + approx-reciprocal sigmoid -> relaxed tolerance vs f32 ref.
    err = float(jnp.max(jnp.abs(out - ref)))
    assert jnp.allclose(out, ref, atol=3e-2, rtol=3e-2), err
    print("KERNEL_OK")
</pallas_src>

<mosaic_0001>
module attributes {stable_mosaic.version = 11 : i64} {
  func.func @image_decoder_kernel(%arg0: i32, %arg1: memref<2x16xf32, #tpu.memory_space<vmem>>, %arg2: memref<16x256xf32, #tpu.memory_space<vmem>>, %arg3: memref<1x256xf32, #tpu.memory_space<vmem>>, %arg4: memref<256x3200xbf16, #tpu.memory_space<vmem>>, %arg5: memref<1x3200xf32, #tpu.memory_space<vmem>>, %arg6: memref<3200x256xbf16, #tpu.memory_space<vmem>>, %arg7: memref<1x256xf32, #tpu.memory_space<vmem>>, %arg8: memref<2x256xf32, #tpu.memory_space<vmem>>, %arg9: memref<2x3200xbf16, #tpu.memory_space<vmem>>) attributes {dimension_semantics = [#tpu.dimension_semantics<parallel>], iteration_bounds = array<i64: 1>, scalar_prefetch = 0 : i64, scratch_operands = 1 : i64, tpu.core_type = #tpu.core_type<tc>, window_params = [{transform_indices = @transform_0, window_bounds = array<i64: 2, 16>}, {pipeline_mode = #tpu.pipeline_mode<synchronous>, transform_indices = @transform_1, window_bounds = array<i64: 16, 256>}, {pipeline_mode = #tpu.pipeline_mode<synchronous>, transform_indices = @transform_2, window_bounds = array<i64: 1, 256>}, {pipeline_mode = #tpu.pipeline_mode<synchronous>, transform_indices = @transform_3, window_bounds = array<i64: 256, 3200>}, {pipeline_mode = #tpu.pipeline_mode<synchronous>, transform_indices = @transform_4, window_bounds = array<i64: 1, 3200>}, {pipeline_mode = #tpu.pipeline_mode<synchronous>, transform_indices = @transform_5, window_bounds = array<i64: 3200, 256>}, {pipeline_mode = #tpu.pipeline_mode<synchronous>, transform_indices = @transform_6, window_bounds = array<i64: 1, 256>}, {transform_indices = @transform_7, window_bounds = array<i64: 2, 256>}]} {
    %c0 = arith.constant 0 : index
    %c0_0 = arith.constant 0 : index
    %0 = vector.load %arg1[%c0, %c0_0] : memref<2x16xf32, #tpu.memory_space<vmem>>, vector<2x16xf32>
    %c0_1 = arith.constant 0 : index
    %c0_2 = arith.constant 0 : index
    %1 = vector.load %arg2[%c0_1, %c0_2] : memref<16x256xf32, #tpu.memory_space<vmem>>, vector<16x256xf32>
    %cst = arith.constant dense<0.000000e+00> : vector<2x256xf32>
    %2 = tpu.matmul %0, %1, %cst {dimension_numbers = #tpu.dot_dimension_numbers<[1], [0], [0], [1], [0, 0, 1, 1], [], []>} : vector<2x16xf32>, vector<16x256xf32>, vector<2x256xf32> -> vector<2x256xf32>
    %c0_3 = arith.constant 0 : index
    %c0_4 = arith.constant 0 : index
    %3 = vector.load %arg3[%c0_3, %c0_4] : memref<1x256xf32, #tpu.memory_space<vmem>>, vector<1x256xf32>
    %4 = vector.broadcast %3 : vector<1x256xf32> to vector<2x256xf32>
    %5 = arith.addf %2, %4 : vector<2x256xf32>
    %cst_5 = arith.constant 0.000000e+00 : f32
    %6 = vector.broadcast %cst_5 : f32 to vector<2x256xf32>
    %7 = arith.maximumf %5, %6 : vector<2x256xf32>
    %8 = arith.truncf %7 : vector<2x256xf32> to vector<2x256xbf16>
    %c0_6 = arith.constant 0 : index
    %c0_7 = arith.constant 0 : index
    %9 = vector.load %arg4[%c0_6, %c0_7] : memref<256x3200xbf16, #tpu.memory_space<vmem>>, vector<256x3200xbf16>
    %cst_8 = arith.constant dense<0.000000e+00> : vector<2x3200xf32>
    %10 = tpu.matmul %8, %9, %cst_8 {dimension_numbers = #tpu.dot_dimension_numbers<[1], [0], [0], [1], [0, 0, 1, 1], [], []>} : vector<2x256xbf16>, vector<256x3200xbf16>, vector<2x3200xf32> -> vector<2x3200xf32>
    %c0_9 = arith.constant 0 : index
    %c0_10 = arith.constant 0 : index
    %11 = vector.load %arg5[%c0_9, %c0_10] : memref<1x3200xf32, #tpu.memory_space<vmem>>, vector<1x3200xf32>
    %12 = vector.broadcast %11 : vector<1x3200xf32> to vector<2x3200xf32>
    %13 = arith.addf %10, %12 : vector<2x3200xf32>
    %cst_11 = arith.constant 0.000000e+00 : f32
    %14 = vector.broadcast %cst_11 : f32 to vector<2x3200xf32>
    %15 = arith.maximumf %13, %14 : vector<2x3200xf32>
    %16 = arith.truncf %15 : vector<2x3200xf32> to vector<2x3200xbf16>
    %c0_12 = arith.constant 0 : index
    %c0_13 = arith.constant 0 : index
    %17 = vector.load %arg9[%c0_12, %c0_13] : memref<2x3200xbf16, #tpu.memory_space<vmem>>, vector<2x3200xbf16>
    tpu.vector_store %arg9[%c0_12, %c0_13], %16 {strides = array<i32>} : memref<2x3200xbf16, #tpu.memory_space<vmem>>, vector<2x3200xbf16>,
    %c0_14 = arith.constant 0 : index
    %c0_15 = arith.constant 0 : index
    %18 = vector.load %arg9[%c0_14, %c0_15] : memref<2x3200xbf16, #tpu.memory_space<vmem>>, vector<2x3200xbf16>
    %c0_16 = arith.constant 0 : index
    %c0_17 = arith.constant 0 : index
    %19 = vector.load %arg6[%c0_16, %c0_17] : memref<3200x256xbf16, #tpu.memory_space<vmem>>, vector<3200x256xbf16>
    %cst_18 = arith.constant dense<0.000000e+00> : vector<2x256xf32>
    %20 = tpu.matmul %18, %19, %cst_18 {dimension_numbers = #tpu.dot_dimension_numbers<[1], [0], [0], [1], [0, 0, 1, 1], [], []>} : vector<2x3200xbf16>, vector<3200x256xbf16>, vector<2x256xf32> -> vector<2x256xf32>
    %c0_19 = arith.constant 0 : index
    %c0_20 = arith.constant 0 : index
    %21 = vector.load %arg7[%c0_19, %c0_20] : memref<1x256xf32, #tpu.memory_space<vmem>>, vector<1x256xf32>
    %22 = vector.broadcast %21 : vector<1x256xf32> to vector<2x256xf32>
    %23 = arith.addf %20, %22 : vector<2x256xf32>
    %cst_21 = arith.constant 0.000000e+00 : f32
    %24 = vector.broadcast %cst_21 : f32 to vector<2x256xf32>
    %25 = arith.subf %24, %23 : vector<2x256xf32>
    %26 = math.exp %25 : vector<2x256xf32>
    %cst_22 = arith.constant 1.000000e+00 : f32
    %27 = vector.broadcast %cst_22 : f32 to vector<2x256xf32>
    %28 = arith.addf %27, %26 : vector<2x256xf32>
    %29 = tpu.reciprocal %28 {approx = true} : vector<2x256xf32> -> vector<2x256xf32>
    %c0_23 = arith.constant 0 : index
    %c0_24 = arith.constant 0 : index
    %30 = vector.load %arg8[%c0_23, %c0_24] : memref<2x256xf32, #tpu.memory_space<vmem>>, vector<2x256xf32>
    tpu.vector_store %arg8[%c0_23, %c0_24], %29 {strides = array<i32>} : memref<2x256xf32, #tpu.memory_space<vmem>>, vector<2x256xf32>,
    return
  }
  func.func @transform_0(%arg0: i32) -> (i32, i32) {
    %c0_i32 = arith.constant 0 : i32
    %c0_i32_0 = arith.constant 0 : i32
    return %arg0, %c0_i32 : i32, i32
  }
  func.func @transform_1(%arg0: i32) -> (i32, i32) {
    %c0_i32 = arith.constant 0 : i32
    %c0_i32_0 = arith.constant 0 : i32
    %c0_i32_1 = arith.constant 0 : i32
    return %c0_i32, %c0_i32_0 : i32, i32
  }
  func.func @transform_2(%arg0: i32) -> (i32, i32) {
    %c0_i32 = arith.constant 0 : i32
    %c0_i32_0 = arith.constant 0 : i32
    %c0_i32_1 = arith.constant 0 : i32
    return %c0_i32, %c0_i32_0 : i32, i32
  }
  func.func @transform_3(%arg0: i32) -> (i32, i32) {
    %c0_i32 = arith.constant 0 : i32
    %c0_i32_0 = arith.constant 0 : i32
    %c0_i32_1 = arith.constant 0 : i32
    return %c0_i32, %c0_i32_0 : i32, i32
  }
  func.func @transform_4(%arg0: i32) -> (i32, i32) {
    %c0_i32 = arith.constant 0 : i32
    %c0_i32_0 = arith.constant 0 : i32
    %c0_i32_1 = arith.constant 0 : i32
    return %c0_i32, %c0_i32_0 : i32, i32
  }
  func.func @transform_5(%arg0: i32) -> (i32, i32) {
    %c0_i32 = arith.constant 0 : i32
    %c0_i32_0 = arith.constant 0 : i32
    %c0_i32_1 = arith.constant 0 : i32
    return %c0_i32, %c0_i32_0 : i32, i32
  }
  func.func @transform_6(%arg0: i32) -> (i32, i32) {
    %c0_i32 = arith.constant 0 : i32
    %c0_i32_0 = arith.constant 0 : i32
    %c0_i32_1 = arith.constant 0 : i32
    return %c0_i32, %c0_i32_0 : i32, i32
  }
  func.func @transform_7(%arg0: i32) -> (i32, i32) {
    %c0_i32 = arith.constant 0 : i32
    %c0_i32_0 = arith.constant 0 : i32
    return %arg0, %c0_i32 : i32, i32
  }
}

</mosaic_0001>

<llo_original>
// kernel: image_decoder_forward.1
$region0: #{image_decoder_forward.1}
  #allocation0 [shape = 'u32[]', space=smem, size = 0x4, offset = 0x4, fixed_abs, tag = 'smem constant byte address 0x4 - core index']
  #allocation1 [shape = 'u32[144,128]{1,0:T(1,128)}', space=vmem, size = 0x12000, scoped, tag = 'internal scratch']
  #allocation2 [shape = 'bf16[2,3200]{1,0:T(2,128)(2,1)}', space=vmem, size = 0x3200, scoped, tag = 'scratch operand']
  %s0 = inlined_call_operand.hbm [shape: f32[2,16], index: 0, kind: input, shape index: {}]
  %s1 = inlined_call_operand.hbm [shape: f32[16,256], index: 1, kind: input, shape index: {}]
  %s2 = inlined_call_operand.hbm [shape: f32[1,256], index: 2, kind: input, shape index: {}]
  %s3 = inlined_call_operand.hbm [shape: bf16[256,3200], index: 3, kind: input, shape index: {}]
  %s4 = inlined_call_operand.hbm [shape: f32[1,3200], index: 4, kind: input, shape index: {}]
  %s5 = inlined_call_operand.hbm [shape: bf16[3200,256], index: 5, kind: input, shape index: {}]
  %s6 = inlined_call_operand.hbm [shape: f32[1,256], index: 6, kind: input, shape index: {}]
  %s7 = inlined_call_operand.vmem [shape: f32[2,256], index: 7, kind: output, shape index: {}]
  %s8 = sld [smem:[#allocation0]]
  $region66: #{image_decoder_forward.1} parent=0
    _
  %s10 = ssub.s32 1, %s8
  %s11 = scalar_select 0, %s10, %s8
  $region1: #{image_decoder_forward.1} parent=0
    #allocation3 [shape = 'u8[1024]{0}', space=vmem, size = 0x400, scoped, tag = 'input window, operand 0, single buffered']
    #allocation4 [shape = 's32[1]{0}', space=sflag, size = 0x4, scoped, tag = 'scoped memory for image_decoder_forward.1']
    #allocation5 [shape = 'u8[16384]{0}', space=vmem, size = 0x4000, scoped, tag = 'input window, operand 1, single buffered']
    #allocation6 [shape = 's32[1]{0}', space=sflag, size = 0x4, scoped, tag = 'scoped memory for image_decoder_forward.1']
    #allocation7 [shape = 'u8[1024]{0}', space=vmem, size = 0x400, scoped, tag = 'input window, operand 2, single buffered']
    #allocation8 [shape = 'u8[1638400]{0}', space=vmem, size = 0x190000, scoped, tag = 'input window, operand 3, single buffered']
    #allocation9 [shape = 's32[1]{0}', space=sflag, size = 0x4, scoped, tag = 'scoped memory for image_decoder_forward.1']
    #allocation10 [shape = 'u8[12800]{0}', space=vmem, size = 0x3400, scoped, tag = 'input window, operand 4, single buffered']
    #allocation11 [shape = 'u8[1638400]{0}', space=vmem, size = 0x190000, scoped, tag = 'input window, operand 5, single buffered']
    #allocation12 [shape = 's32[1]{0}', space=sflag, size = 0x4, scoped, tag = 'scoped memory for image_decoder_forward.1']
    #allocation13 [shape = 'u8[1024]{0}', space=vmem, size = 0x400, scoped, tag = 'input window, operand 6, single buffered']
    %12 = vsyncpa [#allocation4], 0
    %13 = vsyncpa [#allocation6], 0
    %14 = vsyncpa [#allocation9], 0
    %15 = vsyncpa [#allocation12], 0
    // Predicated region
    $region2: #{image_decoder_forward.1} parent=1 // pred_check
      _
    $region3: #{image_decoder_forward.1} parent=1 // pred_check_branch
      %17 = sbr.rel (0) target = $region5
    $region4: #{image_decoder_forward.1} parent=1 // pred_region
      %s19 = ssub.s32 32, 32
      %20 = vsyncadd [#allocation4], %s19
      %s22 = sshll.u32 [#allocation3], 4
      %s23 = int_to_ptr.vmem [resolvable:$true] %s22
      %25 = dma.hbm_to_vmem [thread:$0]  %s0, 32, %s23, [#allocation4]
    $region5: #{image_decoder_forward.1} parent=1 // pred_fallthru
      _
    // Predicated region
    $region6: #{image_decoder_forward.1} parent=1 // pred_check
      _
    $region7: #{image_decoder_forward.1} parent=1 // pred_check_branch
      %27 = sbr.rel (0) target = $region9
    $region8: #{image_decoder_forward.1} parent=1 // pred_region
      %s29 = ssub.s32 512, 512
      %30 = vsyncadd [#allocation6], %s29
      %s31 = sshll.u32 [#allocation5], 4
      %s32 = int_to_ptr.vmem [resolvable:$true] %s31
      %37 = dma.hbm_to_vmem [thread:$0]  %s1, 512, %s32, [#allocation6], 256, 256, 16
    $region9: #{image_decoder_forward.1} parent=1 // pred_fallthru
      _
    // Predicated region
    $region10: #{image_decoder_forward.1} parent=1 // pred_check
      _
    $region11: #{image_decoder_forward.1} parent=1 // pred_check_branch
      %39 = sbr.rel (0) target = $region13
    $region12: #{image_decoder_forward.1} parent=1 // pred_region
      %s41 = ssub.s32 32, 32
      %42 = vsyncadd [#allocation6], %s41
      %s44 = sshll.u32 [#allocation7], 4
      %s45 = int_to_ptr.vmem [resolvable:$true] %s44
      %47 = dma.hbm_to_vmem [thread:$0]  %s2, 32, %s45, [#allocation6]
    $region13: #{image_decoder_forward.1} parent=1 // pred_fallthru
      _
    // Predicated region
    $region14: #{image_decoder_forward.1} parent=1 // pred_check
      _
    $region15: #{image_decoder_forward.1} parent=1 // pred_check_branch
      %49 = sbr.rel (0) target = $region17
    $region16: #{image_decoder_forward.1} parent=1 // pred_region
      %s51 = ssub.s32 51200, 51200
      %52 = vsyncadd [#allocation9], %s51
      %s53 = sshll.u32 [#allocation8], 4
      %s54 = int_to_ptr.vmem [resolvable:$true] %s53
      %59 = dma.hbm_to_vmem [thread:$0]  %s3, 51200, %s54, [#allocation9], 1600, 1600, 100
    $region17: #{image_decoder_forward.1} parent=1 // pred_fallthru
      _
    // Predicated region
    $region18: #{image_decoder_forward.1} parent=1 // pred_check
      _
    $region19: #{image_decoder_forward.1} parent=1 // pred_check_branch
      %61 = sbr.rel (0) target = $region21
    $region20: #{image_decoder_forward.1} parent=1 // pred_region
      %s63 = ssub.s32 400, 400
      %64 = vsyncadd [#allocation9], %s63
      %s66 = sshll.u32 [#allocation10], 4
      %s67 = int_to_ptr.vmem [resolvable:$true] %s66
      %69 = dma.hbm_to_vmem [thread:$0]  %s4, 400, %s67, [#allocation9]
    $region21: #{image_decoder_forward.1} parent=1 // pred_fallthru
      _
    // Predicated region
    $region22: #{image_decoder_forward.1} parent=1 // pred_check
      _
    $region23: #{image_decoder_forward.1} parent=1 // pred_check_branch
      %71 = sbr.rel (0) target = $region25
    $region24: #{image_decoder_forward.1} parent=1 // pred_region
      %s73 = ssub.s32 51200, 51200
      %74 = vsyncadd [#allocation12], %s73
      %s75 = sshll.u32 [#allocation11], 4
      %s76 = int_to_ptr.vmem [resolvable:$true] %s75
      %81 = dma.hbm_to_vmem [thread:$0]  %s5, 51200, %s76, [#allocation12], 128, 128, 8
    $region25: #{image_decoder_forward.1} parent=1 // pred_fallthru
      _
    // Predicated region
    $region26: #{image_decoder_forward.1} parent=1 // pred_check
      _
    $region27: #{image_decoder_forward.1} parent=1 // pred_check_branch
      %83 = sbr.rel (0) target = $region29
    $region28: #{image_decoder_forward.1} parent=1 // pred_region
      %s85 = ssub.s32 32, 32
      %86 = vsyncadd [#allocation12], %s85
      %s88 = sshll.u32 [#allocation13], 4
      %s89 = int_to_ptr.vmem [resolvable:$true] %s88
      %91 = dma.hbm_to_vmem [thread:$0]  %s6, 32, %s89, [#allocation12]
    $region29: #{image_decoder_forward.1} parent=1 // pred_fallthru
      _
    // Predicated region
    $region30: #{image_decoder_forward.1} parent=1 // pred_check
      _
    $region31: #{image_decoder_forward.1} parent=1 // pred_check_branch
      %93 = sbr.rel (0) target = $region33
    $region32: #{image_decoder_forward.1} parent=1 // pred_region
      %94 = dma.done [#allocation4], 32
    $region33: #{image_decoder_forward.1} parent=1 // pred_fallthru
      _
    // Predicated region
    $region34: #{image_decoder_forward.1} parent=1 // pred_check
      _
    $region35: #{image_decoder_forward.1} parent=1 // pred_check_branch
      %96 = sbr.rel (0) target = $region37
    $region36: #{image_decoder_forward.1} parent=1 // pred_region
      %97 = dma.done [#allocation6], 512
    $region37: #{image_decoder_forward.1} parent=1 // pred_fallthru
      _
    // Predicated region
    $region38: #{image_decoder_forward.1} parent=1 // pred_check
      _
    $region39: #{image_decoder_forward.1} parent=1 // pred_check_branch
      %99 = sbr.rel (0) target = $region41
    $region40: #{image_decoder_forward.1} parent=1 // pred_region
      %100 = dma.done [#allocation6], 32
    $region41: #{image_decoder_forward.1} parent=1 // pred_fallthru
      _
    // Predicated region
    $region42: #{image_decoder_forward.1} parent=1 // pred_check
      _
    $region43: #{image_decoder_forward.1} parent=1 // pred_check_branch
      %102 = sbr.rel (0) target = $region45
    $region44: #{image_decoder_forward.1} parent=1 // pred_region
      %103 = dma.done [#allocation9], 51200
    $region45: #{image_decoder_forward.1} parent=1 // pred_fallthru
      _
    // Predicated region
    $region46: #{image_decoder_forward.1} parent=1 // pred_check
      _
    $region47: #{image_decoder_forward.1} parent=1 // pred_check_branch
      %105 = sbr.rel (0) target = $region49
    $region48: #{image_decoder_forward.1} parent=1 // pred_region
      %106 = dma.done [#allocation9], 400
    $region49: #{image_decoder_forward.1} parent=1 // pred_fallthru
      _
    // Predicated region
    $region50: #{image_decoder_forward.1} parent=1 // pred_check
      _
    $region51: #{image_decoder_forward.1} parent=1 // pred_check_branch
      %108 = sbr.rel (0) target = $region53
    $region52: #{image_decoder_forward.1} parent=1 // pred_region
      %109 = dma.done [#allocation12], 51200
    $region53: #{image_decoder_forward.1} parent=1 // pred_fallthru
      _
    // Predicated region
    $region54: #{image_decoder_forward.1} parent=1 // pred_check
      _
    $region55: #{image_decoder_forward.1} parent=1 // pred_check_branch
      %111 = sbr.rel (0) target = $region57
    $region56: #{image_decoder_forward.1} parent=1 // pred_region
      %112 = dma.done [#allocation12], 32
    $region57: #{image_decoder_forward.1} parent=1 // pred_fallthru
      _
    %v114 = vld [vmem:[#allocation3] sm:$0x3]
    %v115 = vld [vmem:[#allocation5] sm:$0xff]
    %v116 = vld [vmem:[#allocation5 + $0x8] sm:$0xff]
    %v117 = vld [vmem:[#allocation5 + $0x10] sm:$0xff]
    %v118 = vld [vmem:[#allocation5 + $0x18] sm:$0xff]
    %v119 = vld [vmem:[#allocation7] sm:$0x3]
    %v121 = vlaneseq
    %v122 = vshrl.u32 %v121, 7
    %v123 = vsub.s32 0, %v122
    %v124 = vrot.slane %v119, %v123
    %v125 = vlaneseq
    %v126 = vshrl.u32 %v125, 7
    %v127 = vsub.s32 1, %v126
    %v128 = vrot.slane %v119, %v127
    %vm131 = vcmask 130048
    %v133 = vsel %vm131, %v114, 0
    %135 = vmatprep.subr.mxu0 %v116
    %136 = vmatpush1.msra.mxu0 %v115
    %137 = vmatprep.subr.mxu0 %v118
    %138 = vmatpush1.msra.mxu0 %v117
    %139 = vmatprep.subr.mxu0 0.0
    %140 = vmatpush1.msra.mxu0 0.0
    %141 = vmatprep.subr.mxu0 0.0
    %142 = vmatpush1.msra.mxu0 0.0
    %143 = vmatprep.subr.mxu0 0.0
    %144 = vmatpush1.msra.mxu0 0.0
    %145 = vmatprep.subr.mxu0 0.0
    %146 = vmatpush1.msra.mxu0 0.0
    %147 = vmatprep.subr.mxu0 0.0
    %148 = vmatpush1.msra.mxu0 0.0
    %149 = vmatprep.subr.mxu0 0.0
    %150 = vmatpush1.msra.mxu0 0.0
    %151 = vmatprep.subr.mxu0 0.0
    %152 = vmatpush1.msra.mxu0 0.0
    %153 = vmatprep.subr.mxu0 0.0
    %154 = vmatpush1.msra.mxu0 0.0
    %155 = vmatprep.subr.mxu0 0.0
    %156 = vmatpush1.msra.mxu0 0.0
    %157 = vmatprep.subr.mxu0 0.0
    %158 = vmatpush1.msra.mxu0 0.0
    %159 = vmatprep.subr.mxu0 0.0
    %160 = vmatpush1.msra.mxu0 0.0
    %161 = vmatprep.subr.mxu0 0.0
    %162 = vmatpush1.msra.mxu0 0.0
    %163 = vmatprep.subr.mxu0 0.0
    %164 = vmatpush1.msra.mxu0 0.0
    %165 = vmatprep.subr.mxu0 0.0
    %166 = vmatpush1.msra.mxu0 0.0
    %167 = vmatprep.subr.mxu0 0.0
    %168 = vmatpush1.msra.mxu0 0.0
    %169 = vmatprep.subr.mxu0 0.0
    %170 = vmatpush1.msra.mxu0 0.0
    %171 = vmatprep.subr.mxu0 0.0
    %172 = vmatpush1.msra.mxu0 0.0
    %173 = vmatprep.subr.mxu0 0.0
    %174 = vmatpush1.msra.mxu0 0.0
    %175 = vmatprep.subr.mxu0 0.0
    %176 = vmatpush1.msra.mxu0 0.0
    %177 = vmatprep.subr.mxu0 0.0
    %178 = vmatpush1.msra.mxu0 0.0
    %179 = vmatprep.subr.mxu0 0.0
    %180 = vmatpush1.msra.mxu0 0.0
    %181 = vmatprep.subr.mxu0 0.0
    %182 = vmatpush1.msra.mxu0 0.0
    %183 = vmatprep.subr.mxu0 0.0
    %184 = vmatpush1.msra.mxu0 0.0
    %185 = vmatprep.subr.mxu0 0.0
    %186 = vmatpush1.msra.mxu0 0.0
    %187 = vmatprep.subr.mxu0 0.0
    %188 = vmatpush1.msra.mxu0 0.0
    %189 = vmatprep.subr.mxu0 0.0
    %190 = vmatpush1.msra.mxu0 0.0
    %191 = vmatprep.subr.mxu0 0.0
    %192 = vmatpush1.msra.mxu0 0.0
    %193 = vmatprep.subr.mxu0 0.0
    %194 = vmatpush1.msra.mxu0 0.0
    %195 = vmatprep.subr.mxu0 0.0
    %196 = vmatpush1.msra.mxu0 0.0
    %197 = vmatprep.subr.mxu0 0.0
    %198 = vmatpush1.msra.mxu0 0.0
    %199 = vmatprep.mubr.f32.mxu0 0.0
    %200 = vmatmul.mubr.f32.gmra.mrb[0].mxu0 %v133
    %v201 = vpop.f32.mrb[0].mxu0
    %v202 = vadd.f32 %v124, %v201
    %v203 = vpop.f32.mrb[0].mxu0
    %v204 = vadd.f32 %v128, %v203
    %205 = vdwg.mxu0
    %v206 = vmax.f32 %v202, 0.0
    %v207 = vmax.f32 %v204, 0.0
    %v208 = vpack.c.bf16 %v206, %v206
    %v209 = vpack.c.bf16 %v207, %v207
    %v210 = vld [vmem:[#allocation8] sm:$0xff]
    %v211 = vld [vmem:[#allocation8 + $0x8] sm:$0xff]
    %v212 = vld [vmem:[#allocation8 + $0x10] sm:$0xff]
    %v213 = vld [vmem:[#allocation8 + $0x18] sm:$0xff]
    %v214 = vld [vmem:[#allocation8 + $0x20] sm:$0xff]
    %v215 = vld [vmem:[#allocation8 + $0x28] sm:$0xff]
    %v216 = vld [vmem:[#allocation8 + $0x30] sm:$0xff]
    %v217 = vld [vmem:[#allocation8 + $0x38] sm:$0xff]
    %v218 = vld [vmem:[#allocation8 + $0x40] sm:$0xff]
    %v219 = vld [vmem:[#allocation8 + $0x48] sm:$0xff]
    %v220 = vld [vmem:[#allocation8 + $0x50] sm:$0xff]
    %v221 = vld [vmem:[#allocation8 + $0x58] sm:$0xff]
    %v222 = vld [vmem:[#allocation8 + $0x60] sm:$0xf]
    %v223 = vld [vmem:[#allocation8 + $0x64] sm:$0xff]
    %v224 = vld [vmem:[#allocation8 + $0x6c] sm:$0xff]
    %v225 = vld [vmem:[#allocation8 + $0x74] sm:$0xff]
    %v226 = vld [vmem:[#allocation8 + $0x7c] sm:$0xff]
    %v227 = vld [vmem:[#allocation8 + $0x84] sm:$0xff]
    %v228 = vld [vmem:[#allocation8 + $0x8c] sm:$0xff]
    %v229 = vld [vmem:[#allocation8 + $0x94] sm:$0xff]
    %v230 = vld [vmem:[#allocation8 + $0x9c] sm:$0xff]
    %v231 = vld [vmem:[#allocation8 + $0xa4] sm:$0xff]
    %v232 = vld [vmem:[#allocation8 + $0xac] sm:$0xff]
    %v233 = vld [vmem:[#allocation8 + $0xb4] sm:$0xff]
    %v234 = vld [vmem:[#allocation8 + $0xbc] sm:$0xff]
    %v235 = vld [vmem:[#allocation8 + $0xc4] sm:$0xf]
    %v236 = vld [vmem:[#allocation8 + $0xc8] sm:$0xff]
    %v237 = vld [vmem:[#allocation8 + $0xd0] sm:$0xff]
    %v238 = vld [vmem:[#allocation8 + $0xd8] sm:$0xff]
    %v239 = vld [vmem:[#allocation8 + $0xe0] sm:$0xff]
    %v240 = vld [vmem:[#allocation8 + $0xe8] sm:$0xff]
    %v241 = vld [vmem:[#allocation8 + $0xf0] sm:$0xff]
    %v242 = vld [vmem:[#allocation8 + $0xf8] sm:$0xff]
    %v243 = vld [vmem:[#allocation8 + $0x100] sm:$0xff]
    %v244 = vld [vmem:[#allocation8 + $0x108] sm:$0xff]
    %v245 = vld [vmem:[#allocation8 + $0x110] sm:$0xff]
    %v246 = vld [vmem:[#allocation8 + $0x118] sm:$0xff]
    %v247 = vld [vmem:[#allocation8 + $0x120] sm:$0xff]
    %v248 = vld [vmem:[#allocation8 + $0x128] sm:$0xf]
    %v249 = vld [vmem:[#allocation8 + $0x12c] sm:$0xff]
    %v250 = vld [vmem:[#allocation8 + $0x134] sm:$0xff]
    %v251 = vld [vmem:[#allocation8 + $0x13c] sm:$0xff]
    %v252 = vld [vmem:[#allocation8 + $0x144] sm:$0xff]
    %v253 = vld [vmem:[#allocation8 + $0x14c] sm:$0xff]
    %v254 = vld [vmem:[#allocation8 + $0x154] sm:$0xff]
    %v255 = vld [vmem:[#allocation8 + $0x15c] sm:$0xff]
    %v256 = vld [vmem:[#allocation8 + $0x164] sm:$0xff]
    %v257 = vld [vmem:[#allocation8 + $0x16c] sm:$0xff]
    %v258 = vld [vmem:[#allocation8 + $0x174] sm:$0xff]
    %v259 = vld [vmem:[#allocation8 + $0x17c] sm:$0xff]
    %v260 = vld [vmem:[#allocation8 + $0x184] sm:$0xff]
    %v261 = vld [vmem:[#allocation8 + $0x18c] sm:$0xf]
    %v262 = vld [vmem:[#allocation8 + $0x190] sm:$0xff]
    %v263 = vld [vmem:[#allocation8 + $0x198] sm:$0xff]
    %v264 = vld [vmem:[#allocation8 + $0x1a0] sm:$0xff]
    %v265 = vld [vmem:[#allocation8 + $0x1a8] sm:$0xff]
    %v266 = vld [vmem:[#allocation8 + $0x1b0] sm:$0xff]
    %v267 = vld [vmem:[#allocation8 + $0x1b8] sm:$0xff]
    %v268 = vld [vmem:[#allocation8 + $0x1c0] sm:$0xff]
    %v269 = vld [vmem:[#allocation8 + $0x1c8] sm:$0xff]
    %v270 = vld [vmem:[#allocation8 + $0x1d0] sm:$0xff]
    %v271 = vld [vmem:[#allocation8 + $0x1d8] sm:$0xff]
    %v272 = vld [vmem:[#allocation8 + $0x1e0] sm:$0xff]
    %v273 = vld [vmem:[#allocation8 + $0x1e8] sm:$0xff]
    %v274 = vld [vmem:[#allocation8 + $0x1f0] sm:$0xf]
    %v275 = vld [vmem:[#allocation8 + $0x1f4] sm:$0xff]
    %v276 = vld [vmem:[#allocation8 + $0x1fc] sm:$0xff]
    %v277 = vld [vmem:[#allocation8 + $0x204] sm:$0xff]
    %v278 = vld [vmem:[#allocation8 + $0x20c] sm:$0xff]
    %v279 = vld [vmem:[#allocation8 + $0x214] sm:$0xff]
    %v280 = vld [vmem:[#allocation8 + $0x21c] sm:$0xff]
    %v281 = vld [vmem:[#allocation8 + $0x224] sm:$0xff]
    %v282 = vld [vmem:[#allocation8 + $0x22c] sm:$0xff]
    %v283 = vld [vmem:[#allocation8 + $0x234] sm:$0xff]
    %v284 = vld [vmem:[#allocation8 + $0x23c] sm:$0xff]
    %v285 = vld [vmem:[#allocation8 + $0x244] sm:$0xff]
    %v286 = vld [vmem:[#allocation8 + $0x24c] sm:$0xff]
    %v287 = vld [vmem:[#allocation8 + $0x254] sm:$0xf]
    %v288 = vld [vmem:[#allocation8 + $0x258] sm:$0xff]
    %v289 = vld [vmem:[#allocation8 + $0x260] sm:$0xff]
    %v290 = vld [vmem:[#allocation8 + $0x268] sm:$0xff]
    %v291 = vld [vmem:[#allocation8 + $0x270] sm:$0xff]
    %v292 = vld [vmem:[#allocation8 + $0x278] sm:$0xff]
    %v293 = vld [vmem:[#allocation8 + $0x280] sm:$0xff]
    %v294 = vld [vmem:[#allocation8 + $0x288] sm:$0xff]
    %v295 = vld [vmem:[#allocation8 + $0x290] sm:$0xff]
    %v296 = vld [vmem:[#allocation8 + $0x298] sm:$0xff]
    %v297 = vld [vmem:[#allocation8 + $0x2a0] sm:$0xff]
    %v298 = vld [vmem:[#allocation8 + $0x2a8] sm:$0xff]
    %v299 = vld [vmem:[#allocation8 + $0x2b0] sm:$0xff]
    %v300 = vld [vmem:[#allocation8 + $0x2b8] sm:$0xf]
    %v301 = vld [vmem:[#allocation8 + $0x2bc] sm:$0xff]
    %v302 = vld [vmem:[#allocation8 + $0x2c4] sm:$0xff]
    %v303 = vld [vmem:[#allocation8 + $0x2cc] sm:$0xff]
    %v304 = vld [vmem:[#allocation8 + $0x2d4] sm:$0xff]
    %v305 = vld [vmem:[#allocation8 + $0x2dc] sm:$0xff]
    %v306 = vld [vmem:[#allocation8 + $0x2e4] sm:$0xff]
    %v307 = vld [vmem:[#allocation8 + $0x2ec] sm:$0xff]
    %v308 = vld [vmem:[#allocation8 + $0x2f4] sm:$0xff]
    %v309 = vld [vmem:[#allocation8 + $0x2fc] sm:$0xff]
    %v310 = vld [vmem:[#allocation8 + $0x304] sm:$0xff]
    %v311 = vld [vmem:[#allocation8 + $0x30c] sm:$0xff]
    %v312 = vld [vmem:[#allocation8 + $0x314] sm:$0xff]
    %v313 = vld [vmem:[#allocation8 + $0x31c] sm:$0xf]
    %v314 = vld [vmem:[#allocation8 + $0x320] sm:$0xff]
    %v315 = vld [vmem:[#allocation8 + $0x328] sm:$0xff]
    %v316 = vld [vmem:[#allocation8 + $0x330] sm:$0xff]
    %v317 = vld [vmem:[#allocation8 + $0x338] sm:$0xff]
    %v318 = vld [vmem:[#allocation8 + $0x340] sm:$0xff]
    %v319 = vld [vmem:[#allocation8 + $0x348] sm:$0xff]
    %v320 = vld [vmem:[#allocation8 + $0x350] sm:$0xff]
    %v321 = vld [vmem:[#allocation8 + $0x358] sm:$0xff]
    %v322 = vld [vmem:[#allocation8 + $0x360] sm:$0xff]
    %v323 = vld [vmem:[#allocation8 + $0x368] sm:$0xff]
    %v324 = vld [vmem:[#allocation8 + $0x370] sm:$0xff]
    %v325 = vld [vmem:[#allocation8 + $0x378] sm:$0xff]
    %v326 = vld [vmem:[#allocation8 + $0x380] sm:$0xf]
    %v327 = vld [vmem:[#allocation8 + $0x384] sm:$0xff]
    %v328 = vld [vmem:[#allocation8 + $0x38c] sm:$0xff]
    %v329 = vld [vmem:[#allocation8 + $0x394] sm:$0xff]
    %v330 = vld [vmem:[#allocation8 + $0x39c] sm:$0xff]
    %v331 = vld [vmem:[#allocation8 + $0x3a4] sm:$0xff]
    %v332 = vld [vmem:[#allocation8 + $0x3ac] sm:$0xff]
    %v333 = vld [vmem:[#allocation8 + $0x3b4] sm:$0xff]
    %v334 = vld [vmem:[#allocation8 + $0x3bc] sm:$0xff]
    %v335 = vld [vmem:[#allocation8 + $0x3c4] sm:$0xff]
    %v336 = vld [vmem:[#allocation8 + $0x3cc] sm:$0xff]
    %v337 = vld [vmem:[#allocation8 + $0x3d4] sm:$0xff]
    %v338 = vld [vmem:[#allocation8 + $0x3dc] sm:$0xff]
    %v339 = vld [vmem:[#allocation8 + $0x3e4] sm:$0xf]
    %v340 = vld [vmem:[#allocation8 + $0x3e8] sm:$0xff]
    %v341 = vld [vmem:[#allocation8 + $0x3f0] sm:$0xff]
    %v342 = vld [vmem:[#allocation8 + $0x3f8] sm:$0xff]
    %v343 = vld [vmem:[#allocation8 + $0x400] sm:$0xff]
    %v344 = vld [vmem:[#allocation8 + $0x408] sm:$0xff]
    %v345 = vld [vmem:[#allocation8 + $0x410] sm:$0xff]
    %v346 = vld [vmem:[#allocation8 + $0x418] sm:$0xff]
    %v347 = vld [vmem:[#allocation8 + $0x420] sm:$0xff]
    %v348 = vld [vmem:[#allocation8 + $0x428] sm:$0xff]
    %v349 = vld [vmem:[#allocation8 + $0x430] sm:$0xff]
    %v350 = vld [vmem:[#allocation8 + $0x438] sm:$0xff]
    %v351 = vld [vmem:[#allocation8 + $0x440] sm:$0xff]
    %v352 = vld [vmem:[#allocation8 + $0x448] sm:$0xf]
    %v353 = vld [vmem:[#allocation8 + $0x44c] sm:$0xff]
    %v354 = vld [vmem:[#allocation8 + $0x454] sm:$0xff]
    %v355 = vld [vmem:[#allocation8 + $0x45c] sm:$0xff]
    %v356 = vld [vmem:[#allocation8 + $0x464] sm:$0xff]
    %v357 = vld [vmem:[#allocation8 + $0x46c] sm:$0xff]
    %v358 = vld [vmem:[#allocation8 + $0x474] sm:$0xff]
    %v359 = vld [vmem:[#allocation8 + $0x47c] sm:$0xff]
    %v360 = vld [vmem:[#allocation8 + $0x484] sm:$0xff]
    %v361 = vld [vmem:[#allocation8 + $0x48c] sm:$0xff]
    %v362 = vld [vmem:[#allocation8 + $0x494] sm:$0xff]
    %v363 = vld [vmem:[#allocation8 + $0x49c] sm:$0xff]
    %v364 = vld [vmem:[#allocation8 + $0x4a4] sm:$0xff]
    %v365 = vld [vmem:[#allocation8 + $0x4ac] sm:$0xf]
    %v366 = vld [vmem:[#allocation8 + $0x4b0] sm:$0xff]
    %v367 = vld [vmem:[#allocation8 + $0x4b8] sm:$0xff]
    %v368 = vld [vmem:[#allocation8 + $0x4c0] sm:$0xff]
    %v369 = vld [vmem:[#allocation8 + $0x4c8] sm:$0xff]
    %v370 = vld [vmem:[#allocation8 + $0x4d0] sm:$0xff]
    %v371 = vld [vmem:[#allocation8 + $0x4d8] sm:$0xff]
    %v372 = vld [vmem:[#allocation8 + $0x4e0] sm:$0xff]
    %v373 = vld [vmem:[#allocation8 + $0x4e8] sm:$0xff]
    %v374 = vld [vmem:[#allocation8 + $0x4f0] sm:$0xff]
    %v375 = vld [vmem:[#allocation8 + $0x4f8] sm:$0xff]
    %v376 = vld [vmem:[#allocation8 + $0x500] sm:$0xff]
    %v377 = vld [vmem:[#allocation8 + $0x508] sm:$0xff]
    %v378 = vld [vmem:[#allocation8 + $0x510] sm:$0xf]
    %v379 = vld [vmem:[#allocation8 + $0x514] sm:$0xff]
    %v380 = vld [vmem:[#allocation8 + $0x51c] sm:$0xff]
    %v381 = vld [vmem:[#allocation8 + $0x524] sm:$0xff]
    %v382 = vld [vmem:[#allocation8 + $0x52c] sm:$0xff]
    %v383 = vld [vmem:[#allocation8 + $0x534] sm:$0xff]
    %v384 = vld [vmem:[#allocation8 + $0x53c] sm:$0xff]
    %v385 = vld [vmem:[#allocation8 + $0x544] sm:$0xff]
    %v386 = vld [vmem:[#allocation8 + $0x54c] sm:$0xff]
    %v387 = vld [vmem:[#allocation8 + $0x554] sm:$0xff]
    %v388 = vld [vmem:[#allocation8 + $0x55c] sm:$0xff]
    %v389 = vld [vmem:[#allocation8 + $0x564] sm:$0xff]
    %v390 = vld [vmem:[#allocation8 + $0x56c] sm:$0xff]
    %v391 = vld [vmem:[#allocation8 + $0x574] sm:$0xf]
    %v392 = vld [vmem:[#allocation8 + $0x578] sm:$0xff]
    %v393 = vld [vmem:[#allocation8 + $0x580] sm:$0xff]
    %v394 = vld [vmem:[#allocation8 + $0x588] sm:$0xff]
    %v395 = vld [vmem:[#allocation8 + $0x590] sm:$0xff]
    %v396 = vld [vmem:[#allocation8 + $0x598] sm:$0xff]
    %v397 = vld [vmem:[#allocation8 + $0x5a0] sm:$0xff]
    %v398 = vld [vmem:[#allocation8 + $0x5a8] sm:$0xff]
    %v399 = vld [vmem:[#allocation8 + $0x5b0] sm:$0xff]
    %v400 = vld [vmem:[#allocation8 + $0x5b8] sm:$0xff]
    %v401 = vld [vmem:[#allocation8 + $0x5c0] sm:$0xff]
    %v402 = vld [vmem:[#allocation8 + $0x5c8] sm:$0xff]
    %v403 = vld [vmem:[#allocation8 + $0x5d0] sm:$0xff]
    %v404 = vld [vmem:[#allocation8 + $0x5d8] sm:$0xf]
    %v405 = vld [vmem:[#allocation8 + $0x5dc] sm:$0xff]
    %v406 = vld [vmem:[#allocation8 + $0x5e4] sm:$0xff]
    %v407 = vld [vmem:[#allocation8 + $0x5ec] sm:$0xff]
    %v408 = vld [vmem:[#allocation8 + $0x5f4] sm:$0xff]
    %v409 = vld [vmem:[#allocation8 + $0x5fc] sm:$0xff]
    %v410 = vld [vmem:[#allocation8 + $0x604] sm:$0xff]
    %v411 = vld [vmem:[#allocation8 + $0x60c] sm:$0xff]
    %v412 = vld [vmem:[#allocation8 + $0x614] sm:$0xff]
    %v413 = vld [vmem:[#allocation8 + $0x61c] sm:$0xff]
    %v414 = vld [vmem:[#allocation8 + $0x624] sm:$0xff]
    %v415 = vld [vmem:[#allocation8 + $0x62c] sm:$0xff]
    %v416 = vld [vmem:[#allocation8 + $0x634] sm:$0xff]
    %v417 = vld [vmem:[#allocation8 + $0x63c] sm:$0xf]
    %v418 = vld [vmem:[#allocation8 + $0x640] sm:$0xff]
    %v419 = vld [vmem:[#allocation8 + $0x648] sm:$0xff]
    %v420 = vld [vmem:[#allocation8 + $0x650] sm:$0xff]
    %v421 = vld [vmem:[#allocation8 + $0x658] sm:$0xff]
    %v422 = vld [vmem:[#allocation8 + $0x660] sm:$0xff]
    %v423 = vld [vmem:[#allocation8 + $0x668] sm:$0xff]
    %v424 = vld [vmem:[#allocation8 + $0x670] sm:$0xff]
    %v425 = vld [vmem:[#allocation8 + $0x678] sm:$0xff]
    %v426 = vld [vmem:[#allocation8 + $0x680] sm:$0xff]
    %v427 = vld [vmem:[#allocation8 + $0x688] sm:$0xff]
    %v428 = vld [vmem:[#allocation8 + $0x690] sm:$0xff]
    %v429 = vld [vmem:[#allocation8 + $0x698] sm:$0xff]
    %v430 = vld [vmem:[#allocation8 + $0x6a0] sm:$0xf]
    %v431 = vld [vmem:[#allocation8 + $0x6a4] sm:$0xff]
    %v432 = vld [vmem:[#allocation8 + $0x6ac] sm:$0xff]
    %v433 = vld [vmem:[#allocation8 + $0x6b4] sm:$0xff]
    %v434 = vld [vmem:[#allocation8 + $0x6bc] sm:$0xff]
    %v435 = vld [vmem:[#allocation8 + $0x6c4] sm:$0xff]
    %v436 = vld [vmem:[#allocation8 + $0x6cc] sm:$0xff]
    %v437 = vld [vmem:[#allocation8 + $0x6d4] sm:$0xff]
    %v438 = vld [vmem:[#allocation8 + $0x6dc] sm:$0xff]
    %v439 = vld [vmem:[#allocation8 + $0x6e4] sm:$0xff]
    %v440 = vld [vmem:[#allocation8 + $0x6ec] sm:$0xff]
    %v441 = vld [vmem:[#allocation8 + $0x6f4] sm:$0xff]
    %v442 = vld [vmem:[#allocation8 + $0x6fc] sm:$0xff]
    %v443 = vld [vmem:[#allocation8 + $0x704] sm:$0xf]
    %v444 = vld [vmem:[#allocation8 + $0x708] sm:$0xff]
    %v445 = vld [vmem:[#allocation8 + $0x710] sm:$0xff]
    %v446 = vld [vmem:[#allocation8 + $0x718] sm:$0xff]
    %v447 = vld [vmem:[#allocation8 + $0x720] sm:$0xff]
    %v448 = vld [vmem:[#allocation8 + $0x728] sm:$0xff]
    %v449 = vld [vmem:[#allocation8 + $0x730] sm:$0xff]
    %v450 = vld [vmem:[#allocation8 + $0x738] sm:$0xff]
    %v451 = vld [vmem:[#allocation8 + $0x740] sm:$0xff]
    %v452 = vld [vmem:[#allocation8 + $0x748] sm:$0xff]
    %v453 = vld [vmem:[#allocation8 + $0x750] sm:$0xff]
    %v454 = vld [vmem:[#allocation8 + $0x758] sm:$0xff]
    %v455 = vld [vmem:[#allocation8 + $0x760] sm:$0xff]
    %v456 = vld [vmem:[#allocation8 + $0x768] sm:$0xf]
    %v457 = vld [vmem:[#allocation8 + $0x76c] sm:$0xff]
    %v458 = vld [vmem:[#allocation8 + $0x774] sm:$0xff]
    %v459 = vld [vmem:[#allocation8 + $0x77c] sm:$0xff]
    %v460 = vld [vmem:[#allocation8 + $0x784] sm:$0xff]
    %v461 = vld [vmem:[#allocation8 + $0x78c] sm:$0xff]
    %v462 = vld [vmem:[#allocation8 + $0x794] sm:$0xff]
    %v463 = vld [vmem:[#allocation8 + $0x79c] sm:$0xff]
    %v464 = vld [vmem:[#allocation8 + $0x7a4] sm:$0xff]
    %v465 = vld [vmem:[#allocation8 + $0x7ac] sm:$0xff]
    %v466 = vld [vmem:[#allocation8 + $0x7b4] sm:$0xff]
    %v467 = vld [vmem:[#allocation8 + $0x7bc] sm:$0xff]
    %v468 = vld [vmem:[#allocation8 + $0x7c4] sm:$0xff]
    %v469 = vld [vmem:[#allocation8 + $0x7cc] sm:$0xf]
    %v470 = vld [vmem:[#allocation8 + $0x7d0] sm:$0xff]
    %v471 = vld [vmem:[#allocation8 + $0x7d8] sm:$0xff]
    %v472 = vld [vmem:[#allocation8 + $0x7e0] sm:$0xff]
    %v473 = vld [vmem:[#allocation8 + $0x7e8] sm:$0xff]
    %v474 = vld [vmem:[#allocation8 + $0x7f0] sm:$0xff]
    %v475 = vld [vmem:[#allocation8 + $0x7f8] sm:$0xff]
    %v476 = vld [vmem:[#allocation8 + $0x800] sm:$0xff]
    %v477 = vld [vmem:[#allocation8 + $0x808] sm:$0xff]
    %v478 = vld [vmem:[#allocation8 + $0x810] sm:$0xff]
    %v479 = vld [vmem:[#allocation8 + $0x818] sm:$0xff]
    %v480 = vld [vmem:[#allocation8 + $0x820] sm:$0xff]
    %v481 = vld [vmem:[#allocation8 + $0x828] sm:$0xff]
    %v482 = vld [vmem:[#allocation8 + $0x830] sm:$0xf]
    %v483 = vld [vmem:[#allocation8 + $0x834] sm:$0xff]
    %v484 = vld [vmem:[#allocation8 + $0x83c] sm:$0xff]
    %v485 = vld [vmem:[#allocation8 + $0x844] sm:$0xff]
    %v486 = vld [vmem:[#allocation8 + $0x84c] sm:$0xff]
    %v487 = vld [vmem:[#allocation8 + $0x854] sm:$0xff]
    %v488 = vld [vmem:[#allocation8 + $0x85c] sm:$0xff]
    %v489 = vld [vmem:[#allocation8 + $0x864] sm:$0xff]
    %v490 = vld [vmem:[#allocation8 + $0x86c] sm:$0xff]
    %v491 = vld [vmem:[#allocation8 + $0x874] sm:$0xff]
    %v492 = vld [vmem:[#allocation8 + $0x87c] sm:$0xff]
    %v493 = vld [vmem:[#allocation8 + $0x884] sm:$0xff]
    %v494 = vld [vmem:[#allocation8 + $0x88c] sm:$0xff]
    %v495 = vld [vmem:[#allocation8 + $0x894] sm:$0xf]
    %v496 = vld [vmem:[#allocation8 + $0x898] sm:$0xff]
    %v497 = vld [vmem:[#allocation8 + $0x8a0] sm:$0xff]
    %v498 = vld [vmem:[#allocation8 + $0x8a8] sm:$0xff]
    %v499 = vld [vmem:[#allocation8 + $0x8b0] sm:$0xff]
    %v500 = vld [vmem:[#allocation8 + $0x8b8] sm:$0xff]
    %v501 = vld [vmem:[#allocation8 + $0x8c0] sm:$0xff]
    %v502 = vld [vmem:[#allocation8 + $0x8c8] sm:$0xff]
    %v503 = vld [vmem:[#allocation8 + $0x8d0] sm:$0xff]
    %v504 = vld [vmem:[#allocation8 + $0x8d8] sm:$0xff]
    %v505 = vld [vmem:[#allocation8 + $0x8e0] sm:$0xff]
    %v506 = vld [vmem:[#allocation8 + $0x8e8] sm:$0xff]
    %v507 = vld [vmem:[#allocation8 + $0x8f0] sm:$0xff]
    %v508 = vld [vmem:[#allocation8 + $0x8f8] sm:$0xf]
    %v509 = vld [vmem:[#allocation8 + $0x8fc] sm:$0xff]
    %v510 = vld [vmem:[#allocation8 + $0x904] sm:$0xff]
    %v511 = vld [vmem:[#allocation8 + $0x90c] sm:$0xff]
    %v512 = vld [vmem:[#allocation8 + $0x914] sm:$0xff]
    %v513 = vld [vmem:[#allocation8 + $0x91c] sm:$0xff]
    %v514 = vld [vmem:[#allocation8 + $0x924] sm:$0xff]
    %v515 = vld [vmem:[#allocation8 + $0x92c] sm:$0xff]
    %v516 = vld [vmem:[#allocation8 + $0x934] sm:$0xff]
    %v517 = vld [vmem:[#allocation8 + $0x93c] sm:$0xff]
    %v518 = vld [vmem:[#allocation8 + $0x944] sm:$0xff]
    %v519 = vld [vmem:[#allocation8 + $0x94c] sm:$0xff]
    %v520 = vld [vmem:[#allocation8 + $0x954] sm:$0xff]
    %v521 = vld [vmem:[#allocation8 + $0x95c] sm:$0xf]
    %v522 = vld [vmem:[#allocation8 + $0x960] sm:$0xff]
    %v523 = vld [vmem:[#allocation8 + $0x968] sm:$0xff]
    %v524 = vld [vmem:[#allocation8 + $0x970] sm:$0xff]
    %v525 = vld [vmem:[#allocation8 + $0x978] sm:$0xff]
    %v526 = vld [vmem:[#allocation8 + $0x980] sm:$0xff]
    %v527 = vld [vmem:[#allocation8 + $0x988] sm:$0xff]
    %v528 = vld [vmem:[#allocation8 + $0x990] sm:$0xff]
    %v529 = vld [vmem:[#allocation8 + $0x998] sm:$0xff]
    %v530 = vld [vmem:[#allocation8 + $0x9a0] sm:$0xff]
    %v531 = vld [vmem:[#allocation8 + $0x9a8] sm:$0xff]
    %v532 = vld [vmem:[#allocation8 + $0x9b0] sm:$0xff]
    %v533 = vld [vmem:[#allocation8 + $0x9b8] sm:$0xff]
    %v534 = vld [vmem:[#allocation8 + $0x9c0] sm:$0xf]
    %v535 = vld [vmem:[#allocation8 + $0x9c4] sm:$0xff]
    %v536 = vld [vmem:[#allocation8 + $0x9cc] sm:$0xff]
    %v537 = vld [vmem:[#allocation8 + $0x9d4] sm:$0xff]
    %v538 = vld [vmem:[#allocation8 + $0x9dc] sm:$0xff]
    %v539 = vld [vmem:[#allocation8 + $0x9e4] sm:$0xff]
    %v540 = vld [vmem:[#allocation8 + $0x9ec] sm:$0xff]
    %v541 = vld [vmem:[#allocation8 + $0x9f4] sm:$0xff]
    %v542 = vld [vmem:[#allocation8 + $0x9fc] sm:$0xff]
    %v543 = vld [vmem:[#allocation8 + $0xa04] sm:$0xff]
    %v544 = vld [vmem:[#allocation8 + $0xa0c] sm:$0xff]
    %v545 = vld [vmem:[#allocation8 + $0xa14] sm:$0xff]
    %v546 = vld [vmem:[#allocation8 + $0xa1c] sm:$0xff]
    %v547 = vld [vmem:[#allocation8 + $0xa24] sm:$0xf]
    %v548 = vld [vmem:[#allocation8 + $0xa28] sm:$0xff]
    %v549 = vld [vmem:[#allocation8 + $0xa30] sm:$0xff]
    %v550 = vld [vmem:[#allocation8 + $0xa38] sm:$0xff]
    %v551 = vld [vmem:[#allocation8 + $0xa40] sm:$0xff]
    %v552 = vld [vmem:[#allocation8 + $0xa48] sm:$0xff]
    %v553 = vld [vmem:[#allocation8 + $0xa50] sm:$0xff]
    %v554 = vld [vmem:[#allocation8 + $0xa58] sm:$0xff]
    %v555 = vld [vmem:[#allocation8 + $0xa60] sm:$0xff]
    %v556 = vld [vmem:[#allocation8 + $0xa68] sm:$0xff]
    %v557 = vld [vmem:[#allocation8 + $0xa70] sm:$0xff]
    %v558 = vld [vmem:[#allocation8 + $0xa78] sm:$0xff]
    %v559 = vld [vmem:[#allocation8 + $0xa80] sm:$0xff]
    %v560 = vld [vmem:[#allocation8 + $0xa88] sm:$0xf]
    %v561 = vld [vmem:[#allocation8 + $0xa8c] sm:$0xff]
    %v562 = vld [vmem:[#allocation8 + $0xa94] sm:$0xff]
    %v563 = vld [vmem:[#allocation8 + $0xa9c] sm:$0xff]
    %v564 = vld [vmem:[#allocation8 + $0xaa4] sm:$0xff]
    %v565 = vld [vmem:[#allocation8 + $0xaac] sm:$0xff]
    %v566 = vld [vmem:[#allocation8 + $0xab4] sm:$0xff]
    %v567 = vld [vmem:[#allocation8 + $0xabc] sm:$0xff]
    %v568 = vld [vmem:[#allocation8 + $0xac4] sm:$0xff]
    %v569 = vld [vmem:[#allocation8 + $0xacc] sm:$0xff]
    %v570 = vld [vmem:[#allocation8 + $0xad4] sm:$0xff]
    %v571 = vld [vmem:[#allocation8 + $0xadc] sm:$0xff]
    %v572 = vld [vmem:[#allocation8 + $0xae4] sm:$0xff]
    %v573 = vld [vmem:[#allocation8 + $0xaec] sm:$0xf]
    %v574 = vld [vmem:[#allocation8 + $0xaf0] sm:$0xff]
    %v575 = vld [vmem:[#allocation8 + $0xaf8] sm:$0xff]
    %v576 = vld [vmem:[#allocation8 + $0xb00] sm:$0xff]
    %v577 = vld [vmem:[#allocation8 + $0xb08] sm:$0xff]
    %v578 = vld [vmem:[#allocation8 + $0xb10] sm:$0xff]
    %v579 = vld [vmem:[#allocation8 + $0xb18] sm:$0xff]
    %v580 = vld [vmem:[#allocation8 + $0xb20] sm:$0xff]
    %v581 = vld [vmem:[#allocation8 + $0xb28] sm:$0xff]
    %v582 = vld [vmem:[#allocation8 + $0xb30] sm:$0xff]
    %v583 = vld [vmem:[#allocation8 + $0xb38] sm:$0xff]
    %v584 = vld [vmem:[#allocation8 + $0xb40] sm:$0xff]
    %v585 = vld [vmem:[#allocation8 + $0xb48] sm:$0xff]
    %v586 = vld [vmem:[#allocation8 + $0xb50] sm:$0xf]
    %v587 = vld [vmem:[#allocation8 + $0xb54] sm:$0xff]
    %v588 = vld [vmem:[#allocation8 + $0xb5c] sm:$0xff]
    %v589 = vld [vmem:[#allocation8 + $0xb64] sm:$0xff]
    %v590 = vld [vmem:[#allocation8 + $0xb6c] sm:$0xff]
    %v591 = vld [vmem:[#allocation8 + $0xb74] sm:$0xff]
    %v592 = vld [vmem:[#allocation8 + $0xb7c] sm:$0xff]
    %v593 = vld [vmem:[#allocation8 + $0xb84] sm:$0xff]
    %v594 = vld [vmem:[#allocation8 + $0xb8c] sm:$0xff]
    %v595 = vld [vmem:[#allocation8 + $0xb94] sm:$0xff]
    %v596 = vld [vmem:[#allocation8 + $0xb9c] sm:$0xff]
    %v597 = vld [vmem:[#allocation8 + $0xba4] sm:$0xff]
    %v598 = vld [vmem:[#allocation8 + $0xbac] sm:$0xff]
    %v599 = vld [vmem:[#allocation8 + $0xbb4] sm:$0xf]
    %v600 = vld [vmem:[#allocation8 + $0xbb8] sm:$0xff]
    %v601 = vld [vmem:[#allocation8 + $0xbc0] sm:$0xff]
    %v602 = vld [vmem:[#allocation8 + $0xbc8] sm:$0xff]
    %v603 = vld [vmem:[#allocation8 + $0xbd0] sm:$0xff]
    %v604 = vld [vmem:[#allocation8 + $0xbd8] sm:$0xff]
    %v605 = vld [vmem:[#allocation8 + $0xbe0] sm:$0xff]
    %v606 = vld [vmem:[#allocation8 + $0xbe8] sm:$0xff]
    %v607 = vld [vmem:[#allocation8 + $0xbf0] sm:$0xff]
    %v608 = vld [vmem:[#allocation8 + $0xbf8] sm:$0xff]
    %v609 = vld [vmem:[#allocation8 + $0xc00] sm:$0xff]
    %v610 = vld [vmem:[#allocation8 + $0xc08] sm:$0xff]
    %v611 = vld [vmem:[#allocation8 + $0xc10] sm:$0xff]
    %v612 = vld [vmem:[#allocation8 + $0xc18] sm:$0xf]
    %v613 = vld [vmem:[#allocation8 + $0xc1c] sm:$0xff]
    %v614 = vld [vmem:[#allocation8 + $0xc24] sm:$0xff]
    %v615 = vld [vmem:[#allocation8 + $0xc2c] sm:$0xff]
    %v616 = vld [vmem:[#allocation8 + $0xc34] sm:$0xff]
    %v617 = vld [vmem:[#allocation8 + $0xc3c] sm:$0xff]
    %v618 = vld [vmem:[#allocation8 + $0xc44] sm:$0xff]
    %v619 = vld [vmem:[#allocation8 + $0xc4c] sm:$0xff]
    %v620 = vld [vmem:[#allocation8 + $0xc54] sm:$0xff]
    %v621 = vld [vmem:[#allocation8 + $0xc5c] sm:$0xff]
    %v622 = vld [vmem:[#allocation8 + $0xc64] sm:$0xff]
    %v623 = vld [vmem:[#allocation8 + $0xc6c] sm:$0xff]
    %v624 = vld [vmem:[#allocation8 + $0xc74] sm:$0xff]
    %v625 = vld [vmem:[#allocation8 + $0xc7c] sm:$0xf]
    %v626 = vld [vmem:[#allocation10] sm:$0xff]
    %v627 = vld [vmem:[#allocation10 + $0x8] sm:$0xff]
    %v628 = vld [vmem:[#allocation10 + $0x10] sm:$0xff]
    %v629 = vld [vmem:[#allocation10 + $0x18] sm:$0x1]
    %v634 = vlaneseq
    %v635 = vshrl.u32 %v634, 7
    %v636 = vsub.s32 0, %v635
    %v637 = vrot.slane %v626, %v636
    %v638 = vlaneseq
    %v639 = vshrl.u32 %v638, 7
    %v640 = vsub.s32 1, %v639
    %v641 = vrot.slane %v626, %v640
    %v642 = vlaneseq
    %v643 = vshrl.u32 %v642, 7
    %v644 = vsub.s32 2, %v643
    %v645 = vrot.slane %v626, %v644
    %v646 = vlaneseq
    %v647 = vshrl.u32 %v646, 7
    %v648 = vsub.s32 3, %v647
    %v649 = vrot.slane %v626, %v648
    %v650 = vlaneseq
    %v651 = vshrl.u32 %v650, 7
    %v652 = vsub.s32 4, %v651
    %v653 = vrot.slane %v626, %v652
    %v654 = vlaneseq
    %v655 = vshrl.u32 %v654, 7
    %v656 = vsub.s32 5, %v655
    %v657 = vrot.slane %v626, %v656
    %v658 = vlaneseq
    %v659 = vshrl.u32 %v658, 7
    %v660 = vsub.s32 6, %v659
    %v661 = vrot.slane %v626, %v660
    %v662 = vlaneseq
    %v663 = vshrl.u32 %v662, 7
    %v664 = vsub.s32 7, %v663
    %v665 = vrot.slane %v626, %v664
    %v666 = vlaneseq
    %v667 = vshrl.u32 %v666, 7
    %v668 = vsub.s32 0, %v667
    %v669 = vrot.slane %v627, %v668
    %v670 = vlaneseq
    %v671 = vshrl.u32 %v670, 7
    %v672 = vsub.s32 1, %v671
    %v673 = vrot.slane %v627, %v672
    %v674 = vlaneseq
    %v675 = vshrl.u32 %v674, 7
    %v676 = vsub.s32 2, %v675
    %v677 = vrot.slane %v627, %v676
    %v678 = vlaneseq
    %v679 = vshrl.u32 %v678, 7
    %v680 = vsub.s32 3, %v679
    %v681 = vrot.slane %v627, %v680
    %v682 = vlaneseq
    %v683 = vshrl.u32 %v682, 7
    %v684 = vsub.s32 4, %v683
    %v685 = vrot.slane %v627, %v684
    %v686 = vlaneseq
    %v687 = vshrl.u32 %v686, 7
    %v688 = vsub.s32 5, %v687
    %v689 = vrot.slane %v627, %v688
    %v690 = vlaneseq
    %v691 = vshrl.u32 %v690, 7
    %v692 = vsub.s32 6, %v691
    %v693 = vrot.slane %v627, %v692
    %v694 = vlaneseq
    %v695 = vshrl.u32 %v694, 7
    %v696 = vsub.s32 7, %v695
    %v697 = vrot.slane %v627, %v696
    %v698 = vlaneseq
    %v699 = vshrl.u32 %v698, 7
    %v700 = vsub.s32 0, %v699
    %v701 = vrot.slane %v628, %v700
    %v702 = vlaneseq
    %v703 = vshrl.u32 %v702, 7
    %v704 = vsub.s32 1, %v703
    %v705 = vrot.slane %v628, %v704
    %v706 = vlaneseq
    %v707 = vshrl.u32 %v706, 7
    %v708 = vsub.s32 2, %v707
    %v709 = vrot.slane %v628, %v708
    %v710 = vlaneseq
    %v711 = vshrl.u32 %v710, 7
    %v712 = vsub.s32 3, %v711
    %v713 = vrot.slane %v628, %v712
    %v714 = vlaneseq
    %v715 = vshrl.u32 %v714, 7
    %v716 = vsub.s32 4, %v715
    %v717 = vrot.slane %v628, %v716
    %v718 = vlaneseq
    %v719 = vshrl.u32 %v718, 7
    %v720 = vsub.s32 5, %v719
    %v721 = vrot.slane %v628, %v720
    %v722 = vlaneseq
    %v723 = vshrl.u32 %v722, 7
    %v724 = vsub.s32 6, %v723
    %v725 = vrot.slane %v628, %v724
    %v726 = vlaneseq
    %v727 = vshrl.u32 %v726, 7
    %v728 = vsub.s32 7, %v727
    %v729 = vrot.slane %v628, %v728
    %v730 = vlaneseq
    %v731 = vshrl.u32 %v730, 7
    %v732 = vsub.s32 0, %v731
    %v733 = vrot.slane %v629, %v732
    %v1175 = vunpack.c.l.b16 %v210
    %v1176 = vunpack.c.h.b16 %v210
    %v1177 = vunpack.c.l.b16 %v211
    %v1178 = vunpack.c.h.b16 %v211
    %v1179 = vunpack.c.l.b16 %v212
    %v1180 = vunpack.c.h.b16 %v212
    %v1181 = vunpack.c.l.b16 %v213
    %v1182 = vunpack.c.h.b16 %v213
    %v1183 = vunpack.c.l.b16 %v214
    %v1184 = vunpack.c.h.b16 %v214
    %v1185 = vunpack.c.l.b16 %v215
    %v1186 = vunpack.c.h.b16 %v215
    %v1187 = vunpack.c.l.b16 %v216
    %v1188 = vunpack.c.h.b16 %v216
    %v1189 = vunpack.c.l.b16 %v217
    %v1190 = vunpack.c.h.b16 %v217
    %v1191 = vunpack.c.l.b16 %v218
    %v1192 = vunpack.c.h.b16 %v218
    %v1193 = vunpack.c.l.b16 %v219
    %v1194 = vunpack.c.h.b16 %v219
    %v1195 = vunpack.c.l.b16 %v220
    %v1196 = vunpack.c.h.b16 %v220
    %v1197 = vunpack.c.l.b16 %v221
    %v1198 = vunpack.c.h.b16 %v221
    %v1199 = vunpack.c.l.b16 %v222
    %v1200 = vunpack.c.l.b16 %v223
    %v1201 = vunpack.c.h.b16 %v223
    %v1202 = vunpack.c.l.b16 %v224
    %v1203 = vunpack.c.h.b16 %v224
    %v1204 = vunpack.c.l.b16 %v225
    %v1205 = vunpack.c.h.b16 %v225
    %v1206 = vunpack.c.l.b16 %v226
    %v1207 = vunpack.c.h.b16 %v226
    %v1208 = vunpack.c.l.b16 %v227
    %v1209 = vunpack.c.h.b16 %v227
    %v1210 = vunpack.c.l.b16 %v228
    %v1211 = vunpack.c.h.b16 %v228
    %v1212 = vunpack.c.l.b16 %v229
    %v1213 = vunpack.c.h.b16 %v229
    %v1214 = vunpack.c.l.b16 %v230
    %v1215 = vunpack.c.h.b16 %v230
    %v1216 = vunpack.c.l.b16 %v231
    %v1217 = vunpack.c.h.b16 %v231
    %v1218 = vunpack.c.l.b16 %v232
    %v1219 = vunpack.c.h.b16 %v232
    %v1220 = vunpack.c.l.b16 %v233
    %v1221 = vunpack.c.h.b16 %v233
    %v1222 = vunpack.c.l.b16 %v234
    %v1223 = vunpack.c.h.b16 %v234
    %v1224 = vunpack.c.l.b16 %v235
    %v1225 = vunpack.c.l.b16 %v236
    %v1226 = vunpack.c.h.b16 %v236
    %v1227 = vunpack.c.l.b16 %v237
    %v1228 = vunpack.c.h.b16 %v237
    %v1229 = vunpack.c.l.b16 %v238
    %v1230 = vunpack.c.h.b16 %v238
    %v1231 = vunpack.c.l.b16 %v239
    %v1232 = vunpack.c.h.b16 %v239
    %v1233 = vunpack.c.l.b16 %v240
    %v1234 = vunpack.c.h.b16 %v240
    %v1235 = vunpack.c.l.b16 %v241
    %v1236 = vunpack.c.h.b16 %v241
    %v1237 = vunpack.c.l.b16 %v242
    %v1238 = vunpack.c.h.b16 %v242
    %v1239 = vunpack.c.l.b16 %v243
    %v1240 = vunpack.c.h.b16 %v243
    %v1241 = vunpack.c.l.b16 %v244
    %v1242 = vunpack.c.h.b16 %v244
    %v1243 = vunpack.c.l.b16 %v245
    %v1244 = vunpack.c.h.b16 %v245
    %v1245 = vunpack.c.l.b16 %v246
    %v1246 = vunpack.c.h.b16 %v246
    %v1247 = vunpack.c.l.b16 %v247
    %v1248 = vunpack.c.h.b16 %v247
    %v1249 = vunpack.c.l.b16 %v248
    %v1250 = vunpack.c.l.b16 %v249
    %v1251 = vunpack.c.h.b16 %v249
    %v1252 = vunpack.c.l.b16 %v250
    %v1253 = vunpack.c.h.b16 %v250
    %v1254 = vunpack.c.l.b16 %v251
    %v1255 = vunpack.c.h.b16 %v251
    %v1256 = vunpack.c.l.b16 %v252
    %v1257 = vunpack.c.h.b16 %v252
    %v1258 = vunpack.c.l.b16 %v253
    %v1259 = vunpack.c.h.b16 %v253
    %v1260 = vunpack.c.l.b16 %v254
    %v1261 = vunpack.c.h.b16 %v254
    %v1262 = vunpack.c.l.b16 %v255
    %v1263 = vunpack.c.h.b16 %v255
    %v1264 = vunpack.c.l.b16 %v256
    %v1265 = vunpack.c.h.b16 %v256
    %v1266 = vunpack.c.l.b16 %v257
    %v1267 = vunpack.c.h.b16 %v257
    %v1268 = vunpack.c.l.b16 %v258
    %v1269 = vunpack.c.h.b16 %v258
    %v1270 = vunpack.c.l.b16 %v259
    %v1271 = vunpack.c.h.b16 %v259
    %v1272 = vunpack.c.l.b16 %v260
    %v1273 = vunpack.c.h.b16 %v260
    %v1274 = vunpack.c.l.b16 %v261
    %v1275 = vunpack.c.l.b16 %v262
    %v1276 = vunpack.c.h.b16 %v262
    %v1277 = vunpack.c.l.b16 %v263
    %v1278 = vunpack.c.h.b16 %v263
    %v1279 = vunpack.c.l.b16 %v264
    %v1280 = vunpack.c.h.b16 %v264
    %v1281 = vunpack.c.l.b16 %v265
    %v1282 = vunpack.c.h.b16 %v265
    %v1283 = vunpack.c.l.b16 %v266
    %v1284 = vunpack.c.h.b16 %v266
    %v1285 = vunpack.c.l.b16 %v267
    %v1286 = vunpack.c.h.b16 %v267
    %v1287 = vunpack.c.l.b16 %v268
    %v1288 = vunpack.c.h.b16 %v268
    %v1289 = vunpack.c.l.b16 %v269
    %v1290 = vunpack.c.h.b16 %v269
    %v1291 = vunpack.c.l.b16 %v270
    %v1292 = vunpack.c.h.b16 %v270
    %v1293 = vunpack.c.l.b16 %v271
    %v1294 = vunpack.c.h.b16 %v271
    %v1295 = vunpack.c.l.b16 %v272
    %v1296 = vunpack.c.h.b16 %v272
    %v1297 = vunpack.c.l.b16 %v273
    %v1298 = vunpack.c.h.b16 %v273
    %v1299 = vunpack.c.l.b16 %v274
    %v1300 = vunpack.c.l.b16 %v275
    %v1301 = vunpack.c.h.b16 %v275
    %v1302 = vunpack.c.l.b16 %v276
    %v1303 = vunpack.c.h.b16 %v276
    %v1304 = vunpack.c.l.b16 %v277
    %v1305 = vunpack.c.h.b16 %v277
    %v1306 = vunpack.c.l.b16 %v278
    %v1307 = vunpack.c.h.b16 %v278
    %v1308 = vunpack.c.l.b16 %v279
    %v1309 = vunpack.c.h.b16 %v279
    %v1310 = vunpack.c.l.b16 %v280
    %v1311 = vunpack.c.h.b16 %v280
    %v1312 = vunpack.c.l.b16 %v281
    %v1313 = vunpack.c.h.b16 %v281
    %v1314 = vunpack.c.l.b16 %v282
    %v1315 = vunpack.c.h.b16 %v282
    %v1316 = vunpack.c.l.b16 %v283
    %v1317 = vunpack.c.h.b16 %v283
    %v1318 = vunpack.c.l.b16 %v284
    %v1319 = vunpack.c.h.b16 %v284
    %v1320 = vunpack.c.l.b16 %v285
    %v1321 = vunpack.c.h.b16 %v285
    %v1322 = vunpack.c.l.b16 %v286
    %v1323 = vunpack.c.h.b16 %v286
    %v1324 = vunpack.c.l.b16 %v287
    %v1325 = vunpack.c.l.b16 %v288
    %v1326 = vunpack.c.h.b16 %v288
    %v1327 = vunpack.c.l.b16 %v289
    %v1328 = vunpack.c.h.b16 %v289
    %v1329 = vunpack.c.l.b16 %v290
    %v1330 = vunpack.c.h.b16 %v290
    %v1331 = vunpack.c.l.b16 %v291
    %v1332 = vunpack.c.h.b16 %v291
    %v1333 = vunpack.c.l.b16 %v292
    %v1334 = vunpack.c.h.b16 %v292
    %v1335 = vunpack.c.l.b16 %v293
    %v1336 = vunpack.c.h.b16 %v293
    %v1337 = vunpack.c.l.b16 %v294
    %v1338 = vunpack.c.h.b16 %v294
    %v1339 = vunpack.c.l.b16 %v295
    %v1340 = vunpack.c.h.b16 %v295
    %v1341 = vunpack.c.l.b16 %v296
    %v1342 = vunpack.c.h.b16 %v296
    %v1343 = vunpack.c.l.b16 %v297
    %v1344 = vunpack.c.h.b16 %v297
    %v1345 = vunpack.c.l.b16 %v298
    %v1346 = vunpack.c.h.b16 %v298
    %v1347 = vunpack.c.l.b16 %v299
    %v1348 = vunpack.c.h.b16 %v299
    %v1349 = vunpack.c.l.b16 %v300
    %v1350 = vunpack.c.l.b16 %v301
    %v1351 = vunpack.c.h.b16 %v301
    %v1352 = vunpack.c.l.b16 %v302
    %v1353 = vunpack.c.h.b16 %v302
    %v1354 = vunpack.c.l.b16 %v303
    %v1355 = vunpack.c.h.b16 %v303
    %v1356 = vunpack.c.l.b16 %v304
    %v1357 = vunpack.c.h.b16 %v304
    %v1358 = vunpack.c.l.b16 %v305
    %v1359 = vunpack.c.h.b16 %v305
    %v1360 = vunpack.c.l.b16 %v306
    %v1361 = vunpack.c.h.b16 %v306
    %v1362 = vunpack.c.l.b16 %v307
    %v1363 = vunpack.c.h.b16 %v307
    %v1364 = vunpack.c.l.b16 %v308
    %v1365 = vunpack.c.h.b16 %v308
    %v1366 = vunpack.c.l.b16 %v309
    %v1367 = vunpack.c.h.b16 %v309
    %v1368 = vunpack.c.l.b16 %v310
    %v1369 = vunpack.c.h.b16 %v310
    %v1370 = vunpack.c.l.b16 %v311
    %v1371 = vunpack.c.h.b16 %v311
    %v1372 = vunpack.c.l.b16 %v312
    %v1373 = vunpack.c.h.b16 %v312
    %v1374 = vunpack.c.l.b16 %v313
    %v1375 = vunpack.c.l.b16 %v314
    %v1376 = vunpack.c.h.b16 %v314
    %v1377 = vunpack.c.l.b16 %v315
    %v1378 = vunpack.c.h.b16 %v315
    %v1379 = vunpack.c.l.b16 %v316
    %v1380 = vunpack.c.h.b16 %v316
    %v1381 = vunpack.c.l.b16 %v317
    %v1382 = vunpack.c.h.b16 %v317
    %v1383 = vunpack.c.l.b16 %v318
    %v1384 = vunpack.c.h.b16 %v318
    %v1385 = vunpack.c.l.b16 %v319
    %v1386 = vunpack.c.h.b16 %v319
    %v1387 = vunpack.c.l.b16 %v320
    %v1388 = vunpack.c.h.b16 %v320
    %v1389 = vunpack.c.l.b16 %v321
    %v1390 = vunpack.c.h.b16 %v321
    %v1391 = vunpack.c.l.b16 %v322
    %v1392 = vunpack.c.h.b16 %v322
    %v1393 = vunpack.c.l.b16 %v323
    %v1394 = vunpack.c.h.b16 %v323
    %v1395 = vunpack.c.l.b16 %v324
    %v1396 = vunpack.c.h.b16 %v324
    %v1397 = vunpack.c.l.b16 %v325
    %v1398 = vunpack.c.h.b16 %v325
    %v1399 = vunpack.c.l.b16 %v326
    %v1400 = vunpack.c.l.b16 %v327
    %v1401 = vunpack.c.h.b16 %v327
    %v1402 = vunpack.c.l.b16 %v328
    %v1403 = vunpack.c.h.b16 %v328
    %v1404 = vunpack.c.l.b16 %v329
    %v1405 = vunpack.c.h.b16 %v329
    %v1406 = vunpack.c.l.b16 %v330
    %v1407 = vunpack.c.h.b16 %v330
    %v1408 = vunpack.c.l.b16 %v331
    %v1409 = vunpack.c.h.b16 %v331
    %v1410 = vunpack.c.l.b16 %v332
    %v1411 = vunpack.c.h.b16 %v332
    %v1412 = vunpack.c.l.b16 %v333
    %v1413 = vunpack.c.h.b16 %v333
    %v1414 = vunpack.c.l.b16 %v334
    %v1415 = vunpack.c.h.b16 %v334
    %v1416 = vunpack.c.l.b16 %v335
    %v1417 = vunpack.c.h.b16 %v335
    %v1418 = vunpack.c.l.b16 %v336
    %v1419 = vunpack.c.h.b16 %v336
    %v1420 = vunpack.c.l.b16 %v337
    %v1421 = vunpack.c.h.b16 %v337
    %v1422 = vunpack.c.l.b16 %v338
    %v1423 = vunpack.c.h.b16 %v338
    %v1424 = vunpack.c.l.b16 %v339
    %v1425 = vunpack.c.l.b16 %v340
    %v1426 = vunpack.c.h.b16 %v340
    %v1427 = vunpack.c.l.b16 %v341
    %v1428 = vunpack.c.h.b16 %v341
    %v1429 = vunpack.c.l.b16 %v342
    %v1430 = vunpack.c.h.b16 %v342
    %v1431 = vunpack.c.l.b16 %v343
    %v1432 = vunpack.c.h.b16 %v343
    %v1433 = vunpack.c.l.b16 %v344
    %v1434 = vunpack.c.h.b16 %v344
    %v1435 = vunpack.c.l.b16 %v345
    %v1436 = vunpack.c.h.b16 %v345
    %v1437 = vunpack.c.l.b16 %v346
    %v1438 = vunpack.c.h.b16 %v346
    %v1439 = vunpack.c.l.b16 %v347
    %v1440 = vunpack.c.h.b16 %v347
    %v1441 = vunpack.c.l.b16 %v348
    %v1442 = vunpack.c.h.b16 %v348
    %v1443 = vunpack.c.l.b16 %v349
    %v1444 = vunpack.c.h.b16 %v349
    %v1445 = vunpack.c.l.b16 %v350
    %v1446 = vunpack.c.h.b16 %v350
    %v1447 = vunpack.c.l.b16 %v351
    %v1448 = vunpack.c.h.b16 %v351
    %v1449 = vunpack.c.l.b16 %v352
    %v1450 = vunpack.c.l.b16 %v353
    %v1451 = vunpack.c.h.b16 %v353
    %v1452 = vunpack.c.l.b16 %v354
    %v1453 = vunpack.c.h.b16 %v354
    %v1454 = vunpack.c.l.b16 %v355
    %v1455 = vunpack.c.h.b16 %v355
    %v1456 = vunpack.c.l.b16 %v356
    %v1457 = vunpack.c.h.b16 %v356
    %v1458 = vunpack.c.l.b16 %v357
    %v1459 = vunpack.c.h.b16 %v357
    %v1460 = vunpack.c.l.b16 %v358
    %v1461 = vunpack.c.h.b16 %v358
    %v1462 = vunpack.c.l.b16 %v359
    %v1463 = vunpack.c.h.b16 %v359
    %v1464 = vunpack.c.l.b16 %v360
    %v1465 = vunpack.c.h.b16 %v360
    %v1466 = vunpack.c.l.b16 %v361
    %v1467 = vunpack.c.h.b16 %v361
    %v1468 = vunpack.c.l.b16 %v362
    %v1469 = vunpack.c.h.b16 %v362
    %v1470 = vunpack.c.l.b16 %v363
    %v1471 = vunpack.c.h.b16 %v363
    %v1472 = vunpack.c.l.b16 %v364
    %v1473 = vunpack.c.h.b16 %v364
    %v1474 = vunpack.c.l.b16 %v365
    %v1475 = vunpack.c.l.b16 %v366
    %v1476 = vunpack.c.h.b16 %v366
    %v1477 = vunpack.c.l.b16 %v367
    %v1478 = vunpack.c.h.b16 %v367
    %v1479 = vunpack.c.l.b16 %v368
    %v1480 = vunpack.c.h.b16 %v368
    %v1481 = vunpack.c.l.b16 %v369
    %v1482 = vunpack.c.h.b16 %v369
    %v1483 = vunpack.c.l.b16 %v370
    %v1484 = vunpack.c.h.b16 %v370
    %v1485 = vunpack.c.l.b16 %v371
    %v1486 = vunpack.c.h.b16 %v371
    %v1487 = vunpack.c.l.b16 %v372
    %v1488 = vunpack.c.h.b16 %v372
    %v1489 = vunpack.c.l.b16 %v373
    %v1490 = vunpack.c.h.b16 %v373
    %v1491 = vunpack.c.l.b16 %v374
    %v1492 = vunpack.c.h.b16 %v374
    %v1493 = vunpack.c.l.b16 %v375
    %v1494 = vunpack.c.h.b16 %v375
    %v1495 = vunpack.c.l.b16 %v376
    %v1496 = vunpack.c.h.b16 %v376
    %v1497 = vunpack.c.l.b16 %v377
    %v1498 = vunpack.c.h.b16 %v377
    %v1499 = vunpack.c.l.b16 %v378
    %v1500 = vunpack.c.l.b16 %v379
    %v1501 = vunpack.c.h.b16 %v379
    %v1502 = vunpack.c.l.b16 %v380
    %v1503 = vunpack.c.h.b16 %v380
    %v1504 = vunpack.c.l.b16 %v381
    %v1505 = vunpack.c.h.b16 %v381
    %v1506 = vunpack.c.l.b16 %v382
    %v1507 = vunpack.c.h.b16 %v382
    %v1508 = vunpack.c.l.b16 %v383
    %v1509 = vunpack.c.h.b16 %v383
    %v1510 = vunpack.c.l.b16 %v384
    %v1511 = vunpack.c.h.b16 %v384
    %v1512 = vunpack.c.l.b16 %v385
    %v1513 = vunpack.c.h.b16 %v385
    %v1514 = vunpack.c.l.b16 %v386
    %v1515 = vunpack.c.h.b16 %v386
    %v1516 = vunpack.c.l.b16 %v387
    %v1517 = vunpack.c.h.b16 %v387
    %v1518 = vunpack.c.l.b16 %v388
    %v1519 = vunpack.c.h.b16 %v388
    %v1520 = vunpack.c.l.b16 %v389
    %v1521 = vunpack.c.h.b16 %v389
    %v1522 = vunpack.c.l.b16 %v390
    %v1523 = vunpack.c.h.b16 %v390
    %v1524 = vunpack.c.l.b16 %v391
    %v1525 = vunpack.c.l.b16 %v392
    %v1526 = vunpack.c.h.b16 %v392
    %v1527 = vunpack.c.l.b16 %v393
    %v1528 = vunpack.c.h.b16 %v393
    %v1529 = vunpack.c.l.b16 %v394
    %v1530 = vunpack.c.h.b16 %v394
    %v1531 = vunpack.c.l.b16 %v395
    %v1532 = vunpack.c.h.b16 %v395
    %v1533 = vunpack.c.l.b16 %v396
    %v1534 = vunpack.c.h.b16 %v396
    %v1535 = vunpack.c.l.b16 %v397
    %v1536 = vunpack.c.h.b16 %v397
    %v1537 = vunpack.c.l.b16 %v398
    %v1538 = vunpack.c.h.b16 %v398
    %v1539 = vunpack.c.l.b16 %v399
    %v1540 = vunpack.c.h.b16 %v399
    %v1541 = vunpack.c.l.b16 %v400
    %v1542 = vunpack.c.h.b16 %v400
    %v1543 = vunpack.c.l.b16 %v401
    %v1544 = vunpack.c.h.b16 %v401
    %v1545 = vunpack.c.l.b16 %v402
    %v1546 = vunpack.c.h.b16 %v402
    %v1547 = vunpack.c.l.b16 %v403
    %v1548 = vunpack.c.h.b16 %v403
    %v1549 = vunpack.c.l.b16 %v404
    %v1550 = vunpack.c.l.b16 %v405
    %v1551 = vunpack.c.h.b16 %v405
    %v1552 = vunpack.c.l.b16 %v406
    %v1553 = vunpack.c.h.b16 %v406
    %v1554 = vunpack.c.l.b16 %v407
    %v1555 = vunpack.c.h.b16 %v407
    %v1556 = vunpack.c.l.b16 %v408
    %v1557 = vunpack.c.h.b16 %v408
    %v1558 = vunpack.c.l.b16 %v409
    %v1559 = vunpack.c.h.b16 %v409
    %v1560 = vunpack.c.l.b16 %v410
    %v1561 = vunpack.c.h.b16 %v410
    %v1562 = vunpack.c.l.b16 %v411
    %v1563 = vunpack.c.h.b16 %v411
    %v1564 = vunpack.c.l.b16 %v412
    %v1565 = vunpack.c.h.b16 %v412
    %v1566 = vunpack.c.l.b16 %v413
    %v1567 = vunpack.c.h.b16 %v413
    %v1568 = vunpack.c.l.b16 %v414
    %v1569 = vunpack.c.h.b16 %v414
    %v1570 = vunpack.c.l.b16 %v415
    %v1571 = vunpack.c.h.b16 %v415
    %v1572 = vunpack.c.l.b16 %v416
    %v1573 = vunpack.c.h.b16 %v416
    %v1574 = vunpack.c.l.b16 %v417
    %v1575 = vunpack.c.l.b16 %v418
    %v1576 = vunpack.c.h.b16 %v418
    %v1577 = vunpack.c.l.b16 %v419
    %v1578 = vunpack.c.h.b16 %v419
    %v1579 = vunpack.c.l.b16 %v420
    %v1580 = vunpack.c.h.b16 %v420
    %v1581 = vunpack.c.l.b16 %v421
    %v1582 = vunpack.c.h.b16 %v421
    %v1583 = vunpack.c.l.b16 %v422
    %v1584 = vunpack.c.h.b16 %v422
    %v1585 = vunpack.c.l.b16 %v423
    %v1586 = vunpack.c.h.b16 %v423
    %v1587 = vunpack.c.l.b16 %v424
    %v1588 = vunpack.c.h.b16 %v424
    %v1589 = vunpack.c.l.b16 %v425
    %v1590 = vunpack.c.h.b16 %v425
    %v1591 = vunpack.c.l.b16 %v426
    %v1592 = vunpack.c.h.b16 %v426
    %v1593 = vunpack.c.l.b16 %v427
    %v1594 = vunpack.c.h.b16 %v427
    %v1595 = vunpack.c.l.b16 %v428
    %v1596 = vunpack.c.h.b16 %v428
    %v1597 = vunpack.c.l.b16 %v429
    %v1598 = vunpack.c.h.b16 %v429
    %v1599 = vunpack.c.l.b16 %v430
    %v1600 = vunpack.c.l.b16 %v431
    %v1601 = vunpack.c.h.b16 %v431
    %v1602 = vunpack.c.l.b16 %v432
    %v1603 = vunpack.c.h.b16 %v432
    %v1604 = vunpack.c.l.b16 %v433
    %v1605 = vunpack.c.h.b16 %v433
    %v1606 = vunpack.c.l.b16 %v434
    %v1607 = vunpack.c.h.b16 %v434
    %v1608 = vunpack.c.l.b16 %v435
    %v1609 = vunpack.c.h.b16 %v435
    %v1610 = vunpack.c.l.b16 %v436
    %v1611 = vunpack.c.h.b16 %v436
    %v1612 = vunpack.c.l.b16 %v437
    %v1613 = vunpack.c.h.b16 %v437
    %v1614 = vunpack.c.l.b16 %v438
    %v1615 = vunpack.c.h.b16 %v438
    %v1616 = vunpack.c.l.b16 %v439
    %v1617 = vunpack.c.h.b16 %v439
    %v1618 = vunpack.c.l.b16 %v440
    %v1619 = vunpack.c.h.b16 %v440
    %v1620 = vunpack.c.l.b16 %v441
    %v1621 = vunpack.c.h.b16 %v441
    %v1622 = vunpack.c.l.b16 %v442
    %v1623 = vunpack.c.h.b16 %v442
    %v1624 = vunpack.c.l.b16 %v443
    %v1625 = vunpack.c.l.b16 %v444
    %v1626 = vunpack.c.h.b16 %v444
    %v1627 = vunpack.c.l.b16 %v445
    %v1628 = vunpack.c.h.b16 %v445
    %v1629 = vunpack.c.l.b16 %v446
    %v1630 = vunpack.c.h.b16 %v446
    %v1631 = vunpack.c.l.b16 %v447
    %v1632 = vunpack.c.h.b16 %v447
    %v1633 = vunpack.c.l.b16 %v448
    %v1634 = vunpack.c.h.b16 %v448
    %v1635 = vunpack.c.l.b16 %v449
    %v1636 = vunpack.c.h.b16 %v449
    %v1637 = vunpack.c.l.b16 %v450
    %v1638 = vunpack.c.h.b16 %v450
    %v1639 = vunpack.c.l.b16 %v451
    %v1640 = vunpack.c.h.b16 %v451
    %v1641 = vunpack.c.l.b16 %v452
    %v1642 = vunpack.c.h.b16 %v452
    %v1643 = vunpack.c.l.b16 %v453
    %v1644 = vunpack.c.h.b16 %v453
    %v1645 = vunpack.c.l.b16 %v454
    %v1646 = vunpack.c.h.b16 %v454
    %v1647 = vunpack.c.l.b16 %v455
    %v1648 = vunpack.c.h.b16 %v455
    %v1649 = vunpack.c.l.b16 %v456
    %v1650 = vunpack.c.l.b16 %v457
    %v1651 = vunpack.c.h.b16 %v457
    %v1652 = vunpack.c.l.b16 %v458
    %v1653 = vunpack.c.h.b16 %v458
    %v1654 = vunpack.c.l.b16 %v459
    %v1655 = vunpack.c.h.b16 %v459
    %v1656 = vunpack.c.l.b16 %v460
    %v1657 = vunpack.c.h.b16 %v460
    %v1658 = vunpack.c.l.b16 %v461
    %v1659 = vunpack.c.h.b16 %v461
    %v1660 = vunpack.c.l.b16 %v462
    %v1661 = vunpack.c.h.b16 %v462
    %v1662 = vunpack.c.l.b16 %v463
    %v1663 = vunpack.c.h.b16 %v463
    %v1664 = vunpack.c.l.b16 %v464
    %v1665 = vunpack.c.h.b16 %v464
    %v1666 = vunpack.c.l.b16 %v465
    %v1667 = vunpack.c.h.b16 %v465
    %v1668 = vunpack.c.l.b16 %v466
    %v1669 = vunpack.c.h.b16 %v466
    %v1670 = vunpack.c.l.b16 %v467
    %v1671 = vunpack.c.h.b16 %v467
    %v1672 = vunpack.c.l.b16 %v468
    %v1673 = vunpack.c.h.b16 %v468
    %v1674 = vunpack.c.l.b16 %v469
    %v1675 = vunpack.c.l.b16 %v470
    %v1676 = vunpack.c.h.b16 %v470
    %v1677 = vunpack.c.l.b16 %v471
    %v1678 = vunpack.c.h.b16 %v471
    %v1679 = vunpack.c.l.b16 %v472
    %v1680 = vunpack.c.h.b16 %v472
    %v1681 = vunpack.c.l.b16 %v473
    %v1682 = vunpack.c.h.b16 %v473
    %v1683 = vunpack.c.l.b16 %v474
    %v1684 = vunpack.c.h.b16 %v474
    %v1685 = vunpack.c.l.b16 %v475
    %v1686 = vunpack.c.h.b16 %v475
    %v1687 = vunpack.c.l.b16 %v476
    %v1688 = vunpack.c.h.b16 %v476
    %v1689 = vunpack.c.l.b16 %v477
    %v1690 = vunpack.c.h.b16 %v477
    %v1691 = vunpack.c.l.b16 %v478
    %v1692 = vunpack.c.h.b16 %v478
    %v1693 = vunpack.c.l.b16 %v479
    %v1694 = vunpack.c.h.b16 %v479
    %v1695 = vunpack.c.l.b16 %v480
    %v1696 = vunpack.c.h.b16 %v480
    %v1697 = vunpack.c.l.b16 %v481
    %v1698 = vunpack.c.h.b16 %v481
    %v1699 = vunpack.c.l.b16 %v482
    %v1700 = vunpack.c.l.b16 %v483
    %v1701 = vunpack.c.h.b16 %v483
    %v1702 = vunpack.c.l.b16 %v484
    %v1703 = vunpack.c.h.b16 %v484
    %v1704 = vunpack.c.l.b16 %v485
    %v1705 = vunpack.c.h.b16 %v485
    %v1706 = vunpack.c.l.b16 %v486
    %v1707 = vunpack.c.h.b16 %v486
    %v1708 = vunpack.c.l.b16 %v487
    %v1709 = vunpack.c.h.b16 %v487
    %v1710 = vunpack.c.l.b16 %v488
    %v1711 = vunpack.c.h.b16 %v488
    %v1712 = vunpack.c.l.b16 %v489
    %v1713 = vunpack.c.h.b16 %v489
    %v1714 = vunpack.c.l.b16 %v490
    %v1715 = vunpack.c.h.b16 %v490
    %v1716 = vunpack.c.l.b16 %v491
    %v1717 = vunpack.c.h.b16 %v491
    %v1718 = vunpack.c.l.b16 %v492
    %v1719 = vunpack.c.h.b16 %v492
    %v1720 = vunpack.c.l.b16 %v493
    %v1721 = vunpack.c.h.b16 %v493
    %v1722 = vunpack.c.l.b16 %v494
    %v1723 = vunpack.c.h.b16 %v494
    %v1724 = vunpack.c.l.b16 %v495
    %v1725 = vunpack.c.l.b16 %v496
    %v1726 = vunpack.c.h.b16 %v496
    %v1727 = vunpack.c.l.b16 %v497
    %v1728 = vunpack.c.h.b16 %v497
    %v1729 = vunpack.c.l.b16 %v498
    %v1730 = vunpack.c.h.b16 %v498
    %v1731 = vunpack.c.l.b16 %v499
    %v1732 = vunpack.c.h.b16 %v499
    %v1733 = vunpack.c.l.b16 %v500
    %v1734 = vunpack.c.h.b16 %v500
    %v1735 = vunpack.c.l.b16 %v501
    %v1736 = vunpack.c.h.b16 %v501
    %v1737 = vunpack.c.l.b16 %v502
    %v1738 = vunpack.c.h.b16 %v502
    %v1739 = vunpack.c.l.b16 %v503
    %v1740 = vunpack.c.h.b16 %v503
    %v1741 = vunpack.c.l.b16 %v504
    %v1742 = vunpack.c.h.b16 %v504
    %v1743 = vunpack.c.l.b16 %v505
    %v1744 = vunpack.c.h.b16 %v505
    %v1745 = vunpack.c.l.b16 %v506
    %v1746 = vunpack.c.h.b16 %v506
    %v1747 = vunpack.c.l.b16 %v507
    %v1748 = vunpack.c.h.b16 %v507
    %v1749 = vunpack.c.l.b16 %v508
    %v1750 = vunpack.c.l.b16 %v509
    %v1751 = vunpack.c.h.b16 %v509
    %v1752 = vunpack.c.l.b16 %v510
    %v1753 = vunpack.c.h.b16 %v510
    %v1754 = vunpack.c.l.b16 %v511
    %v1755 = vunpack.c.h.b16 %v511
    %v1756 = vunpack.c.l.b16 %v512
    %v1757 = vunpack.c.h.b16 %v512
    %v1758 = vunpack.c.l.b16 %v513
    %v1759 = vunpack.c.h.b16 %v513
    %v1760 = vunpack.c.l.b16 %v514
    %v1761 = vunpack.c.h.b16 %v514
    %v1762 = vunpack.c.l.b16 %v515
    %v1763 = vunpack.c.h.b16 %v515
    %v1764 = vunpack.c.l.b16 %v516
    %v1765 = vunpack.c.h.b16 %v516
    %v1766 = vunpack.c.l.b16 %v517
    %v1767 = vunpack.c.h.b16 %v517
    %v1768 = vunpack.c.l.b16 %v518
    %v1769 = vunpack.c.h.b16 %v518
    %v1770 = vunpack.c.l.b16 %v519
    %v1771 = vunpack.c.h.b16 %v519
    %v1772 = vunpack.c.l.b16 %v520
    %v1773 = vunpack.c.h.b16 %v520
    %v1774 = vunpack.c.l.b16 %v521
    %v1775 = vunpack.c.l.b16 %v522
    %v1776 = vunpack.c.h.b16 %v522
    %v1777 = vunpack.c.l.b16 %v523
    %v1778 = vunpack.c.h.b16 %v523
    %v1779 = vunpack.c.l.b16 %v524
    %v1780 = vunpack.c.h.b16 %v524
    %v1781 = vunpack.c.l.b16 %v525
    %v1782 = vunpack.c.h.b16 %v525
    %v1783 = vunpack.c.l.b16 %v526
    %v1784 = vunpack.c.h.b16 %v526
    %v1785 = vunpack.c.l.b16 %v527
    %v1786 = vunpack.c.h.b16 %v527
    %v1787 = vunpack.c.l.b16 %v528
    %v1788 = vunpack.c.h.b16 %v528
    %v1789 = vunpack.c.l.b16 %v529
    %v1790 = vunpack.c.h.b16 %v529
    %v1791 = vunpack.c.l.b16 %v530
    %v1792 = vunpack.c.h.b16 %v530
    %v1793 = vunpack.c.l.b16 %v531
    %v1794 = vunpack.c.h.b16 %v531
    %v1795 = vunpack.c.l.b16 %v532
    %v1796 = vunpack.c.h.b16 %v532
    %v1797 = vunpack.c.l.b16 %v533
    %v1798 = vunpack.c.h.b16 %v533
    %v1799 = vunpack.c.l.b16 %v534
    %v1800 = vunpack.c.l.b16 %v535
    %v1801 = vunpack.c.h.b16 %v535
    %v1802 = vunpack.c.l.b16 %v536
    %v1803 = vunpack.c.h.b16 %v536
    %v1804 = vunpack.c.l.b16 %v537
    %v1805 = vunpack.c.h.b16 %v537
    %v1806 = vunpack.c.l.b16 %v538
    %v1807 = vunpack.c.h.b16 %v538
    %v1808 = vunpack.c.l.b16 %v539
    %v1809 = vunpack.c.h.b16 %v539
    %v1810 = vunpack.c.l.b16 %v540
    %v1811 = vunpack.c.h.b16 %v540
    %v1812 = vunpack.c.l.b16 %v541
    %v1813 = vunpack.c.h.b16 %v541
    %v1814 = vunpack.c.l.b16 %v542
    %v1815 = vunpack.c.h.b16 %v542
    %v1816 = vunpack.c.l.b16 %v543
    %v1817 = vunpack.c.h.b16 %v543
    %v1818 = vunpack.c.l.b16 %v544
    %v1819 = vunpack.c.h.b16 %v544
    %v1820 = vunpack.c.l.b16 %v545
    %v1821 = vunpack.c.h.b16 %v545
    %v1822 = vunpack.c.l.b16 %v546
    %v1823 = vunpack.c.h.b16 %v546
    %v1824 = vunpack.c.l.b16 %v547
    %v1825 = vunpack.c.l.b16 %v548
    %v1826 = vunpack.c.h.b16 %v548
    %v1827 = vunpack.c.l.b16 %v549
    %v1828 = vunpack.c.h.b16 %v549
    %v1829 = vunpack.c.l.b16 %v550
    %v1830 = vunpack.c.h.b16 %v550
    %v1831 = vunpack.c.l.b16 %v551
    %v1832 = vunpack.c.h.b16 %v551
    %v1833 = vunpack.c.l.b16 %v552
    %v1834 = vunpack.c.h.b16 %v552
    %v1835 = vunpack.c.l.b16 %v553
    %v1836 = vunpack.c.h.b16 %v553
    %v1837 = vunpack.c.l.b16 %v554
    %v1838 = vunpack.c.h.b16 %v554
    %v1839 = vunpack.c.l.b16 %v555
    %v1840 = vunpack.c.h.b16 %v555
    %v1841 = vunpack.c.l.b16 %v556
    %v1842 = vunpack.c.h.b16 %v556
    %v1843 = vunpack.c.l.b16 %v557
    %v1844 = vunpack.c.h.b16 %v557
    %v1845 = vunpack.c.l.b16 %v558
    %v1846 = vunpack.c.h.b16 %v558
    %v1847 = vunpack.c.l.b16 %v559
    %v1848 = vunpack.c.h.b16 %v559
    %v1849 = vunpack.c.l.b16 %v560
    %v1850 = vunpack.c.l.b16 %v561
    %v1851 = vunpack.c.h.b16 %v561
    %v1852 = vunpack.c.l.b16 %v562
    %v1853 = vunpack.c.h.b16 %v562
    %v1854 = vunpack.c.l.b16 %v563
    %v1855 = vunpack.c.h.b16 %v563
    %v1856 = vunpack.c.l.b16 %v564
    %v1857 = vunpack.c.h.b16 %v564
    %v1858 = vunpack.c.l.b16 %v565
    %v1859 = vunpack.c.h.b16 %v565
    %v1860 = vunpack.c.l.b16 %v566
    %v1861 = vunpack.c.h.b16 %v566
    %v1862 = vunpack.c.l.b16 %v567
    %v1863 = vunpack.c.h.b16 %v567
    %v1864 = vunpack.c.l.b16 %v568
    %v1865 = vunpack.c.h.b16 %v568
    %v1866 = vunpack.c.l.b16 %v569
    %v1867 = vunpack.c.h.b16 %v569
    %v1868 = vunpack.c.l.b16 %v570
    %v1869 = vunpack.c.h.b16 %v570
    %v1870 = vunpack.c.l.b16 %v571
    %v1871 = vunpack.c.h.b16 %v571
    %v1872 = vunpack.c.l.b16 %v572
    %v1873 = vunpack.c.h.b16 %v572
    %v1874 = vunpack.c.l.b16 %v573
    %v1875 = vunpack.c.l.b16 %v574
    %v1876 = vunpack.c.h.b16 %v574
    %v1877 = vunpack.c.l.b16 %v575
    %v1878 = vunpack.c.h.b16 %v575
    %v1879 = vunpack.c.l.b16 %v576
    %v1880 = vunpack.c.h.b16 %v576
    %v1881 = vunpack.c.l.b16 %v577
    %v1882 = vunpack.c.h.b16 %v577
    %v1883 = vunpack.c.l.b16 %v578
    %v1884 = vunpack.c.h.b16 %v578
    %v1885 = vunpack.c.l.b16 %v579
    %v1886 = vunpack.c.h.b16 %v579
    %v1887 = vunpack.c.l.b16 %v580
    %v1888 = vunpack.c.h.b16 %v580
    %v1889 = vunpack.c.l.b16 %v581
    %v1890 = vunpack.c.h.b16 %v581
    %v1891 = vunpack.c.l.b16 %v582
    %v1892 = vunpack.c.h.b16 %v582
    %v1893 = vunpack.c.l.b16 %v583
    %v1894 = vunpack.c.h.b16 %v583
    %v1895 = vunpack.c.l.b16 %v584
    %v1896 = vunpack.c.h.b16 %v584
    %v1897 = vunpack.c.l.b16 %v585
    %v1898 = vunpack.c.h.b16 %v585
    %v1899 = vunpack.c.l.b16 %v586
    %v1900 = vunpack.c.l.b16 %v587
    %v1901 = vunpack.c.h.b16 %v587
    %v1902 = vunpack.c.l.b16 %v588
    %v1903 = vunpack.c.h.b16 %v588
    %v1904 = vunpack.c.l.b16 %v589
    %v1905 = vunpack.c.h.b16 %v589
    %v1906 = vunpack.c.l.b16 %v590
    %v1907 = vunpack.c.h.b16 %v590
    %v1908 = vunpack.c.l.b16 %v591
    %v1909 = vunpack.c.h.b16 %v591
    %v1910 = vunpack.c.l.b16 %v592
    %v1911 = vunpack.c.h.b16 %v592
    %v1912 = vunpack.c.l.b16 %v593
    %v1913 = vunpack.c.h.b16 %v593
    %v1914 = vunpack.c.l.b16 %v594
    %v1915 = vunpack.c.h.b16 %v594
    %v1916 = vunpack.c.l.b16 %v595
    %v1917 = vunpack.c.h.b16 %v595
    %v1918 = vunpack.c.l.b16 %v596
    %v1919 = vunpack.c.h.b16 %v596
    %v1920 = vunpack.c.l.b16 %v597
    %v1921 = vunpack.c.h.b16 %v597
    %v1922 = vunpack.c.l.b16 %v598
    %v1923 = vunpack.c.h.b16 %v598
    %v1924 = vunpack.c.l.b16 %v599
    %v1925 = vunpack.c.l.b16 %v600
    %v1926 = vunpack.c.h.b16 %v600
    %v1927 = vunpack.c.l.b16 %v601
    %v1928 = vunpack.c.h.b16 %v601
    %v1929 = vunpack.c.l.b16 %v602
    %v1930 = vunpack.c.h.b16 %v602
    %v1931 = vunpack.c.l.b16 %v603
    %v1932 = vunpack.c.h.b16 %v603
    %v1933 = vunpack.c.l.b16 %v604
    %v1934 = vunpack.c.h.b16 %v604
    %v1935 = vunpack.c.l.b16 %v605
    %v1936 = vunpack.c.h.b16 %v605
    %v1937 = vunpack.c.l.b16 %v606
    %v1938 = vunpack.c.h.b16 %v606
    %v1939 = vunpack.c.l.b16 %v607
    %v1940 = vunpack.c.h.b16 %v607
    %v1941 = vunpack.c.l.b16 %v608
    %v1942 = vunpack.c.h.b16 %v608
    %v1943 = vunpack.c.l.b16 %v609
    %v1944 = vunpack.c.h.b16 %v609
    %v1945 = vunpack.c.l.b16 %v610
    %v1946 = vunpack.c.h.b16 %v610
    %v1947 = vunpack.c.l.b16 %v611
    %v1948 = vunpack.c.h.b16 %v611
    %v1949 = vunpack.c.l.b16 %v612
    %v1950 = vunpack.c.l.b16 %v613
    %v1951 = vunpack.c.h.b16 %v613
    %v1952 = vunpack.c.l.b16 %v614
    %v1953 = vunpack.c.h.b16 %v614
    %v1954 = vunpack.c.l.b16 %v615
    %v1955 = vunpack.c.h.b16 %v615
    %v1956 = vunpack.c.l.b16 %v616
    %v1957 = vunpack.c.h.b16 %v616
    %v1958 = vunpack.c.l.b16 %v617
    %v1959 = vunpack.c.h.b16 %v617
    %v1960 = vunpack.c.l.b16 %v618
    %v1961 = vunpack.c.h.b16 %v618
    %v1962 = vunpack.c.l.b16 %v619
    %v1963 = vunpack.c.h.b16 %v619
    %v1964 = vunpack.c.l.b16 %v620
    %v1965 = vunpack.c.h.b16 %v620
    %v1966 = vunpack.c.l.b16 %v621
    %v1967 = vunpack.c.h.b16 %v621
    %v1968 = vunpack.c.l.b16 %v622
    %v1969 = vunpack.c.h.b16 %v622
    %v1970 = vunpack.c.l.b16 %v623
    %v1971 = vunpack.c.h.b16 %v623
    %v1972 = vunpack.c.l.b16 %v624
    %v1973 = vunpack.c.h.b16 %v624
    %v1974 = vunpack.c.l.b16 %v625
    %v1975 = vpack.c.b16 %v1200, %v1175
    %v1976 = vpack.c.b16 %v1201, %v1176
    %v1977 = vpack.c.b16 %v1202, %v1177
    %v1978 = vpack.c.b16 %v1203, %v1178
    %v1979 = vpack.c.b16 %v1204, %v1179
    %v1980 = vpack.c.b16 %v1205, %v1180
    %v1981 = vpack.c.b16 %v1206, %v1181
    %v1982 = vpack.c.b16 %v1207, %v1182
    %v1983 = vpack.c.b16 %v1208, %v1183
    %v1984 = vpack.c.b16 %v1209, %v1184
    %v1985 = vpack.c.b16 %v1210, %v1185
    %v1986 = vpack.c.b16 %v1211, %v1186
    %v1987 = vpack.c.b16 %v1212, %v1187
    %v1988 = vpack.c.b16 %v1213, %v1188
    %v1989 = vpack.c.b16 %v1214, %v1189
    %v1990 = vpack.c.b16 %v1215, %v1190
    %v1991 = vpack.c.b16 %v1216, %v1191
    %v1992 = vpack.c.b16 %v1217, %v1192
    %v1993 = vpack.c.b16 %v1218, %v1193
    %v1994 = vpack.c.b16 %v1219, %v1194
    %v1995 = vpack.c.b16 %v1220, %v1195
    %v1996 = vpack.c.b16 %v1221, %v1196
    %v1997 = vpack.c.b16 %v1222, %v1197
    %v1998 = vpack.c.b16 %v1223, %v1198
    %v1999 = vpack.c.b16 %v1224, %v1199
    %v2000 = vpack.c.b16 %v1250, %v1225
    %v2001 = vpack.c.b16 %v1251, %v1226
    %v2002 = vpack.c.b16 %v1252, %v1227
    %v2003 = vpack.c.b16 %v1253, %v1228
    %v2004 = vpack.c.b16 %v1254, %v1229
    %v2005 = vpack.c.b16 %v1255, %v1230
    %v2006 = vpack.c.b16 %v1256, %v1231
    %v2007 = vpack.c.b16 %v1257, %v1232
    %v2008 = vpack.c.b16 %v1258, %v1233
    %v2009 = vpack.c.b16 %v1259, %v1234
    %v2010 = vpack.c.b16 %v1260, %v1235
    %v2011 = vpack.c.b16 %v1261, %v1236
    %v2012 = vpack.c.b16 %v1262, %v1237
    %v2013 = vpack.c.b16 %v1263, %v1238
    %v2014 = vpack.c.b16 %v1264, %v1239
    %v2015 = vpack.c.b16 %v1265, %v1240
    %v2016 = vpack.c.b16 %v1266, %v1241
    %v2017 = vpack.c.b16 %v1267, %v1242
    %v2018 = vpack.c.b16 %v1268, %v1243
    %v2019 = vpack.c.b16 %v1269, %v1244
    %v2020 = vpack.c.b16 %v1270, %v1245
    %v2021 = vpack.c.b16 %v1271, %v1246
    %v2022 = vpack.c.b16 %v1272, %v1247
    %v2023 = vpack.c.b16 %v1273, %v1248
    %v2024 = vpack.c.b16 %v1274, %v1249
    %v2025 = vpack.c.b16 %v1300, %v1275
    %v2026 = vpack.c.b16 %v1301, %v1276
    %v2027 = vpack.c.b16 %v1302, %v1277
    %v2028 = vpack.c.b16 %v1303, %v1278
    %v2029 = vpack.c.b16 %v1304, %v1279
    %v2030 = vpack.c.b16 %v1305, %v1280
    %v2031 = vpack.c.b16 %v1306, %v1281
    %v2032 = vpack.c.b16 %v1307, %v1282
    %v2033 = vpack.c.b16 %v1308, %v1283
    %v2034 = vpack.c.b16 %v1309, %v1284
    %v2035 = vpack.c.b16 %v1310, %v1285
    %v2036 = vpack.c.b16 %v1311, %v1286
    %v2037 = vpack.c.b16 %v1312, %v1287
    %v2038 = vpack.c.b16 %v1313, %v1288
    %v2039 = vpack.c.b16 %v1314, %v1289
    %v2040 = vpack.c.b16 %v1315, %v1290
    %v2041 = vpack.c.b16 %v1316, %v1291
    %v2042 = vpack.c.b16 %v1317, %v1292
    %v2043 = vpack.c.b16 %v1318, %v1293
    %v2044 = vpack.c.b16 %v1319, %v1294
    %v2045 = vpack.c.b16 %v1320, %v1295
    %v2046 = vpack.c.b16 %v1321, %v1296
    %v2047 = vpack.c.b16 %v1322, %v1297
    %v2048 = vpack.c.b16 %v1323, %v1298
    %v2049 = vpack.c.b16 %v1324, %v1299
    %v2050 = vpack.c.b16 %v1350, %v1325
    %v2051 = vpack.c.b16 %v1351, %v1326
    %v2052 = vpack.c.b16 %v1352, %v1327
    %v2053 = vpack.c.b16 %v1353, %v1328
    %v2054 = vpack.c.b16 %v1354, %v1329
    %v2055 = vpack.c.b16 %v1355, %v1330
    %v2056 = vpack.c.b16 %v1356, %v1331
    %v2057 = vpack.c.b16 %v1357, %v1332
    %v2058 = vpack.c.b16 %v1358, %v1333
    %v2059 = vpack.c.b16 %v1359, %v1334
    %v2060 = vpack.c.b16 %v1360, %v1335
    %v2061 = vpack.c.b16 %v1361, %v1336
    %v2062 = vpack.c.b16 %v1362, %v1337
    %v2063 = vpack.c.b16 %v1363, %v1338
    %v2064 = vpack.c.b16 %v1364, %v1339
    %v2065 = vpack.c.b16 %v1365, %v1340
    %v2066 = vpack.c.b16 %v1366, %v1341
    %v2067 = vpack.c.b16 %v1367, %v1342
    %v2068 = vpack.c.b16 %v1368, %v1343
    %v2069 = vpack.c.b16 %v1369, %v1344
    %v2070 = vpack.c.b16 %v1370, %v1345
    %v2071 = vpack.c.b16 %v1371, %v1346
    %v2072 = vpack.c.b16 %v1372, %v1347
    %v2073 = vpack.c.b16 %v1373, %v1348
    %v2074 = vpack.c.b16 %v1374, %v1349
    %v2075 = vpack.c.b16 %v1400, %v1375
    %v2076 = vpack.c.b16 %v1401, %v1376
    %v2077 = vpack.c.b16 %v1402, %v1377
    %v2078 = vpack.c.b16 %v1403, %v1378
    %v2079 = vpack.c.b16 %v1404, %v1379
    %v2080 = vpack.c.b16 %v1405, %v1380
    %v2081 = vpack.c.b16 %v1406, %v1381
    %v2082 = vpack.c.b16 %v1407, %v1382
    %v2083 = vpack.c.b16 %v1408, %v1383
    %v2084 = vpack.c.b16 %v1409, %v1384
    %v2085 = vpack.c.b16 %v1410, %v1385
    %v2086 = vpack.c.b16 %v1411, %v1386
    %v2087 = vpack.c.b16 %v1412, %v1387
    %v2088 = vpack.c.b16 %v1413, %v1388
    %v2089 = vpack.c.b16 %v1414, %v1389
    %v2090 = vpack.c.b16 %v1415, %v1390
    %v2091 = vpack.c.b16 %v1416, %v1391
    %v2092 = vpack.c.b16 %v1417, %v1392
    %v2093 = vpack.c.b16 %v1418, %v1393
    %v2094 = vpack.c.b16 %v1419, %v1394
    %v2095 = vpack.c.b16 %v1420, %v1395
    %v2096 = vpack.c.b16 %v1421, %v1396
    %v2097 = vpack.c.b16 %v1422, %v1397
    %v2098 = vpack.c.b16 %v1423, %v1398
    %v2099 = vpack.c.b16 %v1424, %v1399
    %v2100 = vpack.c.b16 %v1450, %v1425
    %v2101 = vpack.c.b16 %v1451, %v1426
    %v2102 = vpack.c.b16 %v1452, %v1427
    %v2103 = vpack.c.b16 %v1453, %v1428
    %v2104 = vpack.c.b16 %v1454, %v1429
    %v2105 = vpack.c.b16 %v1455, %v1430
    %v2106 = vpack.c.b16 %v1456, %v1431
    %v2107 = vpack.c.b16 %v1457, %v1432
    %v2108 = vpack.c.b16 %v1458, %v1433
    %v2109 = vpack.c.b16 %v1459, %v1434
    %v2110 = vpack.c.b16 %v1460, %v1435
    %v2111 = vpack.c.b16 %v1461, %v1436
    %v2112 = vpack.c.b16 %v1462, %v1437
    %v2113 = vpack.c.b16 %v1463, %v1438
    %v2114 = vpack.c.b16 %v1464, %v1439
    %v2115 = vpack.c.b16 %v1465, %v1440
    %v2116 = vpack.c.b16 %v1466, %v1441
    %v2117 = vpack.c.b16 %v1467, %v1442
    %v2118 = vpack.c.b16 %v1468, %v1443
    %v2119 = vpack.c.b16 %v1469, %v1444
    %v2120 = vpack.c.b16 %v1470, %v1445
    %v2121 = vpack.c.b16 %v1471, %v1446
    %v2122 = vpack.c.b16 %v1472, %v1447
    %v2123 = vpack.c.b16 %v1473, %v1448
    %v2124 = vpack.c.b16 %v1474, %v1449
    %v2125 = vpack.c.b16 %v1500, %v1475
    %v2126 = vpack.c.b16 %v1501, %v1476
    %v2127 = vpack.c.b16 %v1502, %v1477
    %v2128 = vpack.c.b16 %v1503, %v1478
    %v2129 = vpack.c.b16 %v1504, %v1479
    %v2130 = vpack.c.b16 %v1505, %v1480
    %v2131 = vpack.c.b16 %v1506, %v1481
    %v2132 = vpack.c.b16 %v1507, %v1482
    %v2133 = vpack.c.b16 %v1508, %v1483
    %v2134 = vpack.c.b16 %v1509, %v1484
    %v2135 = vpack.c.b16 %v1510, %v1485
    %v2136 = vpack.c.b16 %v1511, %v1486
    %v2137 = vpack.c.b16 %v1512, %v1487
    %v2138 = vpack.c.b16 %v1513, %v1488
    %v2139 = vpack.c.b16 %v1514, %v1489
    %v2140 = vpack.c.b16 %v1515, %v1490
    %v2141 = vpack.c.b16 %v1516, %v1491
    %v2142 = vpack.c.b16 %v1517, %v1492
    %v2143 = vpack.c.b16 %v1518, %v1493
    %v2144 = vpack.c.b16 %v1519, %v1494
    %v2145 = vpack.c.b16 %v1520, %v1495
    %v2146 = vpack.c.b16 %v1521, %v1496
    %v2147 = vpack.c.b16 %v1522, %v1497
    %v2148 = vpack.c.b16 %v1523, %v1498
    %v2149 = vpack.c.b16 %v1524, %v1499
    %v2150 = vpack.c.b16 %v1550, %v1525
    %v2151 = vpack.c.b16 %v1551, %v1526
    %v2152 = vpack.c.b16 %v1552, %v1527
    %v2153 = vpack.c.b16 %v1553, %v1528
    %v2154 = vpack.c.b16 %v1554, %v1529
    %v2155 = vpack.c.b16 %v1555, %v1530
    %v2156 = vpack.c.b16 %v1556, %v1531
    %v2157 = vpack.c.b16 %v1557, %v1532
    %v2158 = vpack.c.b16 %v1558, %v1533
    %v2159 = vpack.c.b16 %v1559, %v1534
    %v2160 = vpack.c.b16 %v1560, %v1535
    %v2161 = vpack.c.b16 %v1561, %v1536
    %v2162 = vpack.c.b16 %v1562, %v1537
    %v2163 = vpack.c.b16 %v1563, %v1538
    %v2164 = vpack.c.b16 %v1564, %v1539
    %v2165 = vpack.c.b16 %v1565, %v1540
    %v2166 = vpack.c.b16 %v1566, %v1541
    %v2167 = vpack.c.b16 %v1567, %v1542
    %v2168 = vpack.c.b16 %v1568, %v1543
    %v2169 = vpack.c.b16 %v1569, %v1544
    %v2170 = vpack.c.b16 %v1570, %v1545
    %v2171 = vpack.c.b16 %v1571, %v1546
    %v2172 = vpack.c.b16 %v1572, %v1547
    %v2173 = vpack.c.b16 %v1573, %v1548
    %v2174 = vpack.c.b16 %v1574, %v1549
    %v2175 = vpack.c.b16 %v1600, %v1575
    %v2176 = vpack.c.b16 %v1601, %v1576
    %v2177 = vpack.c.b16 %v1602, %v1577
    %v2178 = vpack.c.b16 %v1603, %v1578
    %v2179 = vpack.c.b16 %v1604, %v1579
    %v2180 = vpack.c.b16 %v1605, %v1580
    %v2181 = vpack.c.b16 %v1606, %v1581
    %v2182 = vpack.c.b16 %v1607, %v1582
    %v2183 = vpack.c.b16 %v1608, %v1583
    %v2184 = vpack.c.b16 %v1609, %v1584
    %v2185 = vpack.c.b16 %v1610, %v1585
    %v2186 = vpack.c.b16 %v1611, %v1586
    %v2187 = vpack.c.b16 %v1612, %v1587
    %v2188 = vpack.c.b16 %v1613, %v1588
    %v2189 = vpack.c.b16 %v1614, %v1589
    %v2190 = vpack.c.b16 %v1615, %v1590
    %v2191 = vpack.c.b16 %v1616, %v1591
    %v2192 = vpack.c.b16 %v1617, %v1592
    %v2193 = vpack.c.b16 %v1618, %v1593
    %v2194 = vpack.c.b16 %v1619, %v1594
    %v2195 = vpack.c.b16 %v1620, %v1595
    %v2196 = vpack.c.b16 %v1621, %v1596
    %v2197 = vpack.c.b16 %v1622, %v1597
    %v2198 = vpack.c.b16 %v1623, %v1598
    %v2199 = vpack.c.b16 %v1624, %v1599
    %v2200 = vpack.c.b16 %v1650, %v1625
    %v2201 = vpack.c.b16 %v1651, %v1626
    %v2202 = vpack.c.b16 %v1652, %v1627
    %v2203 = vpack.c.b16 %v1653, %v1628
    %v2204 = vpack.c.b16 %v1654, %v1629
    %v2205 = vpack.c.b16 %v1655, %v1630
    %v2206 = vpack.c.b16 %v1656, %v1631
    %v2207 = vpack.c.b16 %v1657, %v1632
    %v2208 = vpack.c.b16 %v1658, %v1633
    %v2209 = vpack.c.b16 %v1659, %v1634
    %v2210 = vpack.c.b16 %v1660, %v1635
    %v2211 = vpack.c.b16 %v1661, %v1636
    %v2212 = vpack.c.b16 %v1662, %v1637
    %v2213 = vpack.c.b16 %v1663, %v1638
    %v2214 = vpack.c.b16 %v1664, %v1639
    %v2215 = vpack.c.b16 %v1665, %v1640
    %v2216 = vpack.c.b16 %v1666, %v1641
    %v2217 = vpack.c.b16 %v1667, %v1642
    %v2218 = vpack.c.b16 %v1668, %v1643
    %v2219 = vpack.c.b16 %v1669, %v1644
    %v2220 = vpack.c.b16 %v1670, %v1645
    %v2221 = vpack.c.b16 %v1671, %v1646
    %v2222 = vpack.c.b16 %v1672, %v1647
    %v2223 = vpack.c.b16 %v1673, %v1648
    %v2224 = vpack.c.b16 %v1674, %v1649
    %v2225 = vpack.c.b16 %v1700, %v1675
    %v2226 = vpack.c.b16 %v1701, %v1676
    %v2227 = vpack.c.b16 %v1702, %v1677
    %v2228 = vpack.c.b16 %v1703, %v1678
    %v2229 = vpack.c.b16 %v1704, %v1679
    %v2230 = vpack.c.b16 %v1705, %v1680
    %v2231 = vpack.c.b16 %v1706, %v1681
    %v2232 = vpack.c.b16 %v1707, %v1682
    %v2233 = vpack.c.b16 %v1708, %v1683
    %v2234 = vpack.c.b16 %v1709, %v1684
    %v2235 = vpack.c.b16 %v1710, %v1685
    %v2236 = vpack.c.b16 %v1711, %v1686
    %v2237 = vpack.c.b16 %v1712, %v1687
    %v2238 = vpack.c.b16 %v1713, %v1688
    %v2239 = vpack.c.b16 %v1714, %v1689
    %v2240 = vpack.c.b16 %v1715, %v1690
    %v2241 = vpack.c.b16 %v1716, %v1691
    %v2242 = vpack.c.b16 %v1717, %v1692
    %v2243 = vpack.c.b16 %v1718, %v1693
    %v2244 = vpack.c.b16 %v1719, %v1694
    %v2245 = vpack.c.b16 %v1720, %v1695
    %v2246 = vpack.c.b16 %v1721, %v1696
    %v2247 = vpack.c.b16 %v1722, %v1697
    %v2248 = vpack.c.b16 %v1723, %v1698
    %v2249 = vpack.c.b16 %v1724, %v1699
    %v2250 = vpack.c.b16 %v1750, %v1725
    %v2251 = vpack.c.b16 %v1751, %v1726
    %v2252 = vpack.c.b16 %v1752, %v1727
    %v2253 = vpack.c.b16 %v1753, %v1728
    %v2254 = vpack.c.b16 %v1754, %v1729
    %v2255 = vpack.c.b16 %v1755, %v1730
    %v2256 = vpack.c.b16 %v1756, %v1731
    %v2257 = vpack.c.b16 %v1757, %v1732
    %v2258 = vpack.c.b16 %v1758, %v1733
    %v2259 = vpack.c.b16 %v1759, %v1734
    %v2260 = vpack.c.b16 %v1760, %v1735
    %v2261 = vpack.c.b16 %v1761, %v1736
    %v2262 = vpack.c.b16 %v1762, %v1737
    %v2263 = vpack.c.b16 %v1763, %v1738
    %v2264 = vpack.c.b16 %v1764, %v1739
    %v2265 = vpack.c.b16 %v1765, %v1740
    %v2266 = vpack.c.b16 %v1766, %v1741
    %v2267 = vpack.c.b16 %v1767, %v1742
    %v2268 = vpack.c.b16 %v1768, %v1743
    %v2269 = vpack.c.b16 %v1769, %v1744
    %v2270 = vpack.c.b16 %v1770, %v1745
    %v2271 = vpack.c.b16 %v1771, %v1746
    %v2272 = vpack.c.b16 %v1772, %v1747
    %v2273 = vpack.c.b16 %v1773, %v1748
    %v2274 = vpack.c.b16 %v1774, %v1749
    %v2275 = vpack.c.b16 %v1800, %v1775
    %v2276 = vpack.c.b16 %v1801, %v1776
    %v2277 = vpack.c.b16 %v1802, %v1777
    %v2278 = vpack.c.b16 %v1803, %v1778
    %v2279 = vpack.c.b16 %v1804, %v1779
    %v2280 = vpack.c.b16 %v1805, %v1780
    %v2281 = vpack.c.b16 %v1806, %v1781
    %v2282 = vpack.c.b16 %v1807, %v1782
    %v2283 = vpack.c.b16 %v1808, %v1783
    %v2284 = vpack.c.b16 %v1809, %v1784
    %v2285 = vpack.c.b16 %v1810, %v1785
    %v2286 = vpack.c.b16 %v1811, %v1786
    %v2287 = vpack.c.b16 %v1812, %v1787
    %v2288 = vpack.c.b16 %v1813, %v1788
    %v2289 = vpack.c.b16 %v1814, %v1789
    %v2290 = vpack.c.b16 %v1815, %v1790
    %v2291 = vpack.c.b16 %v1816, %v1791
    %v2292 = vpack.c.b16 %v1817, %v1792
    %v2293 = vpack.c.b16 %v1818, %v1793
    %v2294 = vpack.c.b16 %v1819, %v1794
    %v2295 = vpack.c.b16 %v1820, %v1795
    %v2296 = vpack.c.b16 %v1821, %v1796
    %v2297 = vpack.c.b16 %v1822, %v1797
    %v2298 = vpack.c.b16 %v1823, %v1798
    %v2299 = vpack.c.b16 %v1824, %v1799
    %v2300 = vpack.c.b16 %v1850, %v1825
    %v2301 = vpack.c.b16 %v1851, %v1826
    %v2302 = vpack.c.b16 %v1852, %v1827
    %v2303 = vpack.c.b16 %v1853, %v1828
    %v2304 = vpack.c.b16 %v1854, %v1829
    %v2305 = vpack.c.b16 %v1855, %v1830
    %v2306 = vpack.c.b16 %v1856, %v1831
    %v2307 = vpack.c.b16 %v1857, %v1832
    %v2308 = vpack.c.b16 %v1858, %v1833
    %v2309 = vpack.c.b16 %v1859, %v1834
    %v2310 = vpack.c.b16 %v1860, %v1835
    %v2311 = vpack.c.b16 %v1861, %v1836
    %v2312 = vpack.c.b16 %v1862, %v1837
    %v2313 = vpack.c.b16 %v1863, %v1838
    %v2314 = vpack.c.b16 %v1864, %v1839
    %v2315 = vpack.c.b16 %v1865, %v1840
    %v2316 = vpack.c.b16 %v1866, %v1841
    %v2317 = vpack.c.b16 %v1867, %v1842
    %v2318 = vpack.c.b16 %v1868, %v1843
    %v2319 = vpack.c.b16 %v1869, %v1844
    %v2320 = vpack.c.b16 %v1870, %v1845
    %v2321 = vpack.c.b16 %v1871, %v1846
    %v2322 = vpack.c.b16 %v1872, %v1847
    %v2323 = vpack.c.b16 %v1873, %v1848
    %v2324 = vpack.c.b16 %v1874, %v1849
    %v2325 = vpack.c.b16 %v1900, %v1875
    %v2326 = vpack.c.b16 %v1901, %v1876
    %v2327 = vpack.c.b16 %v1902, %v1877
    %v2328 = vpack.c.b16 %v1903, %v1878
    %v2329 = vpack.c.b16 %v1904, %v1879
    %v2330 = vpack.c.b16 %v1905, %v1880
    %v2331 = vpack.c.b16 %v1906, %v1881
    %v2332 = vpack.c.b16 %v1907, %v1882
    %v2333 = vpack.c.b16 %v1908, %v1883
    %v2334 = vpack.c.b16 %v1909, %v1884
    %v2335 = vpack.c.b16 %v1910, %v1885
    %v2336 = vpack.c.b16 %v1911, %v1886
    %v2337 = vpack.c.b16 %v1912, %v1887
    %v2338 = vpack.c.b16 %v1913, %v1888
    %v2339 = vpack.c.b16 %v1914, %v1889
    %v2340 = vpack.c.b16 %v1915, %v1890
    %v2341 = vpack.c.b16 %v1916, %v1891
    %v2342 = vpack.c.b16 %v1917, %v1892
    %v2343 = vpack.c.b16 %v1918, %v1893
    %v2344 = vpack.c.b16 %v1919, %v1894
    %v2345 = vpack.c.b16 %v1920, %v1895
    %v2346 = vpack.c.b16 %v1921, %v1896
    %v2347 = vpack.c.b16 %v1922, %v1897
    %v2348 = vpack.c.b16 %v1923, %v1898
    %v2349 = vpack.c.b16 %v1924, %v1899
    %v2350 = vpack.c.b16 %v1950, %v1925
    %v2351 = vpack.c.b16 %v1951, %v1926
    %v2352 = vpack.c.b16 %v1952, %v1927
    %v2353 = vpack.c.b16 %v1953, %v1928
    %v2354 = vpack.c.b16 %v1954, %v1929
    %v2355 = vpack.c.b16 %v1955, %v1930
    %v2356 = vpack.c.b16 %v1956, %v1931
    %v2357 = vpack.c.b16 %v1957, %v1932
    %v2358 = vpack.c.b16 %v1958, %v1933
    %v2359 = vpack.c.b16 %v1959, %v1934
    %v2360 = vpack.c.b16 %v1960, %v1935
    %v2361 = vpack.c.b16 %v1961, %v1936
    %v2362 = vpack.c.b16 %v1962, %v1937
    %v2363 = vpack.c.b16 %v1963, %v1938
    %v2364 = vpack.c.b16 %v1964, %v1939
    %v2365 = vpack.c.b16 %v1965, %v1940
    %v2366 = vpack.c.b16 %v1966, %v1941
    %v2367 = vpack.c.b16 %v1967, %v1942
    %v2368 = vpack.c.b16 %v1968, %v1943
    %v2369 = vpack.c.b16 %v1969, %v1944
    %v2370 = vpack.c.b16 %v1970, %v1945
    %v2371 = vpack.c.b16 %v1971, %v1946
    %v2372 = vpack.c.b16 %v1972, %v1947
    %v2373 = vpack.c.b16 %v1973, %v1948
    %v2374 = vpack.c.b16 %v1974, %v1949
    %2775 = vmatprep.subr.bf16.mxu0 %v1976
    %2776 = vmatpush1.bf16.msra.mxu0 %v1975
    %2777 = vmatprep.subr.bf16.mxu0 %v2001
    %2778 = vmatpush1.bf16.msra.mxu0 %v2000
    %2779 = vmatprep.subr.bf16.mxu0 %v2026
    %2780 = vmatpush1.bf16.msra.mxu0 %v2025
    %2781 = vmatprep.subr.bf16.mxu0 %v2051
    %2782 = vmatpush1.bf16.msra.mxu0 %v2050
    %2783 = vmatprep.subr.bf16.mxu0 %v2076
    %2784 = vmatpush1.bf16.msra.mxu0 %v2075
    %2785 = vmatprep.subr.bf16.mxu0 %v2101
    %2786 = vmatpush1.bf16.msra.mxu0 %v2100
    %2787 = vmatprep.subr.bf16.mxu0 %v2126
    %2788 = vmatpush1.bf16.msra.mxu0 %v2125
    %2789 = vmatprep.subr.bf16.mxu0 %v2151
    %2790 = vmatpush1.bf16.msra.mxu0 %v2150
    %2791 = vmatprep.subr.bf16.mxu0 %v2176
    %2792 = vmatpush1.bf16.msra.mxu0 %v2175
    %2793 = vmatprep.subr.bf16.mxu0 %v2201
    %2794 = vmatpush1.bf16.msra.mxu0 %v2200
    %2795 = vmatprep.subr.bf16.mxu0 %v2226
    %2796 = vmatpush1.bf16.msra.mxu0 %v2225
    %2797 = vmatprep.subr.bf16.mxu0 %v2251
    %2798 = vmatpush1.bf16.msra.mxu0 %v2250
    %2799 = vmatprep.subr.bf16.mxu0 %v2276
    %2800 = vmatpush1.bf16.msra.mxu0 %v2275
    %2801 = vmatprep.subr.bf16.mxu0 %v2301
    %2802 = vmatpush1.bf16.msra.mxu0 %v2300
    %2803 = vmatprep.subr.bf16.mxu0 %v2326
    %2804 = vmatpush1.bf16.msra.mxu0 %v2325
    %2805 = vmatprep.subr.bf16.mxu0 %v2351
    %2806 = vmatpush1.bf16.msra.mxu0 %v2350
    %2807 = vmatprep.mubr.bf16.mxu0 %v209
    %2808 = vmatmul.mubr.bf16.gmra.mrb[0].mxu0 %v208
    %v2809 = vpop.f32.mrb[0].mxu0
    %v2810 = vadd.f32 %v637, %v2809
    %v2811 = vpop.f32.mrb[0].mxu0
    %v2812 = vadd.f32 %v641, %v2811
    %v2813 = vpop.f32.mrb[0].mxu0
    %v2814 = vpop.f32.mrb[0].mxu0
    %2815 = vdwg.mxu0
    %2816 = vmatprep.subr.bf16.mxu0 %v1978
    %2817 = vmatpush1.bf16.msra.mxu0 %v1977
    %2818 = vmatprep.subr.bf16.mxu0 %v2003
    %2819 = vmatpush1.bf16.msra.mxu0 %v2002
    %2820 = vmatprep.subr.bf16.mxu0 %v2028
    %2821 = vmatpush1.bf16.msra.mxu0 %v2027
    %2822 = vmatprep.subr.bf16.mxu0 %v2053
    %2823 = vmatpush1.bf16.msra.mxu0 %v2052
    %2824 = vmatprep.subr.bf16.mxu0 %v2078
    %2825 = vmatpush1.bf16.msra.mxu0 %v2077
    %2826 = vmatprep.subr.bf16.mxu0 %v2103
    %2827 = vmatpush1.bf16.msra.mxu0 %v2102
    %2828 = vmatprep.subr.bf16.mxu0 %v2128
    %2829 = vmatpush1.bf16.msra.mxu0 %v2127
    %2830 = vmatprep.subr.bf16.mxu0 %v2153
    %2831 = vmatpush1.bf16.msra.mxu0 %v2152
    %2832 = vmatprep.subr.bf16.mxu0 %v2178
    %2833 = vmatpush1.bf16.msra.mxu0 %v2177
    %2834 = vmatprep.subr.bf16.mxu0 %v2203
    %2835 = vmatpush1.bf16.msra.mxu0 %v2202
    %2836 = vmatprep.subr.bf16.mxu0 %v2228
    %2837 = vmatpush1.bf16.msra.mxu0 %v2227
    %2838 = vmatprep.subr.bf16.mxu0 %v2253
    %2839 = vmatpush1.bf16.msra.mxu0 %v2252
    %2840 = vmatprep.subr.bf16.mxu0 %v2278
    %2841 = vmatpush1.bf16.msra.mxu0 %v2277
    %2842 = vmatprep.subr.bf16.mxu0 %v2303
    %2843 = vmatpush1.bf16.msra.mxu0 %v2302
    %2844 = vmatprep.subr.bf16.mxu0 %v2328
    %2845 = vmatpush1.bf16.msra.mxu0 %v2327
    %2846 = vmatprep.subr.bf16.mxu0 %v2353
    %2847 = vmatpush1.bf16.msra.mxu0 %v2352
    %2848 = vmatprep.mubr.bf16.mxu0 %v209
    %2849 = vmatmul.mubr.bf16.gmra.mrb[0].mxu0 %v208
    %v2850 = vpop.f32.mrb[0].mxu0
    %v2851 = vadd.f32 %v645, %v2850
    %v2852 = vpop.f32.mrb[0].mxu0
    %v2853 = vadd.f32 %v649, %v2852
    %v2854 = vpop.f32.mrb[0].mxu0
    %v2855 = vpop.f32.mrb[0].mxu0
    %2856 = vdwg.mxu0
    %2857 = vmatprep.subr.bf16.mxu0 %v1980
    %2858 = vmatpush1.bf16.msra.mxu0 %v1979
    %2859 = vmatprep.subr.bf16.mxu0 %v2005
    %2860 = vmatpush1.bf16.msra.mxu0 %v2004
    %2861 = vmatprep.subr.bf16.mxu0 %v2030
    %2862 = vmatpush1.bf16.msra.mxu0 %v2029
    %2863 = vmatprep.subr.bf16.mxu0 %v2055
    %2864 = vmatpush1.bf16.msra.mxu0 %v2054
    %2865 = vmatprep.subr.bf16.mxu0 %v2080
    %2866 = vmatpush1.bf16.msra.mxu0 %v2079
    %2867 = vmatprep.subr.bf16.mxu0 %v2105
    %2868 = vmatpush1.bf16.msra.mxu0 %v2104
    %2869 = vmatprep.subr.bf16.mxu0 %v2130
    %2870 = vmatpush1.bf16.msra.mxu0 %v2129
    %2871 = vmatprep.subr.bf16.mxu0 %v2155
    %2872 = vmatpush1.bf16.msra.mxu0 %v2154
    %2873 = vmatprep.subr.bf16.mxu0 %v2180
    %2874 = vmatpush1.bf16.msra.mxu0 %v2179
    %2875 = vmatprep.subr.bf16.mxu0 %v2205
    %2876 = vmatpush1.bf16.msra.mxu0 %v2204
    %2877 = vmatprep.subr.bf16.mxu0 %v2230
    %2878 = vmatpush1.bf16.msra.mxu0 %v2229
    %2879 = vmatprep.subr.bf16.mxu0 %v2255
    %2880 = vmatpush1.bf16.msra.mxu0 %v2254
    %2881 = vmatprep.subr.bf16.mxu0 %v2280
    %2882 = vmatpush1.bf16.msra.mxu0 %v2279
    %2883 = vmatprep.subr.bf16.mxu0 %v2305
    %2884 = vmatpush1.bf16.msra.mxu0 %v2304
    %2885 = vmatprep.subr.bf16.mxu0 %v2330
    %2886 = vmatpush1.bf16.msra.mxu0 %v2329
    %2887 = vmatprep.subr.bf16.mxu0 %v2355
    %2888 = vmatpush1.bf16.msra.mxu0 %v2354
    %2889 = vmatprep.mubr.bf16.mxu0 %v209
    %2890 = vmatmul.mubr.bf16.gmra.mrb[0].mxu0 %v208
    %v2891 = vpop.f32.mrb[0].mxu0
    %v2892 = vadd.f32 %v653, %v2891
    %v2893 = vpop.f32.mrb[0].mxu0
    %v2894 = vadd.f32 %v657, %v2893
    %v2895 = vpop.f32.mrb[0].mxu0
    %v2896 = vpop.f32.mrb[0].mxu0
    %2897 = vdwg.mxu0
    %2898 = vmatprep.subr.bf16.mxu0 %v1982
    %2899 = vmatpush1.bf16.msra.mxu0 %v1981
    %2900 = vmatprep.subr.bf16.mxu0 %v2007
    %2901 = vmatpush1.bf16.msra.mxu0 %v2006
    %2902 = vmatprep.subr.bf16.mxu0 %v2032
    %2903 = vmatpush1.bf16.msra.mxu0 %v2031
    %2904 = vmatprep.subr.bf16.mxu0 %v2057
    %2905 = vmatpush1.bf16.msra.mxu0 %v2056
    %2906 = vmatprep.subr.bf16.mxu0 %v2082
    %2907 = vmatpush1.bf16.msra.mxu0 %v2081
    %2908 = vmatprep.subr.bf16.mxu0 %v2107
    %2909 = vmatpush1.bf16.msra.mxu0 %v2106
    %2910 = vmatprep.subr.bf16.mxu0 %v2132
    %2911 = vmatpush1.bf16.msra.mxu0 %v2131
    %2912 = vmatprep.subr.bf16.mxu0 %v2157
    %2913 = vmatpush1.bf16.msra.mxu0 %v2156
    %2914 = vmatprep.subr.bf16.mxu0 %v2182
    %2915 = vmatpush1.bf16.msra.mxu0 %v2181
    %2916 = vmatprep.subr.bf16.mxu0 %v2207
    %2917 = vmatpush1.bf16.msra.mxu0 %v2206
    %2918 = vmatprep.subr.bf16.mxu0 %v2232
    %2919 = vmatpush1.bf16.msra.mxu0 %v2231
    %2920 = vmatprep.subr.bf16.mxu0 %v2257
    %2921 = vmatpush1.bf16.msra.mxu0 %v2256
    %2922 = vmatprep.subr.bf16.mxu0 %v2282
    %2923 = vmatpush1.bf16.msra.mxu0 %v2281
    %2924 = vmatprep.subr.bf16.mxu0 %v2307
    %2925 = vmatpush1.bf16.msra.mxu0 %v2306
    %2926 = vmatprep.subr.bf16.mxu0 %v2332
    %2927 = vmatpush1.bf16.msra.mxu0 %v2331
    %2928 = vmatprep.subr.bf16.mxu0 %v2357
    %2929 = vmatpush1.bf16.msra.mxu0 %v2356
    %2930 = vmatprep.mubr.bf16.mxu0 %v209
    %2931 = vmatmul.mubr.bf16.gmra.mrb[0].mxu0 %v208
    %v2932 = vpop.f32.mrb[0].mxu0
    %v2933 = vadd.f32 %v661, %v2932
    %v2934 = vpop.f32.mrb[0].mxu0
    %v2935 = vadd.f32 %v665, %v2934
    %v2936 = vpop.f32.mrb[0].mxu0
    %v2937 = vpop.f32.mrb[0].mxu0
    %2938 = vdwg.mxu0
    %2939 = vmatprep.subr.bf16.mxu0 %v1984
    %2940 = vmatpush1.bf16.msra.mxu0 %v1983
    %2941 = vmatprep.subr.bf16.mxu0 %v2009
    %2942 = vmatpush1.bf16.msra.mxu0 %v2008
    %2943 = vmatprep.subr.bf16.mxu0 %v2034
    %2944 = vmatpush1.bf16.msra.mxu0 %v2033
    %2945 = vmatprep.subr.bf16.mxu0 %v2059
    %2946 = vmatpush1.bf16.msra.mxu0 %v2058
    %2947 = vmatprep.subr.bf16.mxu0 %v2084
    %2948 = vmatpush1.bf16.msra.mxu0 %v2083
    %2949 = vmatprep.subr.bf16.mxu0 %v2109
    %2950 = vmatpush1.bf16.msra.mxu0 %v2108
    %2951 = vmatprep.subr.bf16.mxu0 %v2134
    %2952 = vmatpush1.bf16.msra.mxu0 %v2133
    %2953 = vmatprep.subr.bf16.mxu0 %v2159
    %2954 = vmatpush1.bf16.msra.mxu0 %v2158
    %2955 = vmatprep.subr.bf16.mxu0 %v2184
    %2956 = vmatpush1.bf16.msra.mxu0 %v2183
    %2957 = vmatprep.subr.bf16.mxu0 %v2209
    %2958 = vmatpush1.bf16.msra.mxu0 %v2208
    %2959 = vmatprep.subr.bf16.mxu0 %v2234
    %2960 = vmatpush1.bf16.msra.mxu0 %v2233
    %2961 = vmatprep.subr.bf16.mxu0 %v2259
    %2962 = vmatpush1.bf16.msra.mxu0 %v2258
    %2963 = vmatprep.subr.bf16.mxu0 %v2284
    %2964 = vmatpush1.bf16.msra.mxu0 %v2283
    %2965 = vmatprep.subr.bf16.mxu0 %v2309
    %2966 = vmatpush1.bf16.msra.mxu0 %v2308
    %2967 = vmatprep.subr.bf16.mxu0 %v2334
    %2968 = vmatpush1.bf16.msra.mxu0 %v2333
    %2969 = vmatprep.subr.bf16.mxu0 %v2359
    %2970 = vmatpush1.bf16.msra.mxu0 %v2358
    %2971 = vmatprep.mubr.bf16.mxu0 %v209
    %2972 = vmatmul.mubr.bf16.gmra.mrb[0].mxu0 %v208
    %v2973 = vpop.f32.mrb[0].mxu0
    %v2974 = vadd.f32 %v669, %v2973
    %v2975 = vpop.f32.mrb[0].mxu0
    %v2976 = vadd.f32 %v673, %v2975
    %v2977 = vpop.f32.mrb[0].mxu0
    %v2978 = vpop.f32.mrb[0].mxu0
    %2979 = vdwg.mxu0
    %2980 = vmatprep.subr.bf16.mxu0 %v1986
    %2981 = vmatpush1.bf16.msra.mxu0 %v1985
    %2982 = vmatprep.subr.bf16.mxu0 %v2011
    %2983 = vmatpush1.bf16.msra.mxu0 %v2010
    %2984 = vmatprep.subr.bf16.mxu0 %v2036
    %2985 = vmatpush1.bf16.msra.mxu0 %v2035
    %2986 = vmatprep.subr.bf16.mxu0 %v2061
    %2987 = vmatpush1.bf16.msra.mxu0 %v2060
    %2988 = vmatprep.subr.bf16.mxu0 %v2086
    %2989 = vmatpush1.bf16.msra.mxu0 %v2085
    %2990 = vmatprep.subr.bf16.mxu0 %v2111
    %2991 = vmatpush1.bf16.msra.mxu0 %v2110
    %2992 = vmatprep.subr.bf16.mxu0 %v2136
    %2993 = vmatpush1.bf16.msra.mxu0 %v2135
    %2994 = vmatprep.subr.bf16.mxu0 %v2161
    %2995 = vmatpush1.bf16.msra.mxu0 %v2160
    %2996 = vmatprep.subr.bf16.mxu0 %v2186
    %2997 = vmatpush1.bf16.msra.mxu0 %v2185
    %2998 = vmatprep.subr.bf16.mxu0 %v2211
    %2999 = vmatpush1.bf16.msra.mxu0 %v2210
    %3000 = vmatprep.subr.bf16.mxu0 %v2236
    %3001 = vmatpush1.bf16.msra.mxu0 %v2235
    %3002 = vmatprep.subr.bf16.mxu0 %v2261
    %3003 = vmatpush1.bf16.msra.mxu0 %v2260
    %3004 = vmatprep.subr.bf16.mxu0 %v2286
    %3005 = vmatpush1.bf16.msra.mxu0 %v2285
    %3006 = vmatprep.subr.bf16.mxu0 %v2311
    %3007 = vmatpush1.bf16.msra.mxu0 %v2310
    %3008 = vmatprep.subr.bf16.mxu0 %v2336
    %3009 = vmatpush1.bf16.msra.mxu0 %v2335
    %3010 = vmatprep.subr.bf16.mxu0 %v2361
    %3011 = vmatpush1.bf16.msra.mxu0 %v2360
    %3012 = vmatprep.mubr.bf16.mxu0 %v209
    %3013 = vmatmul.mubr.bf16.gmra.mrb[0].mxu0 %v208
    %v3014 = vpop.f32.mrb[0].mxu0
    %v3015 = vadd.f32 %v677, %v3014
    %v3016 = vpop.f32.mrb[0].mxu0
    %v3017 = vadd.f32 %v681, %v3016
    %v3018 = vpop.f32.mrb[0].mxu0
    %v3019 = vpop.f32.mrb[0].mxu0
    %3020 = vdwg.mxu0
    %3021 = vmatprep.subr.bf16.mxu0 %v1988
    %3022 = vmatpush1.bf16.msra.mxu0 %v1987
    %3023 = vmatprep.subr.bf16.mxu0 %v2013
    %3024 = vmatpush1.bf16.msra.mxu0 %v2012
    %3025 = vmatprep.subr.bf16.mxu0 %v2038
    %3026 = vmatpush1.bf16.msra.mxu0 %v2037
    %3027 = vmatprep.subr.bf16.mxu0 %v2063
    %3028 = vmatpush1.bf16.msra.mxu0 %v2062
    %3029 = vmatprep.subr.bf16.mxu0 %v2088
    %3030 = vmatpush1.bf16.msra.mxu0 %v2087
    %3031 = vmatprep.subr.bf16.mxu0 %v2113
    %3032 = vmatpush1.bf16.msra.mxu0 %v2112
    %3033 = vmatprep.subr.bf16.mxu0 %v2138
    %3034 = vmatpush1.bf16.msra.mxu0 %v2137
    %3035 = vmatprep.subr.bf16.mxu0 %v2163
    %3036 = vmatpush1.bf16.msra.mxu0 %v2162
    %3037 = vmatprep.subr.bf16.mxu0 %v2188
    %3038 = vmatpush1.bf16.msra.mxu0 %v2187
    %3039 = vmatprep.subr.bf16.mxu0 %v2213
    %3040 = vmatpush1.bf16.msra.mxu0 %v2212
    %3041 = vmatprep.subr.bf16.mxu0 %v2238
    %3042 = vmatpush1.bf16.msra.mxu0 %v2237
    %3043 = vmatprep.subr.bf16.mxu0 %v2263
    %3044 = vmatpush1.bf16.msra.mxu0 %v2262
    %3045 = vmatprep.subr.bf16.mxu0 %v2288
    %3046 = vmatpush1.bf16.msra.mxu0 %v2287
    %3047 = vmatprep.subr.bf16.mxu0 %v2313
    %3048 = vmatpush1.bf16.msra.mxu0 %v2312
    %3049 = vmatprep.subr.bf16.mxu0 %v2338
    %3050 = vmatpush1.bf16.msra.mxu0 %v2337
    %3051 = vmatprep.subr.bf16.mxu0 %v2363
    %3052 = vmatpush1.bf16.msra.mxu0 %v2362
    %3053 = vmatprep.mubr.bf16.mxu0 %v209
    %3054 = vmatmul.mubr.bf16.gmra.mrb[0].mxu0 %v208
    %v3055 = vpop.f32.mrb[0].mxu0
    %v3056 = vadd.f32 %v685, %v3055
    %v3057 = vpop.f32.mrb[0].mxu0
    %v3058 = vadd.f32 %v689, %v3057
    %v3059 = vpop.f32.mrb[0].mxu0
    %v3060 = vpop.f32.mrb[0].mxu0
    %3061 = vdwg.mxu0
    %3062 = vmatprep.subr.bf16.mxu0 %v1990
    %3063 = vmatpush1.bf16.msra.mxu0 %v1989
    %3064 = vmatprep.subr.bf16.mxu0 %v2015
    %3065 = vmatpush1.bf16.msra.mxu0 %v2014
    %3066 = vmatprep.subr.bf16.mxu0 %v2040
    %3067 = vmatpush1.bf16.msra.mxu0 %v2039
    %3068 = vmatprep.subr.bf16.mxu0 %v2065
    %3069 = vmatpush1.bf16.msra.mxu0 %v2064
    %3070 = vmatprep.subr.bf16.mxu0 %v2090
    %3071 = vmatpush1.bf16.msra.mxu0 %v2089
    %3072 = vmatprep.subr.bf16.mxu0 %v2115
    %3073 = vmatpush1.bf16.msra.mxu0 %v2114
    %3074 = vmatprep.subr.bf16.mxu0 %v2140
    %3075 = vmatpush1.bf16.msra.mxu0 %v2139
    %3076 = vmatprep.subr.bf16.mxu0 %v2165
    %3077 = vmatpush1.bf16.msra.mxu0 %v2164
    %3078 = vmatprep.subr.bf16.mxu0 %v2190
    %3079 = vmatpush1.bf16.msra.mxu0 %v2189
    %3080 = vmatprep.subr.bf16.mxu0 %v2215
    %3081 = vmatpush1.bf16.msra.mxu0 %v2214
    %3082 = vmatprep.subr.bf16.mxu0 %v2240
    %3083 = vmatpush1.bf16.msra.mxu0 %v2239
    %3084 = vmatprep.subr.bf16.mxu0 %v2265
    %3085 = vmatpush1.bf16.msra.mxu0 %v2264
    %3086 = vmatprep.subr.bf16.mxu0 %v2290
    %3087 = vmatpush1.bf16.msra.mxu0 %v2289
    %3088 = vmatprep.subr.bf16.mxu0 %v2315
    %3089 = vmatpush1.bf16.msra.mxu0 %v2314
    %3090 = vmatprep.subr.bf16.mxu0 %v2340
    %3091 = vmatpush1.bf16.msra.mxu0 %v2339
    %3092 = vmatprep.subr.bf16.mxu0 %v2365
    %3093 = vmatpush1.bf16.msra.mxu0 %v2364
    %3094 = vmatprep.mubr.bf16.mxu0 %v209
    %3095 = vmatmul.mubr.bf16.gmra.mrb[0].mxu0 %v208
    %v3096 = vpop.f32.mrb[0].mxu0
    %v3097 = vadd.f32 %v693, %v3096
    %v3098 = vpop.f32.mrb[0].mxu0
    %v3099 = vadd.f32 %v697, %v3098
    %v3100 = vpop.f32.mrb[0].mxu0
    %v3101 = vpop.f32.mrb[0].mxu0
    %3102 = vdwg.mxu0
    %3103 = vmatprep.subr.bf16.mxu0 %v1992
    %3104 = vmatpush1.bf16.msra.mxu0 %v1991
    %3105 = vmatprep.subr.bf16.mxu0 %v2017
    %3106 = vmatpush1.bf16.msra.mxu0 %v2016
    %3107 = vmatprep.subr.bf16.mxu0 %v2042
    %3108 = vmatpush1.bf16.msra.mxu0 %v2041
    %3109 = vmatprep.subr.bf16.mxu0 %v2067
    %3110 = vmatpush1.bf16.msra.mxu0 %v2066
    %3111 = vmatprep.subr.bf16.mxu0 %v2092
    %3112 = vmatpush1.bf16.msra.mxu0 %v2091
    %3113 = vmatprep.subr.bf16.mxu0 %v2117
    %3114 = vmatpush1.bf16.msra.mxu0 %v2116
    %3115 = vmatprep.subr.bf16.mxu0 %v2142
    %3116 = vmatpush1.bf16.msra.mxu0 %v2141
    %3117 = vmatprep.subr.bf16.mxu0 %v2167
    %3118 = vmatpush1.bf16.msra.mxu0 %v2166
    %3119 = vmatprep.subr.bf16.mxu0 %v2192
    %3120 = vmatpush1.bf16.msra.mxu0 %v2191
    %3121 = vmatprep.subr.bf16.mxu0 %v2217
    %3122 = vmatpush1.bf16.msra.mxu0 %v2216
    %3123 = vmatprep.subr.bf16.mxu0 %v2242
    %3124 = vmatpush1.bf16.msra.mxu0 %v2241
    %3125 = vmatprep.subr.bf16.mxu0 %v2267
    %3126 = vmatpush1.bf16.msra.mxu0 %v2266
    %3127 = vmatprep.subr.bf16.mxu0 %v2292
    %3128 = vmatpush1.bf16.msra.mxu0 %v2291
    %3129 = vmatprep.subr.bf16.mxu0 %v2317
    %3130 = vmatpush1.bf16.msra.mxu0 %v2316
    %3131 = vmatprep.subr.bf16.mxu0 %v2342
    %3132 = vmatpush1.bf16.msra.mxu0 %v2341
    %3133 = vmatprep.subr.bf16.mxu0 %v2367
    %3134 = vmatpush1.bf16.msra.mxu0 %v2366
    %3135 = vmatprep.mubr.bf16.mxu0 %v209
    %3136 = vmatmul.mubr.bf16.gmra.mrb[0].mxu0 %v208
    %v3137 = vpop.f32.mrb[0].mxu0
    %v3138 = vadd.f32 %v701, %v3137
    %v3139 = vpop.f32.mrb[0].mxu0
    %v3140 = vadd.f32 %v705, %v3139
    %v3141 = vpop.f32.mrb[0].mxu0
    %v3142 = vpop.f32.mrb[0].mxu0
    %3143 = vdwg.mxu0
    %3144 = vmatprep.subr.bf16.mxu0 %v1994
    %3145 = vmatpush1.bf16.msra.mxu0 %v1993
    %3146 = vmatprep.subr.bf16.mxu0 %v2019
    %3147 = vmatpush1.bf16.msra.mxu0 %v2018
    %3148 = vmatprep.subr.bf16.mxu0 %v2044
    %3149 = vmatpush1.bf16.msra.mxu0 %v2043
    %3150 = vmatprep.subr.bf16.mxu0 %v2069
    %3151 = vmatpush1.bf16.msra.mxu0 %v2068
    %3152 = vmatprep.subr.bf16.mxu0 %v2094
    %3153 = vmatpush1.bf16.msra.mxu0 %v2093
    %3154 = vmatprep.subr.bf16.mxu0 %v2119
    %3155 = vmatpush1.bf16.msra.mxu0 %v2118
    %3156 = vmatprep.subr.bf16.mxu0 %v2144
    %3157 = vmatpush1.bf16.msra.mxu0 %v2143
    %3158 = vmatprep.subr.bf16.mxu0 %v2169
    %3159 = vmatpush1.bf16.msra.mxu0 %v2168
    %3160 = vmatprep.subr.bf16.mxu0 %v2194
    %3161 = vmatpush1.bf16.msra.mxu0 %v2193
    %3162 = vmatprep.subr.bf16.mxu0 %v2219
    %3163 = vmatpush1.bf16.msra.mxu0 %v2218
    %3164 = vmatprep.subr.bf16.mxu0 %v2244
    %3165 = vmatpush1.bf16.msra.mxu0 %v2243
    %3166 = vmatprep.subr.bf16.mxu0 %v2269
    %3167 = vmatpush1.bf16.msra.mxu0 %v2268
    %3168 = vmatprep.subr.bf16.mxu0 %v2294
    %3169 = vmatpush1.bf16.msra.mxu0 %v2293
    %3170 = vmatprep.subr.bf16.mxu0 %v2319
    %3171 = vmatpush1.bf16.msra.mxu0 %v2318
    %3172 = vmatprep.subr.bf16.mxu0 %v2344
    %3173 = vmatpush1.bf16.msra.mxu0 %v2343
    %3174 = vmatprep.subr.bf16.mxu0 %v2369
    %3175 = vmatpush1.bf16.msra.mxu0 %v2368
    %3176 = vmatprep.mubr.bf16.mxu0 %v209
    %3177 = vmatmul.mubr.bf16.gmra.mrb[0].mxu0 %v208
    %v3178 = vpop.f32.mrb[0].mxu0
    %v3179 = vadd.f32 %v709, %v3178
    %v3180 = vpop.f32.mrb[0].mxu0
    %v3181 = vadd.f32 %v713, %v3180
    %v3182 = vpop.f32.mrb[0].mxu0
    %v3183 = vpop.f32.mrb[0].mxu0
    %3184 = vdwg.mxu0
    %3185 = vmatprep.subr.bf16.mxu0 %v1996
    %3186 = vmatpush1.bf16.msra.mxu0 %v1995
    %3187 = vmatprep.subr.bf16.mxu0 %v2021
    %3188 = vmatpush1.bf16.msra.mxu0 %v2020
    %3189 = vmatprep.subr.bf16.mxu0 %v2046
    %3190 = vmatpush1.bf16.msra.mxu0 %v2045
    %3191 = vmatprep.subr.bf16.mxu0 %v2071
    %3192 = vmatpush1.bf16.msra.mxu0 %v2070
    %3193 = vmatprep.subr.bf16.mxu0 %v2096
    %3194 = vmatpush1.bf16.msra.mxu0 %v2095
    %3195 = vmatprep.subr.bf16.mxu0 %v2121
    %3196 = vmatpush1.bf16.msra.mxu0 %v2120
    %3197 = vmatprep.subr.bf16.mxu0 %v2146
    %3198 = vmatpush1.bf16.msra.mxu0 %v2145
    %3199 = vmatprep.subr.bf16.mxu0 %v2171
    %3200 = vmatpush1.bf16.msra.mxu0 %v2170
    %3201 = vmatprep.subr.bf16.mxu0 %v2196
    %3202 = vmatpush1.bf16.msra.mxu0 %v2195
    %3203 = vmatprep.subr.bf16.mxu0 %v2221
    %3204 = vmatpush1.bf16.msra.mxu0 %v2220
    %3205 = vmatprep.subr.bf16.mxu0 %v2246
    %3206 = vmatpush1.bf16.msra.mxu0 %v2245
    %3207 = vmatprep.subr.bf16.mxu0 %v2271
    %3208 = vmatpush1.bf16.msra.mxu0 %v2270
    %3209 = vmatprep.subr.bf16.mxu0 %v2296
    %3210 = vmatpush1.bf16.msra.mxu0 %v2295
    %3211 = vmatprep.subr.bf16.mxu0 %v2321
    %3212 = vmatpush1.bf16.msra.mxu0 %v2320
    %3213 = vmatprep.subr.bf16.mxu0 %v2346
    %3214 = vmatpush1.bf16.msra.mxu0 %v2345
    %3215 = vmatprep.subr.bf16.mxu0 %v2371
    %3216 = vmatpush1.bf16.msra.mxu0 %v2370
    %3217 = vmatprep.mubr.bf16.mxu0 %v209
    %3218 = vmatmul.mubr.bf16.gmra.mrb[0].mxu0 %v208
    %v3219 = vpop.f32.mrb[0].mxu0
    %v3220 = vadd.f32 %v717, %v3219
    %v3221 = vpop.f32.mrb[0].mxu0
    %v3222 = vadd.f32 %v721, %v3221
    %v3223 = vpop.f32.mrb[0].mxu0
    %v3224 = vpop.f32.mrb[0].mxu0
    %3225 = vdwg.mxu0
    %3226 = vmatprep.subr.bf16.mxu0 %v1998
    %3227 = vmatpush1.bf16.msra.mxu0 %v1997
    %3228 = vmatprep.subr.bf16.mxu0 %v2023
    %3229 = vmatpush1.bf16.msra.mxu0 %v2022
    %3230 = vmatprep.subr.bf16.mxu0 %v2048
    %3231 = vmatpush1.bf16.msra.mxu0 %v2047
    %3232 = vmatprep.subr.bf16.mxu0 %v2073
    %3233 = vmatpush1.bf16.msra.mxu0 %v2072
    %3234 = vmatprep.subr.bf16.mxu0 %v2098
    %3235 = vmatpush1.bf16.msra.mxu0 %v2097
    %3236 = vmatprep.subr.bf16.mxu0 %v2123
    %3237 = vmatpush1.bf16.msra.mxu0 %v2122
    %3238 = vmatprep.subr.bf16.mxu0 %v2148
    %3239 = vmatpush1.bf16.msra.mxu0 %v2147
    %3240 = vmatprep.subr.bf16.mxu0 %v2173
    %3241 = vmatpush1.bf16.msra.mxu0 %v2172
    %3242 = vmatprep.subr.bf16.mxu0 %v2198
    %3243 = vmatpush1.bf16.msra.mxu0 %v2197
    %3244 = vmatprep.subr.bf16.mxu0 %v2223
    %3245 = vmatpush1.bf16.msra.mxu0 %v2222
    %3246 = vmatprep.subr.bf16.mxu0 %v2248
    %3247 = vmatpush1.bf16.msra.mxu0 %v2247
    %3248 = vmatprep.subr.bf16.mxu0 %v2273
    %3249 = vmatpush1.bf16.msra.mxu0 %v2272
    %3250 = vmatprep.subr.bf16.mxu0 %v2298
    %3251 = vmatpush1.bf16.msra.mxu0 %v2297
    %3252 = vmatprep.subr.bf16.mxu0 %v2323
    %3253 = vmatpush1.bf16.msra.mxu0 %v2322
    %3254 = vmatprep.subr.bf16.mxu0 %v2348
    %3255 = vmatpush1.bf16.msra.mxu0 %v2347
    %3256 = vmatprep.subr.bf16.mxu0 %v2373
    %3257 = vmatpush1.bf16.msra.mxu0 %v2372
    %3258 = vmatprep.mubr.bf16.mxu0 %v209
    %3259 = vmatmul.mubr.bf16.gmra.mrb[0].mxu0 %v208
    %v3260 = vpop.f32.mrb[0].mxu0
    %v3261 = vadd.f32 %v725, %v3260
    %v3262 = vpop.f32.mrb[0].mxu0
    %v3263 = vadd.f32 %v729, %v3262
    %v3264 = vpop.f32.mrb[0].mxu0
    %v3265 = vpop.f32.mrb[0].mxu0
    %3266 = vdwg.mxu0
    %3267 = vmatprep.subr.bf16.mxu0 0
    %3268 = vmatpush1.bf16.msra.mxu0 %v1999
    %3269 = vmatprep.subr.bf16.mxu0 0
    %3270 = vmatpush1.bf16.msra.mxu0 %v2024
    %3271 = vmatprep.subr.bf16.mxu0 0
    %3272 = vmatpush1.bf16.msra.mxu0 %v2049
    %3273 = vmatprep.subr.bf16.mxu0 0
    %3274 = vmatpush1.bf16.msra.mxu0 %v2074
    %3275 = vmatprep.subr.bf16.mxu0 0
    %3276 = vmatpush1.bf16.msra.mxu0 %v2099
    %3277 = vmatprep.subr.bf16.mxu0 0
    %3278 = vmatpush1.bf16.msra.mxu0 %v2124
    %3279 = vmatprep.subr.bf16.mxu0 0
    %3280 = vmatpush1.bf16.msra.mxu0 %v2149
    %3281 = vmatprep.subr.bf16.mxu0 0
    %3282 = vmatpush1.bf16.msra.mxu0 %v2174
    %3283 = vmatprep.subr.bf16.mxu0 0
    %3284 = vmatpush1.bf16.msra.mxu0 %v2199
    %3285 = vmatprep.subr.bf16.mxu0 0
    %3286 = vmatpush1.bf16.msra.mxu0 %v2224
    %3287 = vmatprep.subr.bf16.mxu0 0
    %3288 = vmatpush1.bf16.msra.mxu0 %v2249
    %3289 = vmatprep.subr.bf16.mxu0 0
    %3290 = vmatpush1.bf16.msra.mxu0 %v2274
    %3291 = vmatprep.subr.bf16.mxu0 0
    %3292 = vmatpush1.bf16.msra.mxu0 %v2299
    %3293 = vmatprep.subr.bf16.mxu0 0
    %3294 = vmatpush1.bf16.msra.mxu0 %v2324
    %3295 = vmatprep.subr.bf16.mxu0 0
    %3296 = vmatpush1.bf16.msra.mxu0 %v2349
    %3297 = vmatprep.subr.bf16.mxu0 0
    %3298 = vmatpush1.bf16.msra.mxu0 %v2374
    %3299 = vmatprep.mubr.bf16.mxu0 %v209
    %3300 = vmatmul.mubr.bf16.gmra.mrb[0].mxu0 %v208
    %v3301 = vpop.f32.mrb[0].mxu0
    %v3302 = vadd.f32 %v733, %v3301
    %v3303 = vpop.f32.mrb[0].mxu0
    %v3304 = vpop.f32.mrb[0].mxu0
    %v3305 = vpop.f32.mrb[0].mxu0
    %3306 = vdwg.mxu0
    %v3307 = vmax.f32 %v2810, 0.0
    %v3308 = vmax.f32 %v2812, 0.0
    %v3309 = vmax.f32 %v2851, 0.0
    %v3310 = vmax.f32 %v2853, 0.0
    %v3311 = vmax.f32 %v2892, 0.0
    %v3312 = vmax.f32 %v2894, 0.0
    %v3313 = vmax.f32 %v2933, 0.0
    %v3314 = vmax.f32 %v2935, 0.0
    %v3315 = vmax.f32 %v2974, 0.0
    %v3316 = vmax.f32 %v2976, 0.0
    %v3317 = vmax.f32 %v3015, 0.0
    %v3318 = vmax.f32 %v3017, 0.0
    %v3319 = vmax.f32 %v3056, 0.0
    %v3320 = vmax.f32 %v3058, 0.0
    %v3321 = vmax.f32 %v3097, 0.0
    %v3322 = vmax.f32 %v3099, 0.0
    %v3323 = vmax.f32 %v3138, 0.0
    %v3324 = vmax.f32 %v3140, 0.0
    %v3325 = vmax.f32 %v3179, 0.0
    %v3326 = vmax.f32 %v3181, 0.0
    %v3327 = vmax.f32 %v3220, 0.0
    %v3328 = vmax.f32 %v3222, 0.0
    %v3329 = vmax.f32 %v3261, 0.0
    %v3330 = vmax.f32 %v3263, 0.0
    %v3331 = vmax.f32 %v3302, 0.0
    %v3332 = vpack.c.bf16 %v3307, %v3307
    %v3333 = vpack.c.bf16 %v3308, %v3308
    %v3334 = vpack.c.bf16 %v3309, %v3309
    %v3335 = vpack.c.bf16 %v3310, %v3310
    %v3336 = vpack.c.bf16 %v3311, %v3311
    %v3337 = vpack.c.bf16 %v3312, %v3312
    %v3338 = vpack.c.bf16 %v3313, %v3313
    %v3339 = vpack.c.bf16 %v3314, %v3314
    %v3340 = vpack.c.bf16 %v3315, %v3315
    %v3341 = vpack.c.bf16 %v3316, %v3316
    %v3342 = vpack.c.bf16 %v3317, %v3317
    %v3343 = vpack.c.bf16 %v3318, %v3318
    %v3344 = vpack.c.bf16 %v3319, %v3319
    %v3345 = vpack.c.bf16 %v3320, %v3320
    %v3346 = vpack.c.bf16 %v3321, %v3321
    %v3347 = vpack.c.bf16 %v3322, %v3322
    %v3348 = vpack.c.bf16 %v3323, %v3323
    %v3349 = vpack.c.bf16 %v3324, %v3324
    %v3350 = vpack.c.bf16 %v3325, %v3325
    %v3351 = vpack.c.bf16 %v3326, %v3326
    %v3352 = vpack.c.bf16 %v3327, %v3327
    %v3353 = vpack.c.bf16 %v3328, %v3328
    %v3354 = vpack.c.bf16 %v3329, %v3329
    %v3355 = vpack.c.bf16 %v3330, %v3330
    %v3356 = vpack.c.bf16 %v3331, %v3331
    %v3382 = vcombine.low %v3332, %v3333
    %v3383 = vcombine.low %v3334, %v3335
    %v3384 = vcombine.low %v3336, %v3337
    %v3385 = vcombine.low %v3338, %v3339
    %v3387 = vunpack.c.l.s4 1966171168
    %v3388 = vunpack.c.0.s8 %v3387
    %v3389 = vlaneseq
    %v3390 = vshrl.u32 %v3389, 7
    %v3391 = vsub.s32 %v3388, %v3390
    %v3392 = vrot.slane %v3382, %v3391
    %v3394 = vunpack.c.l.s4 1966171168
    %v3395 = vunpack.c.0.s8 %v3394
    %v3396 = vlaneseq
    %v3397 = vshrl.u32 %v3396, 7
    %v3398 = vsub.s32 %v3395, %v3397
    %v3399 = vrot.slane %v3383, %v3398
    %v3401 = vunpack.c.l.s4 1966171168
    %v3402 = vunpack.c.0.s8 %v3401
    %v3403 = vlaneseq
    %v3404 = vshrl.u32 %v3403, 7
    %v3405 = vsub.s32 %v3402, %v3404
    %v3406 = vrot.slane %v3384, %v3405
    %v3408 = vunpack.c.l.s4 1966171168
    %v3409 = vunpack.c.0.s8 %v3408
    %v3410 = vlaneseq
    %v3411 = vshrl.u32 %v3410, 7
    %v3412 = vsub.s32 %v3409, %v3411
    %v3413 = vrot.slane %v3385, %v3412
    %v3414 = vcombine.low %v3392, %v3399
    %v3415 = vcombine.low %v3406, %v3413
    %v3417 = vunpack.c.l.s4 1966171168
    %v3418 = vunpack.c.0.s8 %v3417
    %v3419 = vlaneseq
    %v3420 = vshrl.u32 %v3419, 7
    %v3421 = vsub.s32 %v3418, %v3420
    %v3422 = vrot.slane %v3414, %v3421
    %v3424 = vunpack.c.l.s4 1966171168
    %v3425 = vunpack.c.0.s8 %v3424
    %v3426 = vlaneseq
    %v3427 = vshrl.u32 %v3426, 7
    %v3428 = vsub.s32 %v3425, %v3427
    %v3429 = vrot.slane %v3415, %v3428
    %v3430 = vcombine.low %v3422, %v3429
    %v3431 = vcombine.low %v3340, %v3341
    %v3432 = vcombine.low %v3342, %v3343
    %v3433 = vcombine.low %v3344, %v3345
    %v3434 = vcombine.low %v3346, %v3347
    %v3436 = vunpack.c.l.s4 1966171168
    %v3437 = vunpack.c.0.s8 %v3436
    %v3438 = vlaneseq
    %v3439 = vshrl.u32 %v3438, 7
    %v3440 = vsub.s32 %v3437, %v3439
    %v3441 = vrot.slane %v3431, %v3440
    %v3443 = vunpack.c.l.s4 1966171168
    %v3444 = vunpack.c.0.s8 %v3443
    %v3445 = vlaneseq
    %v3446 = vshrl.u32 %v3445, 7
    %v3447 = vsub.s32 %v3444, %v3446
    %v3448 = vrot.slane %v3432, %v3447
    %v3450 = vunpack.c.l.s4 1966171168
    %v3451 = vunpack.c.0.s8 %v3450
    %v3452 = vlaneseq
    %v3453 = vshrl.u32 %v3452, 7
    %v3454 = vsub.s32 %v3451, %v3453
    %v3455 = vrot.slane %v3433, %v3454
    %v3457 = vunpack.c.l.s4 1966171168
    %v3458 = vunpack.c.0.s8 %v3457
    %v3459 = vlaneseq
    %v3460 = vshrl.u32 %v3459, 7
    %v3461 = vsub.s32 %v3458, %v3460
    %v3462 = vrot.slane %v3434, %v3461
    %v3463 = vcombine.low %v3441, %v3448
    %v3464 = vcombine.low %v3455, %v3462
    %v3466 = vunpack.c.l.s4 1966171168
    %v3467 = vunpack.c.0.s8 %v3466
    %v3468 = vlaneseq
    %v3469 = vshrl.u32 %v3468, 7
    %v3470 = vsub.s32 %v3467, %v3469
    %v3471 = vrot.slane %v3463, %v3470
    %v3473 = vunpack.c.l.s4 1966171168
    %v3474 = vunpack.c.0.s8 %v3473
    %v3475 = vlaneseq
    %v3476 = vshrl.u32 %v3475, 7
    %v3477 = vsub.s32 %v3474, %v3476
    %v3478 = vrot.slane %v3464, %v3477
    %v3479 = vcombine.low %v3471, %v3478
    %v3480 = vcombine.low %v3348, %v3349
    %v3481 = vcombine.low %v3350, %v3351
    %v3482 = vcombine.low %v3352, %v3353
    %v3483 = vcombine.low %v3354, %v3355
    %v3485 = vunpack.c.l.s4 1966171168
    %v3486 = vunpack.c.0.s8 %v3485
    %v3487 = vlaneseq
    %v3488 = vshrl.u32 %v3487, 7
    %v3489 = vsub.s32 %v3486, %v3488
    %v3490 = vrot.slane %v3480, %v3489
    %v3492 = vunpack.c.l.s4 1966171168
    %v3493 = vunpack.c.0.s8 %v3492
    %v3494 = vlaneseq
    %v3495 = vshrl.u32 %v3494, 7
    %v3496 = vsub.s32 %v3493, %v3495
    %v3497 = vrot.slane %v3481, %v3496
    %v3499 = vunpack.c.l.s4 1966171168
    %v3500 = vunpack.c.0.s8 %v3499
    %v3501 = vlaneseq
    %v3502 = vshrl.u32 %v3501, 7
    %v3503 = vsub.s32 %v3500, %v3502
    %v3504 = vrot.slane %v3482, %v3503
    %v3506 = vunpack.c.l.s4 1966171168
    %v3507 = vunpack.c.0.s8 %v3506
    %v3508 = vlaneseq
    %v3509 = vshrl.u32 %v3508, 7
    %v3510 = vsub.s32 %v3507, %v3509
    %v3511 = vrot.slane %v3483, %v3510
    %v3512 = vcombine.low %v3490, %v3497
    %v3513 = vcombine.low %v3504, %v3511
    %v3515 = vunpack.c.l.s4 1966171168
    %v3516 = vunpack.c.0.s8 %v3515
    %v3517 = vlaneseq
    %v3518 = vshrl.u32 %v3517, 7
    %v3519 = vsub.s32 %v3516, %v3518
    %v3520 = vrot.slane %v3512, %v3519
    %v3522 = vunpack.c.l.s4 1966171168
    %v3523 = vunpack.c.0.s8 %v3522
    %v3524 = vlaneseq
    %v3525 = vshrl.u32 %v3524, 7
    %v3526 = vsub.s32 %v3523, %v3525
    %v3527 = vrot.slane %v3513, %v3526
    %v3528 = vcombine.low %v3520, %v3527
    %v3530 = vunpack.c.l.s4 1966171168
    %v3531 = vunpack.c.0.s8 %v3530
    %v3532 = vlaneseq
    %v3533 = vshrl.u32 %v3532, 7
    %v3534 = vsub.s32 %v3531, %v3533
    %v3535 = vrot.slane %v3356, %v3534
    %v3537 = vunpack.c.l.s4 1966171168
    %v3538 = vunpack.c.0.s8 %v3537
    %v3539 = vlaneseq
    %v3540 = vshrl.u32 %v3539, 7
    %v3541 = vsub.s32 %v3538, %v3540
    %v3542 = vrot.slane %v3535, %v3541
    %3547 = vst [vmem:[#allocation2] sm:$0xff] %v3430
    %3548 = vst [vmem:[#allocation2 + $0x8] sm:$0xff] %v3479
    %3549 = vst [vmem:[#allocation2 + $0x10] sm:$0xff] %v3528
    %3550 = vst [vmem:[#allocation2 + $0x18] sm:$0x1] %v3542
    %v3551 = vld [vmem:[#allocation2] sm:$0xff]
    %v3552 = vld [vmem:[#allocation2 + $0x8] sm:$0xff]
    %v3553 = vld [vmem:[#allocation2 + $0x10] sm:$0xff]
    %v3554 = vld [vmem:[#allocation2 + $0x18] sm:$0x1]
    %v3555 = vld [vmem:[#allocation11] sm:$0xff]
    %v3556 = vld [vmem:[#allocation11 + $0x8] sm:$0xff]
    %v3557 = vld [vmem:[#allocation11 + $0x10] sm:$0xff]
    %v3558 = vld [vmem:[#allocation11 + $0x18] sm:$0xff]
    %v3559 = vld [vmem:[#allocation11 + $0x20] sm:$0xff]
    %v3560 = vld [vmem:[#allocation11 + $0x28] sm:$0xff]
    %v3561 = vld [vmem:[#allocation11 + $0x30] sm:$0xff]
    %v3562 = vld [vmem:[#allocation11 + $0x38] sm:$0xff]
    %v3563 = vld [vmem:[#allocation11 + $0x40] sm:$0xff]
    %v3564 = vld [vmem:[#allocation11 + $0x48] sm:$0xff]
    %v3565 = vld [vmem:[#allocation11 + $0x50] sm:$0xff]
    %v3566 = vld [vmem:[#allocation11 + $0x58] sm:$0xff]
    %v3567 = vld [vmem:[#allocation11 + $0x60] sm:$0xff]
    %v3568 = vld [vmem:[#allocation11 + $0x68] sm:$0xff]
    %v3569 = vld [vmem:[#allocation11 + $0x70] sm:$0xff]
    %v3570 = vld [vmem:[#allocation11 + $0x78] sm:$0xff]
    %v3571 = vld [vmem:[#allocation11 + $0x80] sm:$0xff]
    %v3572 = vld [vmem:[#allocation11 + $0x88] sm:$0xff]
    %v3573 = vld [vmem:[#allocation11 + $0x90] sm:$0xff]
    %v3574 = vld [vmem:[#allocation11 + $0x98] sm:$0xff]
    %v3575 = vld [vmem:[#allocation11 + $0xa0] sm:$0xff]
    %v3576 = vld [vmem:[#allocation11 + $0xa8] sm:$0xff]
    %v3577 = vld [vmem:[#allocation11 + $0xb0] sm:$0xff]
    %v3578 = vld [vmem:[#allocation11 + $0xb8] sm:$0xff]
    %v3579 = vld [vmem:[#allocation11 + $0xc0] sm:$0xff]
    %v3580 = vld [vmem:[#allocation11 + $0xc8] sm:$0xff]
    %v3581 = vld [vmem:[#allocation11 + $0xd0] sm:$0xff]
    %v3582 = vld [vmem:[#allocation11 + $0xd8] sm:$0xff]
    %v3583 = vld [vmem:[#allocation11 + $0xe0] sm:$0xff]
    %v3584 = vld [vmem:[#allocation11 + $0xe8] sm:$0xff]
    %v3585 = vld [vmem:[#allocation11 + $0xf0] sm:$0xff]
    %v3586 = vld [vmem:[#allocation11 + $0xf8] sm:$0xff]
    %v3587 = vld [vmem:[#allocation11 + $0x100] sm:$0xff]
    %v3588 = vld [vmem:[#allocation11 + $0x108] sm:$0xff]
    %v3589 = vld [vmem:[#allocation11 + $0x110] sm:$0xff]
    %v3590 = vld [vmem:[#allocation11 + $0x118] sm:$0xff]
    %v3591 = vld [vmem:[#allocation11 + $0x120] sm:$0xff]
    %v3592 = vld [vmem:[#allocation11 + $0x128] sm:$0xff]
    %v3593 = vld [vmem:[#allocation11 + $0x130] sm:$0xff]
    %v3594 = vld [vmem:[#allocation11 + $0x138] sm:$0xff]
    %v3595 = vld [vmem:[#allocation11 + $0x140] sm:$0xff]
    %v3596 = vld [vmem:[#allocation11 + $0x148] sm:$0xff]
    %v3597 = vld [vmem:[#allocation11 + $0x150] sm:$0xff]
    %v3598 = vld [vmem:[#allocation11 + $0x158] sm:$0xff]
    %v3599 = vld [vmem:[#allocation11 + $0x160] sm:$0xff]
    %v3600 = vld [vmem:[#allocation11 + $0x168] sm:$0xff]
    %v3601 = vld [vmem:[#allocation11 + $0x170] sm:$0xff]
    %v3602 = vld [vmem:[#allocation11 + $0x178] sm:$0xff]
    %v3603 = vld [vmem:[#allocation11 + $0x180] sm:$0xff]
    %v3604 = vld [vmem:[#allocation11 + $0x188] sm:$0xff]
    %v3605 = vld [vmem:[#allocation11 + $0x190] sm:$0xff]
    %v3606 = vld [vmem:[#allocation11 + $0x198] sm:$0xff]
    %v3607 = vld [vmem:[#allocation11 + $0x1a0] sm:$0xff]
    %v3608 = vld [vmem:[#allocation11 + $0x1a8] sm:$0xff]
    %v3609 = vld [vmem:[#allocation11 + $0x1b0] sm:$0xff]
    %v3610 = vld [vmem:[#allocation11 + $0x1b8] sm:$0xff]
    %v3611 = vld [vmem:[#allocation11 + $0x1c0] sm:$0xff]
    %v3612 = vld [vmem:[#allocation11 + $0x1c8] sm:$0xff]
    %v3613 = vld [vmem:[#allocation11 + $0x1d0] sm:$0xff]
    %v3614 = vld [vmem:[#allocation11 + $0x1d8] sm:$0xff]
    %v3615 = vld [vmem:[#allocation11 + $0x1e0] sm:$0xff]
    %v3616 = vld [vmem:[#allocation11 + $0x1e8] sm:$0xff]
    %v3617 = vld [vmem:[#allocation11 + $0x1f0] sm:$0xff]
    %v3618 = vld [vmem:[#allocation11 + $0x1f8] sm:$0xff]
    %v3619 = vld [vmem:[#allocation11 + $0x200] sm:$0xff]
    %v3620 = vld [vmem:[#allocation11 + $0x208] sm:$0xff]
    %v3621 = vld [vmem:[#allocation11 + $0x210] sm:$0xff]
    %v3622 = vld [vmem:[#allocation11 + $0x218] sm:$0xff]
    %v3623 = vld [vmem:[#allocation11 + $0x220] sm:$0xff]
    %v3624 = vld [vmem:[#allocation11 + $0x228] sm:$0xff]
    %v3625 = vld [vmem:[#allocation11 + $0x230] sm:$0xff]
    %v3626 = vld [vmem:[#allocation11 + $0x238] sm:$0xff]
    %v3627 = vld [vmem:[#allocation11 + $0x240] sm:$0xff]
    %v3628 = vld [vmem:[#allocation11 + $0x248] sm:$0xff]
    %v3629 = vld [vmem:[#allocation11 + $0x250] sm:$0xff]
    %v3630 = vld [vmem:[#allocation11 + $0x258] sm:$0xff]
    %v3631 = vld [vmem:[#allocation11 + $0x260] sm:$0xff]
    %v3632 = vld [vmem:[#allocation11 + $0x268] sm:$0xff]
    %v3633 = vld [vmem:[#allocation11 + $0x270] sm:$0xff]
    %v3634 = vld [vmem:[#allocation11 + $0x278] sm:$0xff]
    %v3635 = vld [vmem:[#allocation11 + $0x280] sm:$0xff]
    %v3636 = vld [vmem:[#allocation11 + $0x288] sm:$0xff]
    %v3637 = vld [vmem:[#allocation11 + $0x290] sm:$0xff]
    %v3638 = vld [vmem:[#allocation11 + $0x298] sm:$0xff]
    %v3639 = vld [vmem:[#allocation11 + $0x2a0] sm:$0xff]
    %v3640 = vld [vmem:[#allocation11 + $0x2a8] sm:$0xff]
    %v3641 = vld [vmem:[#allocation11 + $0x2b0] sm:$0xff]
    %v3642 = vld [vmem:[#allocation11 + $0x2b8] sm:$0xff]
    %v3643 = vld [vmem:[#allocation11 + $0x2c0] sm:$0xff]
    %v3644 = vld [vmem:[#allocation11 + $0x2c8] sm:$0xff]
    %v3645 = vld [vmem:[#allocation11 + $0x2d0] sm:$0xff]
    %v3646 = vld [vmem:[#allocation11 + $0x2d8] sm:$0xff]
    %v3647 = vld [vmem:[#allocation11 + $0x2e0] sm:$0xff]
    %v3648 = vld [vmem:[#allocation11 + $0x2e8] sm:$0xff]
    %v3649 = vld [vmem:[#allocation11 + $0x2f0] sm:$0xff]
    %v3650 = vld [vmem:[#allocation11 + $0x2f8] sm:$0xff]
    %v3651 = vld [vmem:[#allocation11 + $0x300] sm:$0xff]
    %v3652 = vld [vmem:[#allocation11 + $0x308] sm:$0xff]
    %v3653 = vld [vmem:[#allocation11 + $0x310] sm:$0xff]
    %v3654 = vld [vmem:[#allocation11 + $0x318] sm:$0xff]
    %v3655 = vld [vmem:[#allocation11 + $0x320] sm:$0xff]
    %v3656 = vld [vmem:[#allocation11 + $0x328] sm:$0xff]
    %v3657 = vld [vmem:[#allocation11 + $0x330] sm:$0xff]
    %v3658 = vld [vmem:[#allocation11 + $0x338] sm:$0xff]
    %v3659 = vld [vmem:[#allocation11 + $0x340] sm:$0xff]
    %v3660 = vld [vmem:[#allocation11 + $0x348] sm:$0xff]
    %v3661 = vld [vmem:[#allocation11 + $0x350] sm:$0xff]
    %v3662 = vld [vmem:[#allocation11 + $0x358] sm:$0xff]
    %v3663 = vld [vmem:[#allocation11 + $0x360] sm:$0xff]
    %v3664 = vld [vmem:[#allocation11 + $0x368] sm:$0xff]
    %v3665 = vld [vmem:[#allocation11 + $0x370] sm:$0xff]
    %v3666 = vld [vmem:[#allocation11 + $0x378] sm:$0xff]
    %v3667 = vld [vmem:[#allocation11 + $0x380] sm:$0xff]
    %v3668 = vld [vmem:[#allocation11 + $0x388] sm:$0xff]
    %v3669 = vld [vmem:[#allocation11 + $0x390] sm:$0xff]
    %v3670 = vld [vmem:[#allocation11 + $0x398] sm:$0xff]
    %v3671 = vld [vmem:[#allocation11 + $0x3a0] sm:$0xff]
    %v3672 = vld [vmem:[#allocation11 + $0x3a8] sm:$0xff]
    %v3673 = vld [vmem:[#allocation11 + $0x3b0] sm:$0xff]
    %v3674 = vld [vmem:[#allocation11 + $0x3b8] sm:$0xff]
    %v3675 = vld [vmem:[#allocation11 + $0x3c0] sm:$0xff]
    %v3676 = vld [vmem:[#allocation11 + $0x3c8] sm:$0xff]
    %v3677 = vld [vmem:[#allocation11 + $0x3d0] sm:$0xff]
    %v3678 = vld [vmem:[#allocation11 + $0x3d8] sm:$0xff]
    %v3679 = vld [vmem:[#allocation11 + $0x3e0] sm:$0xff]
    %v3680 = vld [vmem:[#allocation11 + $0x3e8] sm:$0xff]
    %v3681 = vld [vmem:[#allocation11 + $0x3f0] sm:$0xff]
    %v3682 = vld [vmem:[#allocation11 + $0x3f8] sm:$0xff]
    %v3683 = vld [vmem:[#allocation11 + $0x400] sm:$0xff]
    %v3684 = vld [vmem:[#allocation11 + $0x408] sm:$0xff]
    %v3685 = vld [vmem:[#allocation11 + $0x410] sm:$0xff]
    %v3686 = vld [vmem:[#allocation11 + $0x418] sm:$0xff]
    %v3687 = vld [vmem:[#allocation11 + $0x420] sm:$0xff]
    %v3688 = vld [vmem:[#allocation11 + $0x428] sm:$0xff]
    %v3689 = vld [vmem:[#allocation11 + $0x430] sm:$0xff]
    %v3690 = vld [vmem:[#allocation11 + $0x438] sm:$0xff]
    %v3691 = vld [vmem:[#allocation11 + $0x440] sm:$0xff]
    %v3692 = vld [vmem:[#allocation11 + $0x448] sm:$0xff]
    %v3693 = vld [vmem:[#allocation11 + $0x450] sm:$0xff]
    %v3694 = vld [vmem:[#allocation11 + $0x458] sm:$0xff]
    %v3695 = vld [vmem:[#allocation11 + $0x460] sm:$0xff]
    %v3696 = vld [vmem:[#allocation11 + $0x468] sm:$0xff]
    %v3697 = vld [vmem:[#allocation11 + $0x470] sm:$0xff]
    %v3698 = vld [vmem:[#allocation11 + $0x478] sm:$0xff]
    %v3699 = vld [vmem:[#allocation11 + $0x480] sm:$0xff]
    %v3700 = vld [vmem:[#allocation11 + $0x488] sm:$0xff]
    %v3701 = vld [vmem:[#allocation11 + $0x490] sm:$0xff]
    %v3702 = vld [vmem:[#allocation11 + $0x498] sm:$0xff]
    %v3703 = vld [vmem:[#allocation11 + $0x4a0] sm:$0xff]
    %v3704 = vld [vmem:[#allocation11 + $0x4a8] sm:$0xff]
    %v3705 = vld [vmem:[#allocation11 + $0x4b0] sm:$0xff]
    %v3706 = vld [vmem:[#allocation11 + $0x4b8] sm:$0xff]
    %v3707 = vld [vmem:[#allocation11 + $0x4c0] sm:$0xff]
    %v3708 = vld [vmem:[#allocation11 + $0x4c8] sm:$0xff]
    %v3709 = vld [vmem:[#allocation11 + $0x4d0] sm:$0xff]
    %v3710 = vld [vmem:[#allocation11 + $0x4d8] sm:$0xff]
    %v3711 = vld [vmem:[#allocation11 + $0x4e0] sm:$0xff]
    %v3712 = vld [vmem:[#allocation11 + $0x4e8] sm:$0xff]
    %v3713 = vld [vmem:[#allocation11 + $0x4f0] sm:$0xff]
    %v3714 = vld [vmem:[#allocation11 + $0x4f8] sm:$0xff]
    %v3715 = vld [vmem:[#allocation11 + $0x500] sm:$0xff]
    %v3716 = vld [vmem:[#allocation11 + $0x508] sm:$0xff]
    %v3717 = vld [vmem:[#allocation11 + $0x510] sm:$0xff]
    %v3718 = vld [vmem:[#allocation11 + $0x518] sm:$0xff]
    %v3719 = vld [vmem:[#allocation11 + $0x520] sm:$0xff]
    %v3720 = vld [vmem:[#allocation11 + $0x528] sm:$0xff]
    %v3721 = vld [vmem:[#allocation11 + $0x530] sm:$0xff]
    %v3722 = vld [vmem:[#allocation11 + $0x538] sm:$0xff]
    %v3723 = vld [vmem:[#allocation11 + $0x540] sm:$0xff]
    %v3724 = vld [vmem:[#allocation11 + $0x548] sm:$0xff]
    %v3725 = vld [vmem:[#allocation11 + $0x550] sm:$0xff]
    %v3726 = vld [vmem:[#allocation11 + $0x558] sm:$0xff]
    %v3727 = vld [vmem:[#allocation11 + $0x560] sm:$0xff]
    %v3728 = vld [vmem:[#allocation11 + $0x568] sm:$0xff]
    %v3729 = vld [vmem:[#allocation11 + $0x570] sm:$0xff]
    %v3730 = vld [vmem:[#allocation11 + $0x578] sm:$0xff]
    %v3731 = vld [vmem:[#allocation11 + $0x580] sm:$0xff]
    %v3732 = vld [vmem:[#allocation11 + $0x588] sm:$0xff]
    %v3733 = vld [vmem:[#allocation11 + $0x590] sm:$0xff]
    %v3734 = vld [vmem:[#allocation11 + $0x598] sm:$0xff]
    %v3735 = vld [vmem:[#allocation11 + $0x5a0] sm:$0xff]
    %v3736 = vld [vmem:[#allocation11 + $0x5a8] sm:$0xff]
    %v3737 = vld [vmem:[#allocation11 + $0x5b0] sm:$0xff]
    %v3738 = vld [vmem:[#allocation11 + $0x5b8] sm:$0xff]
    %v3739 = vld [vmem:[#allocation11 + $0x5c0] sm:$0xff]
    %v3740 = vld [vmem:[#allocation11 + $0x5c8] sm:$0xff]
    %v3741 = vld [vmem:[#allocation11 + $0x5d0] sm:$0xff]
    %v3742 = vld [vmem:[#allocation11 + $0x5d8] sm:$0xff]
    %v3743 = vld [vmem:[#allocation11 + $0x5e0] sm:$0xff]
    %v3744 = vld [vmem:[#allocation11 + $0x5e8] sm:$0xff]
    %v3745 = vld [vmem:[#allocation11 + $0x5f0] sm:$0xff]
    %v3746 = vld [vmem:[#allocation11 + $0x5f8] sm:$0xff]
    %v3747 = vld [vmem:[#allocation11 + $0x600] sm:$0xff]
    %v3748 = vld [vmem:[#allocation11 + $0x608] sm:$0xff]
    %v3749 = vld [vmem:[#allocation11 + $0x610] sm:$0xff]
    %v3750 = vld [vmem:[#allocation11 + $0x618] sm:$0xff]
    %v3751 = vld [vmem:[#allocation11 + $0x620] sm:$0xff]
    %v3752 = vld [vmem:[#allocation11 + $0x628] sm:$0xff]
    %v3753 = vld [vmem:[#allocation11 + $0x630] sm:$0xff]
    %v3754 = vld [vmem:[#allocation11 + $0x638] sm:$0xff]
    %v3755 = vld [vmem:[#allocation11 + $0x640] sm:$0xff]
    %v3756 = vld [vmem:[#allocation11 + $0x648] sm:$0xff]
    %v3757 = vld [vmem:[#allocation11 + $0x650] sm:$0xff]
    %v3758 = vld [vmem:[#allocation11 + $0x658] sm:$0xff]
    %v3759 = vld [vmem:[#allocation11 + $0x660] sm:$0xff]
    %v3760 = vld [vmem:[#allocation11 + $0x668] sm:$0xff]
    %v3761 = vld [vmem:[#allocation11 + $0x670] sm:$0xff]
    %v3762 = vld [vmem:[#allocation11 + $0x678] sm:$0xff]
    %v3763 = vld [vmem:[#allocation11 + $0x680] sm:$0xff]
    %v3764 = vld [vmem:[#allocation11 + $0x688] sm:$0xff]
    %v3765 = vld [vmem:[#allocation11 + $0x690] sm:$0xff]
    %v3766 = vld [vmem:[#allocation11 + $0x698] sm:$0xff]
    %v3767 = vld [vmem:[#allocation11 + $0x6a0] sm:$0xff]
    %v3768 = vld [vmem:[#allocation11 + $0x6a8] sm:$0xff]
    %v3769 = vld [vmem:[#allocation11 + $0x6b0] sm:$0xff]
    %v3770 = vld [vmem:[#allocation11 + $0x6b8] sm:$0xff]
    %v3771 = vld [vmem:[#allocation11 + $0x6c0] sm:$0xff]
    %v3772 = vld [vmem:[#allocation11 + $0x6c8] sm:$0xff]
    %v3773 = vld [vmem:[#allocation11 + $0x6d0] sm:$0xff]
    %v3774 = vld [vmem:[#allocation11 + $0x6d8] sm:$0xff]
    %v3775 = vld [vmem:[#allocation11 + $0x6e0] sm:$0xff]
    %v3776 = vld [vmem:[#allocation11 + $0x6e8] sm:$0xff]
    %v3777 = vld [vmem:[#allocation11 + $0x6f0] sm:$0xff]
    %v3778 = vld [vmem:[#allocation11 + $0x6f8] sm:$0xff]
    %v3779 = vld [vmem:[#allocation11 + $0x700] sm:$0xff]
    %v3780 = vld [vmem:[#allocation11 + $0x708] sm:$0xff]
    %v3781 = vld [vmem:[#allocation11 + $0x710] sm:$0xff]
    %v3782 = vld [vmem:[#allocation11 + $0x718] sm:$0xff]
    %v3783 = vld [vmem:[#allocation11 + $0x720] sm:$0xff]
    %v3784 = vld [vmem:[#allocation11 + $0x728] sm:$0xff]
    %v3785 = vld [vmem:[#allocation11 + $0x730] sm:$0xff]
    %v3786 = vld [vmem:[#allocation11 + $0x738] sm:$0xff]
    %v3787 = vld [vmem:[#allocation11 + $0x740] sm:$0xff]
    %v3788 = vld [vmem:[#allocation11 + $0x748] sm:$0xff]
    %v3789 = vld [vmem:[#allocation11 + $0x750] sm:$0xff]
    %v3790 = vld [vmem:[#allocation11 + $0x758] sm:$0xff]
    %v3791 = vld [vmem:[#allocation11 + $0x760] sm:$0xff]
    %v3792 = vld [vmem:[#allocation11 + $0x768] sm:$0xff]
    %v3793 = vld [vmem:[#allocation11 + $0x770] sm:$0xff]
    %v3794 = vld [vmem:[#allocation11 + $0x778] sm:$0xff]
    %v3795 = vld [vmem:[#allocation11 + $0x780] sm:$0xff]
    %v3796 = vld [vmem:[#allocation11 + $0x788] sm:$0xff]
    %v3797 = vld [vmem:[#allocation11 + $0x790] sm:$0xff]
    %v3798 = vld [vmem:[#allocation11 + $0x798] sm:$0xff]
    %v3799 = vld [vmem:[#allocation11 + $0x7a0] sm:$0xff]
    %v3800 = vld [vmem:[#allocation11 + $0x7a8] sm:$0xff]
    %v3801 = vld [vmem:[#allocation11 + $0x7b0] sm:$0xff]
    %v3802 = vld [vmem:[#allocation11 + $0x7b8] sm:$0xff]
    %v3803 = vld [vmem:[#allocation11 + $0x7c0] sm:$0xff]
    %v3804 = vld [vmem:[#allocation11 + $0x7c8] sm:$0xff]
    %v3805 = vld [vmem:[#allocation11 + $0x7d0] sm:$0xff]
    %v3806 = vld [vmem:[#allocation11 + $0x7d8] sm:$0xff]
    %v3807 = vld [vmem:[#allocation11 + $0x7e0] sm:$0xff]
    %v3808 = vld [vmem:[#allocation11 + $0x7e8] sm:$0xff]
    %v3809 = vld [vmem:[#allocation11 + $0x7f0] sm:$0xff]
    %v3810 = vld [vmem:[#allocation11 + $0x7f8] sm:$0xff]
    %v3811 = vld [vmem:[#allocation11 + $0x800] sm:$0xff]
    %v3812 = vld [vmem:[#allocation11 + $0x808] sm:$0xff]
    %v3813 = vld [vmem:[#allocation11 + $0x810] sm:$0xff]
    %v3814 = vld [vmem:[#allocation11 + $0x818] sm:$0xff]
    %v3815 = vld [vmem:[#allocation11 + $0x820] sm:$0xff]
    %v3816 = vld [vmem:[#allocation11 + $0x828] sm:$0xff]
    %v3817 = vld [vmem:[#allocation11 + $0x830] sm:$0xff]
    %v3818 = vld [vmem:[#allocation11 + $0x838] sm:$0xff]
    %v3819 = vld [vmem:[#allocation11 + $0x840] sm:$0xff]
    %v3820 = vld [vmem:[#allocation11 + $0x848] sm:$0xff]
    %v3821 = vld [vmem:[#allocation11 + $0x850] sm:$0xff]
    %v3822 = vld [vmem:[#allocation11 + $0x858] sm:$0xff]
    %v3823 = vld [vmem:[#allocation11 + $0x860] sm:$0xff]
    %v3824 = vld [vmem:[#allocation11 + $0x868] sm:$0xff]
    %v3825 = vld [vmem:[#allocation11 + $0x870] sm:$0xff]
    %v3826 = vld [vmem:[#allocation11 + $0x878] sm:$0xff]
    %v3827 = vld [vmem:[#allocation11 + $0x880] sm:$0xff]
    %v3828 = vld [vmem:[#allocation11 + $0x888] sm:$0xff]
    %v3829 = vld [vmem:[#allocation11 + $0x890] sm:$0xff]
    %v3830 = vld [vmem:[#allocation11 + $0x898] sm:$0xff]
    %v3831 = vld [vmem:[#allocation11 + $0x8a0] sm:$0xff]
    %v3832 = vld [vmem:[#allocation11 + $0x8a8] sm:$0xff]
    %v3833 = vld [vmem:[#allocation11 + $0x8b0] sm:$0xff]
    %v3834 = vld [vmem:[#allocation11 + $0x8b8] sm:$0xff]
    %v3835 = vld [vmem:[#allocation11 + $0x8c0] sm:$0xff]
    %v3836 = vld [vmem:[#allocation11 + $0x8c8] sm:$0xff]
    %v3837 = vld [vmem:[#allocation11 + $0x8d0] sm:$0xff]
    %v3838 = vld [vmem:[#allocation11 + $0x8d8] sm:$0xff]
    %v3839 = vld [vmem:[#allocation11 + $0x8e0] sm:$0xff]
    %v3840 = vld [vmem:[#allocation11 + $0x8e8] sm:$0xff]
    %v3841 = vld [vmem:[#allocation11 + $0x8f0] sm:$0xff]
    %v3842 = vld [vmem:[#allocation11 + $0x8f8] sm:$0xff]
    %v3843 = vld [vmem:[#allocation11 + $0x900] sm:$0xff]
    %v3844 = vld [vmem:[#allocation11 + $0x908] sm:$0xff]
    %v3845 = vld [vmem:[#allocation11 + $0x910] sm:$0xff]
    %v3846 = vld [vmem:[#allocation11 + $0x918] sm:$0xff]
    %v3847 = vld [vmem:[#allocation11 + $0x920] sm:$0xff]
    %v3848 = vld [vmem:[#allocation11 + $0x928] sm:$0xff]
    %v3849 = vld [vmem:[#allocation11 + $0x930] sm:$0xff]
    %v3850 = vld [vmem:[#allocation11 + $0x938] sm:$0xff]
    %v3851 = vld [vmem:[#allocation11 + $0x940] sm:$0xff]
    %v3852 = vld [vmem:[#allocation11 + $0x948] sm:$0xff]
    %v3853 = vld [vmem:[#allocation11 + $0x950] sm:$0xff]
    %v3854 = vld [vmem:[#allocation11 + $0x958] sm:$0xff]
    %v3855 = vld [vmem:[#allocation11 + $0x960] sm:$0xff]
    %v3856 = vld [vmem:[#allocation11 + $0x968] sm:$0xff]
    %v3857 = vld [vmem:[#allocation11 + $0x970] sm:$0xff]
    %v3858 = vld [vmem:[#allocation11 + $0x978] sm:$0xff]
    %v3859 = vld [vmem:[#allocation11 + $0x980] sm:$0xff]
    %v3860 = vld [vmem:[#allocation11 + $0x988] sm:$0xff]
    %v3861 = vld [vmem:[#allocation11 + $0x990] sm:$0xff]
    %v3862 = vld [vmem:[#allocation11 + $0x998] sm:$0xff]
    %v3863 = vld [vmem:[#allocation11 + $0x9a0] sm:$0xff]
    %v3864 = vld [vmem:[#allocation11 + $0x9a8] sm:$0xff]
    %v3865 = vld [vmem:[#allocation11 + $0x9b0] sm:$0xff]
    %v3866 = vld [vmem:[#allocation11 + $0x9b8] sm:$0xff]
    %v3867 = vld [vmem:[#allocation11 + $0x9c0] sm:$0xff]
    %v3868 = vld [vmem:[#allocation11 + $0x9c8] sm:$0xff]
    %v3869 = vld [vmem:[#allocation11 + $0x9d0] sm:$0xff]
    %v3870 = vld [vmem:[#allocation11 + $0x9d8] sm:$0xff]
    %v3871 = vld [vmem:[#allocation11 + $0x9e0] sm:$0xff]
    %v3872 = vld [vmem:[#allocation11 + $0x9e8] sm:$0xff]
    %v3873 = vld [vmem:[#allocation11 + $0x9f0] sm:$0xff]
    %v3874 = vld [vmem:[#allocation11 + $0x9f8] sm:$0xff]
    %v3875 = vld [vmem:[#allocation11 + $0xa00] sm:$0xff]
    %v3876 = vld [vmem:[#allocation11 + $0xa08] sm:$0xff]
    %v3877 = vld [vmem:[#allocation11 + $0xa10] sm:$0xff]
    %v3878 = vld [vmem:[#allocation11 + $0xa18] sm:$0xff]
    %v3879 = vld [vmem:[#allocation11 + $0xa20] sm:$0xff]
    %v3880 = vld [vmem:[#allocation11 + $0xa28] sm:$0xff]
    %v3881 = vld [vmem:[#allocation11 + $0xa30] sm:$0xff]
    %v3882 = vld [vmem:[#allocation11 + $0xa38] sm:$0xff]
    %v3883 = vld [vmem:[#allocation11 + $0xa40] sm:$0xff]
    %v3884 = vld [vmem:[#allocation11 + $0xa48] sm:$0xff]
    %v3885 = vld [vmem:[#allocation11 + $0xa50] sm:$0xff]
    %v3886 = vld [vmem:[#allocation11 + $0xa58] sm:$0xff]
    %v3887 = vld [vmem:[#allocation11 + $0xa60] sm:$0xff]
    %v3888 = vld [vmem:[#allocation11 + $0xa68] sm:$0xff]
    %v3889 = vld [vmem:[#allocation11 + $0xa70] sm:$0xff]
    %v3890 = vld [vmem:[#allocation11 + $0xa78] sm:$0xff]
    %v3891 = vld [vmem:[#allocation11 + $0xa80] sm:$0xff]
    %v3892 = vld [vmem:[#allocation11 + $0xa88] sm:$0xff]
    %v3893 = vld [vmem:[#allocation11 + $0xa90] sm:$0xff]
    %v3894 = vld [vmem:[#allocation11 + $0xa98] sm:$0xff]
    %v3895 = vld [vmem:[#allocation11 + $0xaa0] sm:$0xff]
    %v3896 = vld [vmem:[#allocation11 + $0xaa8] sm:$0xff]
    %v3897 = vld [vmem:[#allocation11 + $0xab0] sm:$0xff]
    %v3898 = vld [vmem:[#allocation11 + $0xab8] sm:$0xff]
    %v3899 = vld [vmem:[#allocation11 + $0xac0] sm:$0xff]
    %v3900 = vld [vmem:[#allocation11 + $0xac8] sm:$0xff]
    %v3901 = vld [vmem:[#allocation11 + $0xad0] sm:$0xff]
    %v3902 = vld [vmem:[#allocation11 + $0xad8] sm:$0xff]
    %v3903 = vld [vmem:[#allocation11 + $0xae0] sm:$0xff]
    %v3904 = vld [vmem:[#allocation11 + $0xae8] sm:$0xff]
    %v3905 = vld [vmem:[#allocation11 + $0xaf0] sm:$0xff]
    %v3906 = vld [vmem:[#allocation11 + $0xaf8] sm:$0xff]
    %v3907 = vld [vmem:[#allocation11 + $0xb00] sm:$0xff]
    %v3908 = vld [vmem:[#allocation11 + $0xb08] sm:$0xff]
    %v3909 = vld [vmem:[#allocation11 + $0xb10] sm:$0xff]
    %v3910 = vld [vmem:[#allocation11 + $0xb18] sm:$0xff]
    %v3911 = vld [vmem:[#allocation11 + $0xb20] sm:$0xff]
    %v3912 = vld [vmem:[#allocation11 + $0xb28] sm:$0xff]
    %v3913 = vld [vmem:[#allocation11 + $0xb30] sm:$0xff]
    %v3914 = vld [vmem:[#allocation11 + $0xb38] sm:$0xff]
    %v3915 = vld [vmem:[#allocation11 + $0xb40] sm:$0xff]
    %v3916 = vld [vmem:[#allocation11 + $0xb48] sm:$0xff]
    %v3917 = vld [vmem:[#allocation11 + $0xb50] sm:$0xff]
    %v3918 = vld [vmem:[#allocation11 + $0xb58] sm:$0xff]
    %v3919 = vld [vmem:[#allocation11 + $0xb60] sm:$0xff]
    %v3920 = vld [vmem:[#allocation11 + $0xb68] sm:$0xff]
    %v3921 = vld [vmem:[#allocation11 + $0xb70] sm:$0xff]
    %v3922 = vld [vmem:[#allocation11 + $0xb78] sm:$0xff]
    %v3923 = vld [vmem:[#allocation11 + $0xb80] sm:$0xff]
    %v3924 = vld [vmem:[#allocation11 + $0xb88] sm:$0xff]
    %v3925 = vld [vmem:[#allocation11 + $0xb90] sm:$0xff]
    %v3926 = vld [vmem:[#allocation11 + $0xb98] sm:$0xff]
    %v3927 = vld [vmem:[#allocation11 + $0xba0] sm:$0xff]
    %v3928 = vld [vmem:[#allocation11 + $0xba8] sm:$0xff]
    %v3929 = vld [vmem:[#allocation11 + $0xbb0] sm:$0xff]
    %v3930 = vld [vmem:[#allocation11 + $0xbb8] sm:$0xff]
    %v3931 = vld [vmem:[#allocation11 + $0xbc0] sm:$0xff]
    %v3932 = vld [vmem:[#allocation11 + $0xbc8] sm:$0xff]
    %v3933 = vld [vmem:[#allocation11 + $0xbd0] sm:$0xff]
    %v3934 = vld [vmem:[#allocation11 + $0xbd8] sm:$0xff]
    %v3935 = vld [vmem:[#allocation11 + $0xbe0] sm:$0xff]
    %v3936 = vld [vmem:[#allocation11 + $0xbe8] sm:$0xff]
    %v3937 = vld [vmem:[#allocation11 + $0xbf0] sm:$0xff]
    %v3938 = vld [vmem:[#allocation11 + $0xbf8] sm:$0xff]
    %v3939 = vld [vmem:[#allocation11 + $0xc00] sm:$0xff]
    %v3940 = vld [vmem:[#allocation11 + $0xc08] sm:$0xff]
    %v3941 = vld [vmem:[#allocation11 + $0xc10] sm:$0xff]
    %v3942 = vld [vmem:[#allocation11 + $0xc18] sm:$0xff]
    %v3943 = vld [vmem:[#allocation11 + $0xc20] sm:$0xff]
    %v3944 = vld [vmem:[#allocation11 + $0xc28] sm:$0xff]
    %v3945 = vld [vmem:[#allocation11 + $0xc30] sm:$0xff]
    %v3946 = vld [vmem:[#allocation11 + $0xc38] sm:$0xff]
    %v3947 = vld [vmem:[#allocation11 + $0xc40] sm:$0xff]
    %v3948 = vld [vmem:[#allocation11 + $0xc48] sm:$0xff]
    %v3949 = vld [vmem:[#allocation11 + $0xc50] sm:$0xff]
    %v3950 = vld [vmem:[#allocation11 + $0xc58] sm:$0xff]
    %v3951 = vld [vmem:[#allocation11 + $0xc60] sm:$0xff]
    %v3952 = vld [vmem:[#allocation11 + $0xc68] sm:$0xff]
    %v3953 = vld [vmem:[#allocation11 + $0xc70] sm:$0xff]
    %v3954 = vld [vmem:[#allocation11 + $0xc78] sm:$0xff]
    %v3955 = vld [vmem:[#allocation13] sm:$0x3]
    %v3957 = vlaneseq
    %v3958 = vshrl.u32 %v3957, 7
    %v3959 = vsub.s32 0, %v3958
    %v3960 = vrot.slane %v3955, %v3959
    %v3961 = vlaneseq
    %v3962 = vshrl.u32 %v3961, 7
    %v3963 = vsub.s32 1, %v3962
    %v3964 = vrot.slane %v3955, %v3963
    %v3971 = vcombine.high %v3551, %v3551
    %v3973 = vunpack.c.l.s4 1966171168
    %v3974 = vunpack.c.0.s8 %v3973
    %v3975 = vlaneseq
    %v3976 = vshrl.u32 %v3975, 7
    %v3977 = vsub.s32 %v3974, %v3976
    %v3978 = vrot.slane %v3551, %v3977
    %v3980 = vunpack.c.l.s4 1966171168
    %v3981 = vunpack.c.0.s8 %v3980
    %v3982 = vlaneseq
    %v3983 = vshrl.u32 %v3982, 7
    %v3984 = vsub.s32 %v3981, %v3983
    %v3985 = vrot.slane %v3971, %v3984
    %v3986 = vcombine.high %v3978, %v3978
    %v3987 = vcombine.high %v3985, %v3985
    %v3989 = vunpack.c.l.s4 1966171168
    %v3990 = vunpack.c.0.s8 %v3989
    %v3991 = vlaneseq
    %v3992 = vshrl.u32 %v3991, 7
    %v3993 = vsub.s32 %v3990, %v3992
    %v3994 = vrot.slane %v3978, %v3993
    %v3996 = vunpack.c.l.s4 1966171168
    %v3997 = vunpack.c.0.s8 %v3996
    %v3998 = vlaneseq
    %v3999 = vshrl.u32 %v3998, 7
    %v4000 = vsub.s32 %v3997, %v3999
    %v4001 = vrot.slane %v3985, %v4000
    %v4003 = vunpack.c.l.s4 1966171168
    %v4004 = vunpack.c.0.s8 %v4003
    %v4005 = vlaneseq
    %v4006 = vshrl.u32 %v4005, 7
    %v4007 = vsub.s32 %v4004, %v4006
    %v4008 = vrot.slane %v3986, %v4007
    %v4010 = vunpack.c.l.s4 1966171168
    %v4011 = vunpack.c.0.s8 %v4010
    %v4012 = vlaneseq
    %v4013 = vshrl.u32 %v4012, 7
    %v4014 = vsub.s32 %v4011, %v4013
    %v4015 = vrot.slane %v3987, %v4014
    %v4016 = vcombine.high %v3994, %v3994
    %v4017 = vcombine.high %v4001, %v4001
    %v4018 = vcombine.high %v4008, %v4008
    %v4019 = vcombine.high %v4015, %v4015
    %v4020 = vcombine.high %v3552, %v3552
    %v4022 = vunpack.c.l.s4 1966171168
    %v4023 = vunpack.c.0.s8 %v4022
    %v4024 = vlaneseq
    %v4025 = vshrl.u32 %v4024, 7
    %v4026 = vsub.s32 %v4023, %v4025
    %v4027 = vrot.slane %v3552, %v4026
    %v4029 = vunpack.c.l.s4 1966171168
    %v4030 = vunpack.c.0.s8 %v4029
    %v4031 = vlaneseq
    %v4032 = vshrl.u32 %v4031, 7
    %v4033 = vsub.s32 %v4030, %v4032
    %v4034 = vrot.slane %v4020, %v4033
    %v4035 = vcombine.high %v4027, %v4027
    %v4036 = vcombine.high %v4034, %v4034
    %v4038 = vunpack.c.l.s4 1966171168
    %v4039 = vunpack.c.0.s8 %v4038
    %v4040 = vlaneseq
    %v4041 = vshrl.u32 %v4040, 7
    %v4042 = vsub.s32 %v4039, %v4041
    %v4043 = vrot.slane %v4027, %v4042
    %v4045 = vunpack.c.l.s4 1966171168
    %v4046 = vunpack.c.0.s8 %v4045
    %v4047 = vlaneseq
    %v4048 = vshrl.u32 %v4047, 7
    %v4049 = vsub.s32 %v4046, %v4048
    %v4050 = vrot.slane %v4034, %v4049
    %v4052 = vunpack.c.l.s4 1966171168
    %v4053 = vunpack.c.0.s8 %v4052
    %v4054 = vlaneseq
    %v4055 = vshrl.u32 %v4054, 7
    %v4056 = vsub.s32 %v4053, %v4055
    %v4057 = vrot.slane %v4035, %v4056
    %v4059 = vunpack.c.l.s4 1966171168
    %v4060 = vunpack.c.0.s8 %v4059
    %v4061 = vlaneseq
    %v4062 = vshrl.u32 %v4061, 7
    %v4063 = vsub.s32 %v4060, %v4062
    %v4064 = vrot.slane %v4036, %v4063
    %v4065 = vcombine.high %v4043, %v4043
    %v4066 = vcombine.high %v4050, %v4050
    %v4067 = vcombine.high %v4057, %v4057
    %v4068 = vcombine.high %v4064, %v4064
    %v4069 = vcombine.high %v3553, %v3553
    %v4071 = vunpack.c.l.s4 1966171168
    %v4072 = vunpack.c.0.s8 %v4071
    %v4073 = vlaneseq
    %v4074 = vshrl.u32 %v4073, 7
    %v4075 = vsub.s32 %v4072, %v4074
    %v4076 = vrot.slane %v3553, %v4075
    %v4078 = vunpack.c.l.s4 1966171168
    %v4079 = vunpack.c.0.s8 %v4078
    %v4080 = vlaneseq
    %v4081 = vshrl.u32 %v4080, 7
    %v4082 = vsub.s32 %v4079, %v4081
    %v4083 = vrot.slane %v4069, %v4082
    %v4084 = vcombine.high %v4076, %v4076
    %v4085 = vcombine.high %v4083, %v4083
    %v4087 = vunpack.c.l.s4 1966171168
    %v4088 = vunpack.c.0.s8 %v4087
    %v4089 = vlaneseq
    %v4090 = vshrl.u32 %v4089, 7
    %v4091 = vsub.s32 %v4088, %v4090
    %v4092 = vrot.slane %v4076, %v4091
    %v4094 = vunpack.c.l.s4 1966171168
    %v4095 = vunpack.c.0.s8 %v4094
    %v4096 = vlaneseq
    %v4097 = vshrl.u32 %v4096, 7
    %v4098 = vsub.s32 %v4095, %v4097
    %v4099 = vrot.slane %v4083, %v4098
    %v4101 = vunpack.c.l.s4 1966171168
    %v4102 = vunpack.c.0.s8 %v4101
    %v4103 = vlaneseq
    %v4104 = vshrl.u32 %v4103, 7
    %v4105 = vsub.s32 %v4102, %v4104
    %v4106 = vrot.slane %v4084, %v4105
    %v4108 = vunpack.c.l.s4 1966171168
    %v4109 = vunpack.c.0.s8 %v4108
    %v4110 = vlaneseq
    %v4111 = vshrl.u32 %v4110, 7
    %v4112 = vsub.s32 %v4109, %v4111
    %v4113 = vrot.slane %v4085, %v4112
    %v4114 = vcombine.high %v4092, %v4092
    %v4115 = vcombine.high %v4099, %v4099
    %v4116 = vcombine.high %v4106, %v4106
    %v4117 = vcombine.high %v4113, %v4113
    %v4119 = vunpack.c.l.s4 1966171168
    %v4120 = vunpack.c.0.s8 %v4119
    %v4121 = vlaneseq
    %v4122 = vshrl.u32 %v4121, 7
    %v4123 = vsub.s32 %v4120, %v4122
    %v4124 = vrot.slane %v3554, %v4123
    %v4126 = vunpack.c.l.s4 1966171168
    %v4127 = vunpack.c.0.s8 %v4126
    %v4128 = vlaneseq
    %v4129 = vshrl.u32 %v4128, 7
    %v4130 = vsub.s32 %v4127, %v4129
    %v4131 = vrot.slane %v4124, %v4130
    %v4557 = vunpack.c.l.b16 %v3555
    %v4558 = vunpack.c.h.b16 %v3555
    %v4559 = vunpack.c.l.b16 %v3556
    %v4560 = vunpack.c.h.b16 %v3556
    %v4561 = vunpack.c.l.b16 %v3557
    %v4562 = vunpack.c.h.b16 %v3557
    %v4563 = vunpack.c.l.b16 %v3558
    %v4564 = vunpack.c.h.b16 %v3558
    %v4565 = vunpack.c.l.b16 %v3559
    %v4566 = vunpack.c.h.b16 %v3559
    %v4567 = vunpack.c.l.b16 %v3560
    %v4568 = vunpack.c.h.b16 %v3560
    %v4569 = vunpack.c.l.b16 %v3561
    %v4570 = vunpack.c.h.b16 %v3561
    %v4571 = vunpack.c.l.b16 %v3562
    %v4572 = vunpack.c.h.b16 %v3562
    %v4573 = vunpack.c.l.b16 %v3563
    %v4574 = vunpack.c.h.b16 %v3563
    %v4575 = vunpack.c.l.b16 %v3564
    %v4576 = vunpack.c.h.b16 %v3564
    %v4577 = vunpack.c.l.b16 %v3565
    %v4578 = vunpack.c.h.b16 %v3565
    %v4579 = vunpack.c.l.b16 %v3566
    %v4580 = vunpack.c.h.b16 %v3566
    %v4581 = vunpack.c.l.b16 %v3567
    %v4582 = vunpack.c.h.b16 %v3567
    %v4583 = vunpack.c.l.b16 %v3568
    %v4584 = vunpack.c.h.b16 %v3568
    %v4585 = vunpack.c.l.b16 %v3569
    %v4586 = vunpack.c.h.b16 %v3569
    %v4587 = vunpack.c.l.b16 %v3570
    %v4588 = vunpack.c.h.b16 %v3570
    %v4589 = vunpack.c.l.b16 %v3571
    %v4590 = vunpack.c.h.b16 %v3571
    %v4591 = vunpack.c.l.b16 %v3572
    %v4592 = vunpack.c.h.b16 %v3572
    %v4593 = vunpack.c.l.b16 %v3573
    %v4594 = vunpack.c.h.b16 %v3573
    %v4595 = vunpack.c.l.b16 %v3574
    %v4596 = vunpack.c.h.b16 %v3574
    %v4597 = vunpack.c.l.b16 %v3575
    %v4598 = vunpack.c.h.b16 %v3575
    %v4599 = vunpack.c.l.b16 %v3576
    %v4600 = vunpack.c.h.b16 %v3576
    %v4601 = vunpack.c.l.b16 %v3577
    %v4602 = vunpack.c.h.b16 %v3577
    %v4603 = vunpack.c.l.b16 %v3578
    %v4604 = vunpack.c.h.b16 %v3578
    %v4605 = vunpack.c.l.b16 %v3579
    %v4606 = vunpack.c.h.b16 %v3579
    %v4607 = vunpack.c.l.b16 %v3580
    %v4608 = vunpack.c.h.b16 %v3580
    %v4609 = vunpack.c.l.b16 %v3581
    %v4610 = vunpack.c.h.b16 %v3581
    %v4611 = vunpack.c.l.b16 %v3582
    %v4612 = vunpack.c.h.b16 %v3582
    %v4613 = vunpack.c.l.b16 %v3583
    %v4614 = vunpack.c.h.b16 %v3583
    %v4615 = vunpack.c.l.b16 %v3584
    %v4616 = vunpack.c.h.b16 %v3584
    %v4617 = vunpack.c.l.b16 %v3585
    %v4618 = vunpack.c.h.b16 %v3585
    %v4619 = vunpack.c.l.b16 %v3586
    %v4620 = vunpack.c.h.b16 %v3586
    %v4621 = vunpack.c.l.b16 %v3587
    %v4622 = vunpack.c.h.b16 %v3587
    %v4623 = vunpack.c.l.b16 %v3588
    %v4624 = vunpack.c.h.b16 %v3588
    %v4625 = vunpack.c.l.b16 %v3589
    %v4626 = vunpack.c.h.b16 %v3589
    %v4627 = vunpack.c.l.b16 %v3590
    %v4628 = vunpack.c.h.b16 %v3590
    %v4629 = vunpack.c.l.b16 %v3591
    %v4630 = vunpack.c.h.b16 %v3591
    %v4631 = vunpack.c.l.b16 %v3592
    %v4632 = vunpack.c.h.b16 %v3592
    %v4633 = vunpack.c.l.b16 %v3593
    %v4634 = vunpack.c.h.b16 %v3593
    %v4635 = vunpack.c.l.b16 %v3594
    %v4636 = vunpack.c.h.b16 %v3594
    %v4637 = vunpack.c.l.b16 %v3595
    %v4638 = vunpack.c.h.b16 %v3595
    %v4639 = vunpack.c.l.b16 %v3596
    %v4640 = vunpack.c.h.b16 %v3596
    %v4641 = vunpack.c.l.b16 %v3597
    %v4642 = vunpack.c.h.b16 %v3597
    %v4643 = vunpack.c.l.b16 %v3598
    %v4644 = vunpack.c.h.b16 %v3598
    %v4645 = vunpack.c.l.b16 %v3599
    %v4646 = vunpack.c.h.b16 %v3599
    %v4647 = vunpack.c.l.b16 %v3600
    %v4648 = vunpack.c.h.b16 %v3600
    %v4649 = vunpack.c.l.b16 %v3601
    %v4650 = vunpack.c.h.b16 %v3601
    %v4651 = vunpack.c.l.b16 %v3602
    %v4652 = vunpack.c.h.b16 %v3602
    %v4653 = vunpack.c.l.b16 %v3603
    %v4654 = vunpack.c.h.b16 %v3603
    %v4655 = vunpack.c.l.b16 %v3604
    %v4656 = vunpack.c.h.b16 %v3604
    %v4657 = vunpack.c.l.b16 %v3605
    %v4658 = vunpack.c.h.b16 %v3605
    %v4659 = vunpack.c.l.b16 %v3606
    %v4660 = vunpack.c.h.b16 %v3606
    %v4661 = vunpack.c.l.b16 %v3607
    %v4662 = vunpack.c.h.b16 %v3607
    %v4663 = vunpack.c.l.b16 %v3608
    %v4664 = vunpack.c.h.b16 %v3608
    %v4665 = vunpack.c.l.b16 %v3609
    %v4666 = vunpack.c.h.b16 %v3609
    %v4667 = vunpack.c.l.b16 %v3610
    %v4668 = vunpack.c.h.b16 %v3610
    %v4669 = vunpack.c.l.b16 %v3611
    %v4670 = vunpack.c.h.b16 %v3611
    %v4671 = vunpack.c.l.b16 %v3612
    %v4672 = vunpack.c.h.b16 %v3612
    %v4673 = vunpack.c.l.b16 %v3613
    %v4674 = vunpack.c.h.b16 %v3613
    %v4675 = vunpack.c.l.b16 %v3614
    %v4676 = vunpack.c.h.b16 %v3614
    %v4677 = vunpack.c.l.b16 %v3615
    %v4678 = vunpack.c.h.b16 %v3615
    %v4679 = vunpack.c.l.b16 %v3616
    %v4680 = vunpack.c.h.b16 %v3616
    %v4681 = vunpack.c.l.b16 %v3617
    %v4682 = vunpack.c.h.b16 %v3617
    %v4683 = vunpack.c.l.b16 %v3618
    %v4684 = vunpack.c.h.b16 %v3618
    %v4685 = vunpack.c.l.b16 %v3619
    %v4686 = vunpack.c.h.b16 %v3619
    %v4687 = vunpack.c.l.b16 %v3620
    %v4688 = vunpack.c.h.b16 %v3620
    %v4689 = vunpack.c.l.b16 %v3621
    %v4690 = vunpack.c.h.b16 %v3621
    %v4691 = vunpack.c.l.b16 %v3622
    %v4692 = vunpack.c.h.b16 %v3622
    %v4693 = vunpack.c.l.b16 %v3623
    %v4694 = vunpack.c.h.b16 %v3623
    %v4695 = vunpack.c.l.b16 %v3624
    %v4696 = vunpack.c.h.b16 %v3624
    %v4697 = vunpack.c.l.b16 %v3625
    %v4698 = vunpack.c.h.b16 %v3625
    %v4699 = vunpack.c.l.b16 %v3626
    %v4700 = vunpack.c.h.b16 %v3626
    %v4701 = vunpack.c.l.b16 %v3627
    %v4702 = vunpack.c.h.b16 %v3627
    %v4703 = vunpack.c.l.b16 %v3628
    %v4704 = vunpack.c.h.b16 %v3628
    %v4705 = vunpack.c.l.b16 %v3629
    %v4706 = vunpack.c.h.b16 %v3629
    %v4707 = vunpack.c.l.b16 %v3630
    %v4708 = vunpack.c.h.b16 %v3630
    %v4709 = vunpack.c.l.b16 %v3631
    %v4710 = vunpack.c.h.b16 %v3631
    %v4711 = vunpack.c.l.b16 %v3632
    %v4712 = vunpack.c.h.b16 %v3632
    %v4713 = vunpack.c.l.b16 %v3633
    %v4714 = vunpack.c.h.b16 %v3633
    %v4715 = vunpack.c.l.b16 %v3634
    %v4716 = vunpack.c.h.b16 %v3634
    %v4717 = vunpack.c.l.b16 %v3635
    %v4718 = vunpack.c.h.b16 %v3635
    %v4719 = vunpack.c.l.b16 %v3636
    %v4720 = vunpack.c.h.b16 %v3636
    %v4721 = vunpack.c.l.b16 %v3637
    %v4722 = vunpack.c.h.b16 %v3637
    %v4723 = vunpack.c.l.b16 %v3638
    %v4724 = vunpack.c.h.b16 %v3638
    %v4725 = vunpack.c.l.b16 %v3639
    %v4726 = vunpack.c.h.b16 %v3639
    %v4727 = vunpack.c.l.b16 %v3640
    %v4728 = vunpack.c.h.b16 %v3640
    %v4729 = vunpack.c.l.b16 %v3641
    %v4730 = vunpack.c.h.b16 %v3641
    %v4731 = vunpack.c.l.b16 %v3642
    %v4732 = vunpack.c.h.b16 %v3642
    %v4733 = vunpack.c.l.b16 %v3643
    %v4734 = vunpack.c.h.b16 %v3643
    %v4735 = vunpack.c.l.b16 %v3644
    %v4736 = vunpack.c.h.b16 %v3644
    %v4737 = vunpack.c.l.b16 %v3645
    %v4738 = vunpack.c.h.b16 %v3645
    %v4739 = vunpack.c.l.b16 %v3646
    %v4740 = vunpack.c.h.b16 %v3646
    %v4741 = vunpack.c.l.b16 %v3647
    %v4742 = vunpack.c.h.b16 %v3647
    %v4743 = vunpack.c.l.b16 %v3648
    %v4744 = vunpack.c.h.b16 %v3648
    %v4745 = vunpack.c.l.b16 %v3649
    %v4746 = vunpack.c.h.b16 %v3649
    %v4747 = vunpack.c.l.b16 %v3650
    %v4748 = vunpack.c.h.b16 %v3650
    %v4749 = vunpack.c.l.b16 %v3651
    %v4750 = vunpack.c.h.b16 %v3651
    %v4751 = vunpack.c.l.b16 %v3652
    %v4752 = vunpack.c.h.b16 %v3652
    %v4753 = vunpack.c.l.b16 %v3653
    %v4754 = vunpack.c.h.b16 %v3653
    %v4755 = vunpack.c.l.b16 %v3654
    %v4756 = vunpack.c.h.b16 %v3654
    %v4757 = vunpack.c.l.b16 %v3655
    %v4758 = vunpack.c.h.b16 %v3655
    %v4759 = vunpack.c.l.b16 %v3656
    %v4760 = vunpack.c.h.b16 %v3656
    %v4761 = vunpack.c.l.b16 %v3657
    %v4762 = vunpack.c.h.b16 %v3657
    %v4763 = vunpack.c.l.b16 %v3658
    %v4764 = vunpack.c.h.b16 %v3658
    %v4765 = vunpack.c.l.b16 %v3659
    %v4766 = vunpack.c.h.b16 %v3659
    %v4767 = vunpack.c.l.b16 %v3660
    %v4768 = vunpack.c.h.b16 %v3660
    %v4769 = vunpack.c.l.b16 %v3661
    %v4770 = vunpack.c.h.b16 %v3661
    %v4771 = vunpack.c.l.b16 %v3662
    %v4772 = vunpack.c.h.b16 %v3662
    %v4773 = vunpack.c.l.b16 %v3663
    %v4774 = vunpack.c.h.b16 %v3663
    %v4775 = vunpack.c.l.b16 %v3664
    %v4776 = vunpack.c.h.b16 %v3664
    %v4777 = vunpack.c.l.b16 %v3665
    %v4778 = vunpack.c.h.b16 %v3665
    %v4779 = vunpack.c.l.b16 %v3666
    %v4780 = vunpack.c.h.b16 %v3666
    %v4781 = vunpack.c.l.b16 %v3667
    %v4782 = vunpack.c.h.b16 %v3667
    %v4783 = vunpack.c.l.b16 %v3668
    %v4784 = vunpack.c.h.b16 %v3668
    %v4785 = vunpack.c.l.b16 %v3669
    %v4786 = vunpack.c.h.b16 %v3669
    %v4787 = vunpack.c.l.b16 %v3670
    %v4788 = vunpack.c.h.b16 %v3670
    %v4789 = vunpack.c.l.b16 %v3671
    %v4790 = vunpack.c.h.b16 %v3671
    %v4791 = vunpack.c.l.b16 %v3672
    %v4792 = vunpack.c.h.b16 %v3672
    %v4793 = vunpack.c.l.b16 %v3673
    %v4794 = vunpack.c.h.b16 %v3673
    %v4795 = vunpack.c.l.b16 %v3674
    %v4796 = vunpack.c.h.b16 %v3674
    %v4797 = vunpack.c.l.b16 %v3675
    %v4798 = vunpack.c.h.b16 %v3675
    %v4799 = vunpack.c.l.b16 %v3676
    %v4800 = vunpack.c.h.b16 %v3676
    %v4801 = vunpack.c.l.b16 %v3677
    %v4802 = vunpack.c.h.b16 %v3677
    %v4803 = vunpack.c.l.b16 %v3678
    %v4804 = vunpack.c.h.b16 %v3678
    %v4805 = vunpack.c.l.b16 %v3679
    %v4806 = vunpack.c.h.b16 %v3679
    %v4807 = vunpack.c.l.b16 %v3680
    %v4808 = vunpack.c.h.b16 %v3680
    %v4809 = vunpack.c.l.b16 %v3681
    %v4810 = vunpack.c.h.b16 %v3681
    %v4811 = vunpack.c.l.b16 %v3682
    %v4812 = vunpack.c.h.b16 %v3682
    %v4813 = vunpack.c.l.b16 %v3683
    %v4814 = vunpack.c.h.b16 %v3683
    %v4815 = vunpack.c.l.b16 %v3684
    %v4816 = vunpack.c.h.b16 %v3684
    %v4817 = vunpack.c.l.b16 %v3685
    %v4818 = vunpack.c.h.b16 %v3685
    %v4819 = vunpack.c.l.b16 %v3686
    %v4820 = vunpack.c.h.b16 %v3686
    %v4821 = vunpack.c.l.b16 %v3687
    %v4822 = vunpack.c.h.b16 %v3687
    %v4823 = vunpack.c.l.b16 %v3688
    %v4824 = vunpack.c.h.b16 %v3688
    %v4825 = vunpack.c.l.b16 %v3689
    %v4826 = vunpack.c.h.b16 %v3689
    %v4827 = vunpack.c.l.b16 %v3690
    %v4828 = vunpack.c.h.b16 %v3690
    %v4829 = vunpack.c.l.b16 %v3691
    %v4830 = vunpack.c.h.b16 %v3691
    %v4831 = vunpack.c.l.b16 %v3692
    %v4832 = vunpack.c.h.b16 %v3692
    %v4833 = vunpack.c.l.b16 %v3693
    %v4834 = vunpack.c.h.b16 %v3693
    %v4835 = vunpack.c.l.b16 %v3694
    %v4836 = vunpack.c.h.b16 %v3694
    %v4837 = vunpack.c.l.b16 %v3695
    %v4838 = vunpack.c.h.b16 %v3695
    %v4839 = vunpack.c.l.b16 %v3696
    %v4840 = vunpack.c.h.b16 %v3696
    %v4841 = vunpack.c.l.b16 %v3697
    %v4842 = vunpack.c.h.b16 %v3697
    %v4843 = vunpack.c.l.b16 %v3698
    %v4844 = vunpack.c.h.b16 %v3698
    %v4845 = vunpack.c.l.b16 %v3699
    %v4846 = vunpack.c.h.b16 %v3699
    %v4847 = vunpack.c.l.b16 %v3700
    %v4848 = vunpack.c.h.b16 %v3700
    %v4849 = vunpack.c.l.b16 %v3701
    %v4850 = vunpack.c.h.b16 %v3701
    %v4851 = vunpack.c.l.b16 %v3702
    %v4852 = vunpack.c.h.b16 %v3702
    %v4853 = vunpack.c.l.b16 %v3703
    %v4854 = vunpack.c.h.b16 %v3703
    %v4855 = vunpack.c.l.b16 %v3704
    %v4856 = vunpack.c.h.b16 %v3704
    %v4857 = vunpack.c.l.b16 %v3705
    %v4858 = vunpack.c.h.b16 %v3705
    %v4859 = vunpack.c.l.b16 %v3706
    %v4860 = vunpack.c.h.b16 %v3706
    %v4861 = vunpack.c.l.b16 %v3707
    %v4862 = vunpack.c.h.b16 %v3707
    %v4863 = vunpack.c.l.b16 %v3708
    %v4864 = vunpack.c.h.b16 %v3708
    %v4865 = vunpack.c.l.b16 %v3709
    %v4866 = vunpack.c.h.b16 %v3709
    %v4867 = vunpack.c.l.b16 %v3710
    %v4868 = vunpack.c.h.b16 %v3710
    %v4869 = vunpack.c.l.b16 %v3711
    %v4870 = vunpack.c.h.b16 %v3711
    %v4871 = vunpack.c.l.b16 %v3712
    %v4872 = vunpack.c.h.b16 %v3712
    %v4873 = vunpack.c.l.b16 %v3713
    %v4874 = vunpack.c.h.b16 %v3713
    %v4875 = vunpack.c.l.b16 %v3714
    %v4876 = vunpack.c.h.b16 %v3714
    %v4877 = vunpack.c.l.b16 %v3715
    %v4878 = vunpack.c.h.b16 %v3715
    %v4879 = vunpack.c.l.b16 %v3716
    %v4880 = vunpack.c.h.b16 %v3716
    %v4881 = vunpack.c.l.b16 %v3717
    %v4882 = vunpack.c.h.b16 %v3717
    %v4883 = vunpack.c.l.b16 %v3718
    %v4884 = vunpack.c.h.b16 %v3718
    %v4885 = vunpack.c.l.b16 %v3719
    %v4886 = vunpack.c.h.b16 %v3719
    %v4887 = vunpack.c.l.b16 %v3720
    %v4888 = vunpack.c.h.b16 %v3720
    %v4889 = vunpack.c.l.b16 %v3721
    %v4890 = vunpack.c.h.b16 %v3721
    %v4891 = vunpack.c.l.b16 %v3722
    %v4892 = vunpack.c.h.b16 %v3722
    %v4893 = vunpack.c.l.b16 %v3723
    %v4894 = vunpack.c.h.b16 %v3723
    %v4895 = vunpack.c.l.b16 %v3724
    %v4896 = vunpack.c.h.b16 %v3724
    %v4897 = vunpack.c.l.b16 %v3725
    %v4898 = vunpack.c.h.b16 %v3725
    %v4899 = vunpack.c.l.b16 %v3726
    %v4900 = vunpack.c.h.b16 %v3726
    %v4901 = vunpack.c.l.b16 %v3727
    %v4902 = vunpack.c.h.b16 %v3727
    %v4903 = vunpack.c.l.b16 %v3728
    %v4904 = vunpack.c.h.b16 %v3728
    %v4905 = vunpack.c.l.b16 %v3729
    %v4906 = vunpack.c.h.b16 %v3729
    %v4907 = vunpack.c.l.b16 %v3730
    %v4908 = vunpack.c.h.b16 %v3730
    %v4909 = vunpack.c.l.b16 %v3731
    %v4910 = vunpack.c.h.b16 %v3731
    %v4911 = vunpack.c.l.b16 %v3732
    %v4912 = vunpack.c.h.b16 %v3732
    %v4913 = vunpack.c.l.b16 %v3733
    %v4914 = vunpack.c.h.b16 %v3733
    %v4915 = vunpack.c.l.b16 %v3734
    %v4916 = vunpack.c.h.b16 %v3734
    %v4917 = vunpack.c.l.b16 %v3735
    %v4918 = vunpack.c.h.b16 %v3735
    %v4919 = vunpack.c.l.b16 %v3736
    %v4920 = vunpack.c.h.b16 %v3736
    %v4921 = vunpack.c.l.b16 %v3737
    %v4922 = vunpack.c.h.b16 %v3737
    %v4923 = vunpack.c.l.b16 %v3738
    %v4924 = vunpack.c.h.b16 %v3738
    %v4925 = vunpack.c.l.b16 %v3739
    %v4926 = vunpack.c.h.b16 %v3739
    %v4927 = vunpack.c.l.b16 %v3740
    %v4928 = vunpack.c.h.b16 %v3740
    %v4929 = vunpack.c.l.b16 %v3741
    %v4930 = vunpack.c.h.b16 %v3741
    %v4931 = vunpack.c.l.b16 %v3742
    %v4932 = vunpack.c.h.b16 %v3742
    %v4933 = vunpack.c.l.b16 %v3743
    %v4934 = vunpack.c.h.b16 %v3743
    %v4935 = vunpack.c.l.b16 %v3744
    %v4936 = vunpack.c.h.b16 %v3744
    %v4937 = vunpack.c.l.b16 %v3745
    %v4938 = vunpack.c.h.b16 %v3745
    %v4939 = vunpack.c.l.b16 %v3746
    %v4940 = vunpack.c.h.b16 %v3746
    %v4941 = vunpack.c.l.b16 %v3747
    %v4942 = vunpack.c.h.b16 %v3747
    %v4943 = vunpack.c.l.b16 %v3748
    %v4944 = vunpack.c.h.b16 %v3748
    %v4945 = vunpack.c.l.b16 %v3749
    %v4946 = vunpack.c.h.b16 %v3749
    %v4947 = vunpack.c.l.b16 %v3750
    %v4948 = vunpack.c.h.b16 %v3750
    %v4949 = vunpack.c.l.b16 %v3751
    %v4950 = vunpack.c.h.b16 %v3751
    %v4951 = vunpack.c.l.b16 %v3752
    %v4952 = vunpack.c.h.b16 %v3752
    %v4953 = vunpack.c.l.b16 %v3753
    %v4954 = vunpack.c.h.b16 %v3753
    %v4955 = vunpack.c.l.b16 %v3754
    %v4956 = vunpack.c.h.b16 %v3754
    %v4957 = vunpack.c.l.b16 %v3755
    %v4958 = vunpack.c.h.b16 %v3755
    %v4959 = vunpack.c.l.b16 %v3756
    %v4960 = vunpack.c.h.b16 %v3756
    %v4961 = vunpack.c.l.b16 %v3757
    %v4962 = vunpack.c.h.b16 %v3757
    %v4963 = vunpack.c.l.b16 %v3758
    %v4964 = vunpack.c.h.b16 %v3758
    %v4965 = vunpack.c.l.b16 %v3759
    %v4966 = vunpack.c.h.b16 %v3759
    %v4967 = vunpack.c.l.b16 %v3760
    %v4968 = vunpack.c.h.b16 %v3760
    %v4969 = vunpack.c.l.b16 %v3761
    %v4970 = vunpack.c.h.b16 %v3761
    %v4971 = vunpack.c.l.b16 %v3762
    %v4972 = vunpack.c.h.b16 %v3762
    %v4973 = vunpack.c.l.b16 %v3763
    %v4974 = vunpack.c.h.b16 %v3763
    %v4975 = vunpack.c.l.b16 %v3764
    %v4976 = vunpack.c.h.b16 %v3764
    %v4977 = vunpack.c.l.b16 %v3765
    %v4978 = vunpack.c.h.b16 %v3765
    %v4979 = vunpack.c.l.b16 %v3766
    %v4980 = vunpack.c.h.b16 %v3766
    %v4981 = vunpack.c.l.b16 %v3767
    %v4982 = vunpack.c.h.b16 %v3767
    %v4983 = vunpack.c.l.b16 %v3768
    %v4984 = vunpack.c.h.b16 %v3768
    %v4985 = vunpack.c.l.b16 %v3769
    %v4986 = vunpack.c.h.b16 %v3769
    %v4987 = vunpack.c.l.b16 %v3770
    %v4988 = vunpack.c.h.b16 %v3770
    %v4989 = vunpack.c.l.b16 %v3771
    %v4990 = vunpack.c.h.b16 %v3771
    %v4991 = vunpack.c.l.b16 %v3772
    %v4992 = vunpack.c.h.b16 %v3772
    %v4993 = vunpack.c.l.b16 %v3773
    %v4994 = vunpack.c.h.b16 %v3773
    %v4995 = vunpack.c.l.b16 %v3774
    %v4996 = vunpack.c.h.b16 %v3774
    %v4997 = vunpack.c.l.b16 %v3775
    %v4998 = vunpack.c.h.b16 %v3775
    %v4999 = vunpack.c.l.b16 %v3776
    %v5000 = vunpack.c.h.b16 %v3776
    %v5001 = vunpack.c.l.b16 %v3777
    %v5002 = vunpack.c.h.b16 %v3777
    %v5003 = vunpack.c.l.b16 %v3778
    %v5004 = vunpack.c.h.b16 %v3778
    %v5005 = vunpack.c.l.b16 %v3779
    %v5006 = vunpack.c.h.b16 %v3779
    %v5007 = vunpack.c.l.b16 %v3780
    %v5008 = vunpack.c.h.b16 %v3780
    %v5009 = vunpack.c.l.b16 %v3781
    %v5010 = vunpack.c.h.b16 %v3781
    %v5011 = vunpack.c.l.b16 %v3782
    %v5012 = vunpack.c.h.b16 %v3782
    %v5013 = vunpack.c.l.b16 %v3783
    %v5014 = vunpack.c.h.b16 %v3783
    %v5015 = vunpack.c.l.b16 %v3784
    %v5016 = vunpack.c.h.b16 %v3784
    %v5017 = vunpack.c.l.b16 %v3785
    %v5018 = vunpack.c.h.b16 %v3785
    %v5019 = vunpack.c.l.b16 %v3786
    %v5020 = vunpack.c.h.b16 %v3786
    %v5021 = vunpack.c.l.b16 %v3787
    %v5022 = vunpack.c.h.b16 %v3787
    %v5023 = vunpack.c.l.b16 %v3788
    %v5024 = vunpack.c.h.b16 %v3788
    %v5025 = vunpack.c.l.b16 %v3789
    %v5026 = vunpack.c.h.b16 %v3789
    %v5027 = vunpack.c.l.b16 %v3790
    %v5028 = vunpack.c.h.b16 %v3790
    %v5029 = vunpack.c.l.b16 %v3791
    %v5030 = vunpack.c.h.b16 %v3791
    %v5031 = vunpack.c.l.b16 %v3792
    %v5032 = vunpack.c.h.b16 %v3792
    %v5033 = vunpack.c.l.b16 %v3793
    %v5034 = vunpack.c.h.b16 %v3793
    %v5035 = vunpack.c.l.b16 %v3794
    %v5036 = vunpack.c.h.b16 %v3794
    %v5037 = vunpack.c.l.b16 %v3795
    %v5038 = vunpack.c.h.b16 %v3795
    %v5039 = vunpack.c.l.b16 %v3796
    %v5040 = vunpack.c.h.b16 %v3796
    %v5041 = vunpack.c.l.b16 %v3797
    %v5042 = vunpack.c.h.b16 %v3797
    %v5043 = vunpack.c.l.b16 %v3798
    %v5044 = vunpack.c.h.b16 %v3798
    %v5045 = vunpack.c.l.b16 %v3799
    %v5046 = vunpack.c.h.b16 %v3799
    %v5047 = vunpack.c.l.b16 %v3800
    %v5048 = vunpack.c.h.b16 %v3800
    %v5049 = vunpack.c.l.b16 %v3801
    %v5050 = vunpack.c.h.b16 %v3801
    %v5051 = vunpack.c.l.b16 %v3802
    %v5052 = vunpack.c.h.b16 %v3802
    %v5053 = vunpack.c.l.b16 %v3803
    %v5054 = vunpack.c.h.b16 %v3803
    %v5055 = vunpack.c.l.b16 %v3804
    %v5056 = vunpack.c.h.b16 %v3804
    %v5057 = vunpack.c.l.b16 %v3805
    %v5058 = vunpack.c.h.b16 %v3805
    %v5059 = vunpack.c.l.b16 %v3806
    %v5060 = vunpack.c.h.b16 %v3806
    %v5061 = vunpack.c.l.b16 %v3807
    %v5062 = vunpack.c.h.b16 %v3807
    %v5063 = vunpack.c.l.b16 %v3808
    %v5064 = vunpack.c.h.b16 %v3808
    %v5065 = vunpack.c.l.b16 %v3809
    %v5066 = vunpack.c.h.b16 %v3809
    %v5067 = vunpack.c.l.b16 %v3810
    %v5068 = vunpack.c.h.b16 %v3810
    %v5069 = vunpack.c.l.b16 %v3811
    %v5070 = vunpack.c.h.b16 %v3811
    %v5071 = vunpack.c.l.b16 %v3812
    %v5072 = vunpack.c.h.b16 %v3812
    %v5073 = vunpack.c.l.b16 %v3813
    %v5074 = vunpack.c.h.b16 %v3813
    %v5075 = vunpack.c.l.b16 %v3814
    %v5076 = vunpack.c.h.b16 %v3814
    %v5077 = vunpack.c.l.b16 %v3815
    %v5078 = vunpack.c.h.b16 %v3815
    %v5079 = vunpack.c.l.b16 %v3816
    %v5080 = vunpack.c.h.b16 %v3816
    %v5081 = vunpack.c.l.b16 %v3817
    %v5082 = vunpack.c.h.b16 %v3817
    %v5083 = vunpack.c.l.b16 %v3818
    %v5084 = vunpack.c.h.b16 %v3818
    %v5085 = vunpack.c.l.b16 %v3819
    %v5086 = vunpack.c.h.b16 %v3819
    %v5087 = vunpack.c.l.b16 %v3820
    %v5088 = vunpack.c.h.b16 %v3820
    %v5089 = vunpack.c.l.b16 %v3821
    %v5090 = vunpack.c.h.b16 %v3821
    %v5091 = vunpack.c.l.b16 %v3822
    %v5092 = vunpack.c.h.b16 %v3822
    %v5093 = vunpack.c.l.b16 %v3823
    %v5094 = vunpack.c.h.b16 %v3823
    %v5095 = vunpack.c.l.b16 %v3824
    %v5096 = vunpack.c.h.b16 %v3824
    %v5097 = vunpack.c.l.b16 %v3825
    %v5098 = vunpack.c.h.b16 %v3825
    %v5099 = vunpack.c.l.b16 %v3826
    %v5100 = vunpack.c.h.b16 %v3826
    %v5101 = vunpack.c.l.b16 %v3827
    %v5102 = vunpack.c.h.b16 %v3827
    %v5103 = vunpack.c.l.b16 %v3828
    %v5104 = vunpack.c.h.b16 %v3828
    %v5105 = vunpack.c.l.b16 %v3829
    %v5106 = vunpack.c.h.b16 %v3829
    %v5107 = vunpack.c.l.b16 %v3830
    %v5108 = vunpack.c.h.b16 %v3830
    %v5109 = vunpack.c.l.b16 %v3831
    %v5110 = vunpack.c.h.b16 %v3831
    %v5111 = vunpack.c.l.b16 %v3832
    %v5112 = vunpack.c.h.b16 %v3832
    %v5113 = vunpack.c.l.b16 %v3833
    %v5114 = vunpack.c.h.b16 %v3833
    %v5115 = vunpack.c.l.b16 %v3834
    %v5116 = vunpack.c.h.b16 %v3834
    %v5117 = vunpack.c.l.b16 %v3835
    %v5118 = vunpack.c.h.b16 %v3835
    %v5119 = vunpack.c.l.b16 %v3836
    %v5120 = vunpack.c.h.b16 %v3836
    %v5121 = vunpack.c.l.b16 %v3837
    %v5122 = vunpack.c.h.b16 %v3837
    %v5123 = vunpack.c.l.b16 %v3838
    %v5124 = vunpack.c.h.b16 %v3838
    %v5125 = vunpack.c.l.b16 %v3839
    %v5126 = vunpack.c.h.b16 %v3839
    %v5127 = vunpack.c.l.b16 %v3840
    %v5128 = vunpack.c.h.b16 %v3840
    %v5129 = vunpack.c.l.b16 %v3841
    %v5130 = vunpack.c.h.b16 %v3841
    %v5131 = vunpack.c.l.b16 %v3842
    %v5132 = vunpack.c.h.b16 %v3842
    %v5133 = vunpack.c.l.b16 %v3843
    %v5134 = vunpack.c.h.b16 %v3843
    %v5135 = vunpack.c.l.b16 %v3844
    %v5136 = vunpack.c.h.b16 %v3844
    %v5137 = vunpack.c.l.b16 %v3845
    %v5138 = vunpack.c.h.b16 %v3845
    %v5139 = vunpack.c.l.b16 %v3846
    %v5140 = vunpack.c.h.b16 %v3846
    %v5141 = vunpack.c.l.b16 %v3847
    %v5142 = vunpack.c.h.b16 %v3847
    %v5143 = vunpack.c.l.b16 %v3848
    %v5144 = vunpack.c.h.b16 %v3848
    %v5145 = vunpack.c.l.b16 %v3849
    %v5146 = vunpack.c.h.b16 %v3849
    %v5147 = vunpack.c.l.b16 %v3850
    %v5148 = vunpack.c.h.b16 %v3850
    %v5149 = vunpack.c.l.b16 %v3851
    %v5150 = vunpack.c.h.b16 %v3851
    %v5151 = vunpack.c.l.b16 %v3852
    %v5152 = vunpack.c.h.b16 %v3852
    %v5153 = vunpack.c.l.b16 %v3853
    %v5154 = vunpack.c.h.b16 %v3853
    %v5155 = vunpack.c.l.b16 %v3854
    %v5156 = vunpack.c.h.b16 %v3854
    %v5157 = vunpack.c.l.b16 %v3855
    %v5158 = vunpack.c.h.b16 %v3855
    %v5159 = vunpack.c.l.b16 %v3856
    %v5160 = vunpack.c.h.b16 %v3856
    %v5161 = vunpack.c.l.b16 %v3857
    %v5162 = vunpack.c.h.b16 %v3857
    %v5163 = vunpack.c.l.b16 %v3858
    %v5164 = vunpack.c.h.b16 %v3858
    %v5165 = vunpack.c.l.b16 %v3859
    %v5166 = vunpack.c.h.b16 %v3859
    %v5167 = vunpack.c.l.b16 %v3860
    %v5168 = vunpack.c.h.b16 %v3860
    %v5169 = vunpack.c.l.b16 %v3861
    %v5170 = vunpack.c.h.b16 %v3861
    %v5171 = vunpack.c.l.b16 %v3862
    %v5172 = vunpack.c.h.b16 %v3862
    %v5173 = vunpack.c.l.b16 %v3863
    %v5174 = vunpack.c.h.b16 %v3863
    %v5175 = vunpack.c.l.b16 %v3864
    %v5176 = vunpack.c.h.b16 %v3864
    %v5177 = vunpack.c.l.b16 %v3865
    %v5178 = vunpack.c.h.b16 %v3865
    %v5179 = vunpack.c.l.b16 %v3866
    %v5180 = vunpack.c.h.b16 %v3866
    %v5181 = vunpack.c.l.b16 %v3867
    %v5182 = vunpack.c.h.b16 %v3867
    %v5183 = vunpack.c.l.b16 %v3868
    %v5184 = vunpack.c.h.b16 %v3868
    %v5185 = vunpack.c.l.b16 %v3869
    %v5186 = vunpack.c.h.b16 %v3869
    %v5187 = vunpack.c.l.b16 %v3870
    %v5188 = vunpack.c.h.b16 %v3870
    %v5189 = vunpack.c.l.b16 %v3871
    %v5190 = vunpack.c.h.b16 %v3871
    %v5191 = vunpack.c.l.b16 %v3872
    %v5192 = vunpack.c.h.b16 %v3872
    %v5193 = vunpack.c.l.b16 %v3873
    %v5194 = vunpack.c.h.b16 %v3873
    %v5195 = vunpack.c.l.b16 %v3874
    %v5196 = vunpack.c.h.b16 %v3874
    %v5197 = vunpack.c.l.b16 %v3875
    %v5198 = vunpack.c.h.b16 %v3875
    %v5199 = vunpack.c.l.b16 %v3876
    %v5200 = vunpack.c.h.b16 %v3876
    %v5201 = vunpack.c.l.b16 %v3877
    %v5202 = vunpack.c.h.b16 %v3877
    %v5203 = vunpack.c.l.b16 %v3878
    %v5204 = vunpack.c.h.b16 %v3878
    %v5205 = vunpack.c.l.b16 %v3879
    %v5206 = vunpack.c.h.b16 %v3879
    %v5207 = vunpack.c.l.b16 %v3880
    %v5208 = vunpack.c.h.b16 %v3880
    %v5209 = vunpack.c.l.b16 %v3881
    %v5210 = vunpack.c.h.b16 %v3881
    %v5211 = vunpack.c.l.b16 %v3882
    %v5212 = vunpack.c.h.b16 %v3882
    %v5213 = vunpack.c.l.b16 %v3883
    %v5214 = vunpack.c.h.b16 %v3883
    %v5215 = vunpack.c.l.b16 %v3884
    %v5216 = vunpack.c.h.b16 %v3884
    %v5217 = vunpack.c.l.b16 %v3885
    %v5218 = vunpack.c.h.b16 %v3885
    %v5219 = vunpack.c.l.b16 %v3886
    %v5220 = vunpack.c.h.b16 %v3886
    %v5221 = vunpack.c.l.b16 %v3887
    %v5222 = vunpack.c.h.b16 %v3887
    %v5223 = vunpack.c.l.b16 %v3888
    %v5224 = vunpack.c.h.b16 %v3888
    %v5225 = vunpack.c.l.b16 %v3889
    %v5226 = vunpack.c.h.b16 %v3889
    %v5227 = vunpack.c.l.b16 %v3890
    %v5228 = vunpack.c.h.b16 %v3890
    %v5229 = vunpack.c.l.b16 %v3891
    %v5230 = vunpack.c.h.b16 %v3891
    %v5231 = vunpack.c.l.b16 %v3892
    %v5232 = vunpack.c.h.b16 %v3892
    %v5233 = vunpack.c.l.b16 %v3893
    %v5234 = vunpack.c.h.b16 %v3893
    %v5235 = vunpack.c.l.b16 %v3894
    %v5236 = vunpack.c.h.b16 %v3894
    %v5237 = vunpack.c.l.b16 %v3895
    %v5238 = vunpack.c.h.b16 %v3895
    %v5239 = vunpack.c.l.b16 %v3896
    %v5240 = vunpack.c.h.b16 %v3896
    %v5241 = vunpack.c.l.b16 %v3897
    %v5242 = vunpack.c.h.b16 %v3897
    %v5243 = vunpack.c.l.b16 %v3898
    %v5244 = vunpack.c.h.b16 %v3898
    %v5245 = vunpack.c.l.b16 %v3899
    %v5246 = vunpack.c.h.b16 %v3899
    %v5247 = vunpack.c.l.b16 %v3900
    %v5248 = vunpack.c.h.b16 %v3900
    %v5249 = vunpack.c.l.b16 %v3901
    %v5250 = vunpack.c.h.b16 %v3901
    %v5251 = vunpack.c.l.b16 %v3902
    %v5252 = vunpack.c.h.b16 %v3902
    %v5253 = vunpack.c.l.b16 %v3903
    %v5254 = vunpack.c.h.b16 %v3903
    %v5255 = vunpack.c.l.b16 %v3904
    %v5256 = vunpack.c.h.b16 %v3904
    %v5257 = vunpack.c.l.b16 %v3905
    %v5258 = vunpack.c.h.b16 %v3905
    %v5259 = vunpack.c.l.b16 %v3906
    %v5260 = vunpack.c.h.b16 %v3906
    %v5261 = vunpack.c.l.b16 %v3907
    %v5262 = vunpack.c.h.b16 %v3907
    %v5263 = vunpack.c.l.b16 %v3908
    %v5264 = vunpack.c.h.b16 %v3908
    %v5265 = vunpack.c.l.b16 %v3909
    %v5266 = vunpack.c.h.b16 %v3909
    %v5267 = vunpack.c.l.b16 %v3910
    %v5268 = vunpack.c.h.b16 %v3910
    %v5269 = vunpack.c.l.b16 %v3911
    %v5270 = vunpack.c.h.b16 %v3911
    %v5271 = vunpack.c.l.b16 %v3912
    %v5272 = vunpack.c.h.b16 %v3912
    %v5273 = vunpack.c.l.b16 %v3913
    %v5274 = vunpack.c.h.b16 %v3913
    %v5275 = vunpack.c.l.b16 %v3914
    %v5276 = vunpack.c.h.b16 %v3914
    %v5277 = vunpack.c.l.b16 %v3915
    %v5278 = vunpack.c.h.b16 %v3915
    %v5279 = vunpack.c.l.b16 %v3916
    %v5280 = vunpack.c.h.b16 %v3916
    %v5281 = vunpack.c.l.b16 %v3917
    %v5282 = vunpack.c.h.b16 %v3917
    %v5283 = vunpack.c.l.b16 %v3918
    %v5284 = vunpack.c.h.b16 %v3918
    %v5285 = vunpack.c.l.b16 %v3919
    %v5286 = vunpack.c.h.b16 %v3919
    %v5287 = vunpack.c.l.b16 %v3920
    %v5288 = vunpack.c.h.b16 %v3920
    %v5289 = vunpack.c.l.b16 %v3921
    %v5290 = vunpack.c.h.b16 %v3921
    %v5291 = vunpack.c.l.b16 %v3922
    %v5292 = vunpack.c.h.b16 %v3922
    %v5293 = vunpack.c.l.b16 %v3923
    %v5294 = vunpack.c.h.b16 %v3923
    %v5295 = vunpack.c.l.b16 %v3924
    %v5296 = vunpack.c.h.b16 %v3924
    %v5297 = vunpack.c.l.b16 %v3925
    %v5298 = vunpack.c.h.b16 %v3925
    %v5299 = vunpack.c.l.b16 %v3926
    %v5300 = vunpack.c.h.b16 %v3926
    %v5301 = vunpack.c.l.b16 %v3927
    %v5302 = vunpack.c.h.b16 %v3927
    %v5303 = vunpack.c.l.b16 %v3928
    %v5304 = vunpack.c.h.b16 %v3928
    %v5305 = vunpack.c.l.b16 %v3929
    %v5306 = vunpack.c.h.b16 %v3929
    %v5307 = vunpack.c.l.b16 %v3930
    %v5308 = vunpack.c.h.b16 %v3930
    %v5309 = vunpack.c.l.b16 %v3931
    %v5310 = vunpack.c.h.b16 %v3931
    %v5311 = vunpack.c.l.b16 %v3932
    %v5312 = vunpack.c.h.b16 %v3932
    %v5313 = vunpack.c.l.b16 %v3933
    %v5314 = vunpack.c.h.b16 %v3933
    %v5315 = vunpack.c.l.b16 %v3934
    %v5316 = vunpack.c.h.b16 %v3934
    %v5317 = vunpack.c.l.b16 %v3935
    %v5318 = vunpack.c.h.b16 %v3935
    %v5319 = vunpack.c.l.b16 %v3936
    %v5320 = vunpack.c.h.b16 %v3936
    %v5321 = vunpack.c.l.b16 %v3937
    %v5322 = vunpack.c.h.b16 %v3937
    %v5323 = vunpack.c.l.b16 %v3938
    %v5324 = vunpack.c.h.b16 %v3938
    %v5325 = vunpack.c.l.b16 %v3939
    %v5326 = vunpack.c.h.b16 %v3939
    %v5327 = vunpack.c.l.b16 %v3940
    %v5328 = vunpack.c.h.b16 %v3940
    %v5329 = vunpack.c.l.b16 %v3941
    %v5330 = vunpack.c.h.b16 %v3941
    %v5331 = vunpack.c.l.b16 %v3942
    %v5332 = vunpack.c.h.b16 %v3942
    %v5333 = vunpack.c.l.b16 %v3943
    %v5334 = vunpack.c.h.b16 %v3943
    %v5335 = vunpack.c.l.b16 %v3944
    %v5336 = vunpack.c.h.b16 %v3944
    %v5337 = vunpack.c.l.b16 %v3945
    %v5338 = vunpack.c.h.b16 %v3945
    %v5339 = vunpack.c.l.b16 %v3946
    %v5340 = vunpack.c.h.b16 %v3946
    %v5341 = vunpack.c.l.b16 %v3947
    %v5342 = vunpack.c.h.b16 %v3947
    %v5343 = vunpack.c.l.b16 %v3948
    %v5344 = vunpack.c.h.b16 %v3948
    %v5345 = vunpack.c.l.b16 %v3949
    %v5346 = vunpack.c.h.b16 %v3949
    %v5347 = vunpack.c.l.b16 %v3950
    %v5348 = vunpack.c.h.b16 %v3950
    %v5349 = vunpack.c.l.b16 %v3951
    %v5350 = vunpack.c.h.b16 %v3951
    %v5351 = vunpack.c.l.b16 %v3952
    %v5352 = vunpack.c.h.b16 %v3952
    %v5353 = vunpack.c.l.b16 %v3953
    %v5354 = vunpack.c.h.b16 %v3953
    %v5355 = vunpack.c.l.b16 %v3954
    %v5356 = vunpack.c.h.b16 %v3954
    %v5357 = vpack.c.b16 %v4559, %v4557
    %v5358 = vpack.c.b16 %v4560, %v4558
    %v5359 = vpack.c.b16 %v4563, %v4561
    %v5360 = vpack.c.b16 %v4564, %v4562
    %v5361 = vpack.c.b16 %v4567, %v4565
    %v5362 = vpack.c.b16 %v4568, %v4566
    %v5363 = vpack.c.b16 %v4571, %v4569
    %v5364 = vpack.c.b16 %v4572, %v4570
    %v5365 = vpack.c.b16 %v4575, %v4573
    %v5366 = vpack.c.b16 %v4576, %v4574
    %v5367 = vpack.c.b16 %v4579, %v4577
    %v5368 = vpack.c.b16 %v4580, %v4578
    %v5369 = vpack.c.b16 %v4583, %v4581
    %v5370 = vpack.c.b16 %v4584, %v4582
    %v5371 = vpack.c.b16 %v4587, %v4585
    %v5372 = vpack.c.b16 %v4588, %v4586
    %v5373 = vpack.c.b16 %v4591, %v4589
    %v5374 = vpack.c.b16 %v4592, %v4590
    %v5375 = vpack.c.b16 %v4595, %v4593
    %v5376 = vpack.c.b16 %v4596, %v4594
    %v5377 = vpack.c.b16 %v4599, %v4597
    %v5378 = vpack.c.b16 %v4600, %v4598
    %v5379 = vpack.c.b16 %v4603, %v4601
    %v5380 = vpack.c.b16 %v4604, %v4602
    %v5381 = vpack.c.b16 %v4607, %v4605
    %v5382 = vpack.c.b16 %v4608, %v4606
    %v5383 = vpack.c.b16 %v4611, %v4609
    %v5384 = vpack.c.b16 %v4612, %v4610
    %v5385 = vpack.c.b16 %v4615, %v4613
    %v5386 = vpack.c.b16 %v4616, %v4614
    %v5387 = vpack.c.b16 %v4619, %v4617
    %v5388 = vpack.c.b16 %v4620, %v4618
    %v5389 = vpack.c.b16 %v4623, %v4621
    %v5390 = vpack.c.b16 %v4624, %v4622
    %v5391 = vpack.c.b16 %v4627, %v4625
    %v5392 = vpack.c.b16 %v4628, %v4626
    %v5393 = vpack.c.b16 %v4631, %v4629
    %v5394 = vpack.c.b16 %v4632, %v4630
    %v5395 = vpack.c.b16 %v4635, %v4633
    %v5396 = vpack.c.b16 %v4636, %v4634
    %v5397 = vpack.c.b16 %v4639, %v4637
    %v5398 = vpack.c.b16 %v4640, %v4638
    %v5399 = vpack.c.b16 %v4643, %v4641
    %v5400 = vpack.c.b16 %v4644, %v4642
    %v5401 = vpack.c.b16 %v4647, %v4645
    %v5402 = vpack.c.b16 %v4648, %v4646
    %v5403 = vpack.c.b16 %v4651, %v4649
    %v5404 = vpack.c.b16 %v4652, %v4650
    %v5405 = vpack.c.b16 %v4655, %v4653
    %v5406 = vpack.c.b16 %v4656, %v4654
    %v5407 = vpack.c.b16 %v4659, %v4657
    %v5408 = vpack.c.b16 %v4660, %v4658
    %v5409 = vpack.c.b16 %v4663, %v4661
    %v5410 = vpack.c.b16 %v4664, %v4662
    %v5411 = vpack.c.b16 %v4667, %v4665
    %v5412 = vpack.c.b16 %v4668, %v4666
    %v5413 = vpack.c.b16 %v4671, %v4669
    %v5414 = vpack.c.b16 %v4672, %v4670
    %v5415 = vpack.c.b16 %v4675, %v4673
    %v5416 = vpack.c.b16 %v4676, %v4674
    %v5417 = vpack.c.b16 %v4679, %v4677
    %v5418 = vpack.c.b16 %v4680, %v4678
    %v5419 = vpack.c.b16 %v4683, %v4681
    %v5420 = vpack.c.b16 %v4684, %v4682
    %v5421 = vpack.c.b16 %v4687, %v4685
    %v5422 = vpack.c.b16 %v4688, %v4686
    %v5423 = vpack.c.b16 %v4691, %v4689
    %v5424 = vpack.c.b16 %v4692, %v4690
    %v5425 = vpack.c.b16 %v4695, %v4693
    %v5426 = vpack.c.b16 %v4696, %v4694
    %v5427 = vpack.c.b16 %v4699, %v4697
    %v5428 = vpack.c.b16 %v4700, %v4698
    %v5429 = vpack.c.b16 %v4703, %v4701
    %v5430 = vpack.c.b16 %v4704, %v4702
    %v5431 = vpack.c.b16 %v4707, %v4705
    %v5432 = vpack.c.b16 %v4708, %v4706
    %v5433 = vpack.c.b16 %v4711, %v4709
    %v5434 = vpack.c.b16 %v4712, %v4710
    %v5435 = vpack.c.b16 %v4715, %v4713
    %v5436 = vpack.c.b16 %v4716, %v4714
    %v5437 = vpack.c.b16 %v4719, %v4717
    %v5438 = vpack.c.b16 %v4720, %v4718
    %v5439 = vpack.c.b16 %v4723, %v4721
    %v5440 = vpack.c.b16 %v4724, %v4722
    %v5441 = vpack.c.b16 %v4727, %v4725
    %v5442 = vpack.c.b16 %v4728, %v4726
    %v5443 = vpack.c.b16 %v4731, %v4729
    %v5444 = vpack.c.b16 %v4732, %v4730
    %v5445 = vpack.c.b16 %v4735, %v4733
    %v5446 = vpack.c.b16 %v4736, %v4734
    %v5447 = vpack.c.b16 %v4739, %v4737
    %v5448 = vpack.c.b16 %v4740, %v4738
    %v5449 = vpack.c.b16 %v4743, %v4741
    %v5450 = vpack.c.b16 %v4744, %v4742
    %v5451 = vpack.c.b16 %v4747, %v4745
    %v5452 = vpack.c.b16 %v4748, %v4746
    %v5453 = vpack.c.b16 %v4751, %v4749
    %v5454 = vpack.c.b16 %v4752, %v4750
    %v5455 = vpack.c.b16 %v4755, %v4753
    %v5456 = vpack.c.b16 %v4756, %v4754
    %v5457 = vpack.c.b16 %v4759, %v4757
    %v5458 = vpack.c.b16 %v4760, %v4758
    %v5459 = vpack.c.b16 %v4763, %v4761
    %v5460 = vpack.c.b16 %v4764, %v4762
    %v5461 = vpack.c.b16 %v4767, %v4765
    %v5462 = vpack.c.b16 %v4768, %v4766
    %v5463 = vpack.c.b16 %v4771, %v4769
    %v5464 = vpack.c.b16 %v4772, %v4770
    %v5465 = vpack.c.b16 %v4775, %v4773
    %v5466 = vpack.c.b16 %v4776, %v4774
    %v5467 = vpack.c.b16 %v4779, %v4777
    %v5468 = vpack.c.b16 %v4780, %v4778
    %v5469 = vpack.c.b16 %v4783, %v4781
    %v5470 = vpack.c.b16 %v4784, %v4782
    %v5471 = vpack.c.b16 %v4787, %v4785
    %v5472 = vpack.c.b16 %v4788, %v4786
    %v5473 = vpack.c.b16 %v4791, %v4789
    %v5474 = vpack.c.b16 %v4792, %v4790
    %v5475 = vpack.c.b16 %v4795, %v4793
    %v5476 = vpack.c.b16 %v4796, %v4794
    %v5477 = vpack.c.b16 %v4799, %v4797
    %v5478 = vpack.c.b16 %v4800, %v4798
    %v5479 = vpack.c.b16 %v4803, %v4801
    %v5480 = vpack.c.b16 %v4804, %v4802
    %v5481 = vpack.c.b16 %v4807, %v4805
    %v5482 = vpack.c.b16 %v4808, %v4806
    %v5483 = vpack.c.b16 %v4811, %v4809
    %v5484 = vpack.c.b16 %v4812, %v4810
    %v5485 = vpack.c.b16 %v4815, %v4813
    %v5486 = vpack.c.b16 %v4816, %v4814
    %v5487 = vpack.c.b16 %v4819, %v4817
    %v5488 = vpack.c.b16 %v4820, %v4818
    %v5489 = vpack.c.b16 %v4823, %v4821
    %v5490 = vpack.c.b16 %v4824, %v4822
    %v5491 = vpack.c.b16 %v4827, %v4825
    %v5492 = vpack.c.b16 %v4828, %v4826
    %v5493 = vpack.c.b16 %v4831, %v4829
    %v5494 = vpack.c.b16 %v4832, %v4830
    %v5495 = vpack.c.b16 %v4835, %v4833
    %v5496 = vpack.c.b16 %v4836, %v4834
    %v5497 = vpack.c.b16 %v4839, %v4837
    %v5498 = vpack.c.b16 %v4840, %v4838
    %v5499 = vpack.c.b16 %v4843, %v4841
    %v5500 = vpack.c.b16 %v4844, %v4842
    %v5501 = vpack.c.b16 %v4847, %v4845
    %v5502 = vpack.c.b16 %v4848, %v4846
    %v5503 = vpack.c.b16 %v4851, %v4849
    %v5504 = vpack.c.b16 %v4852, %v4850
    %v5505 = vpack.c.b16 %v4855, %v4853
    %v5506 = vpack.c.b16 %v4856, %v4854
    %v5507 = vpack.c.b16 %v4859, %v4857
    %v5508 = vpack.c.b16 %v4860, %v4858
    %v5509 = vpack.c.b16 %v4863, %v4861
    %v5510 = vpack.c.b16 %v4864, %v4862
    %v5511 = vpack.c.b16 %v4867, %v4865
    %v5512 = vpack.c.b16 %v4868, %v4866
    %v5513 = vpack.c.b16 %v4871, %v4869
    %v5514 = vpack.c.b16 %v4872, %v4870
    %v5515 = vpack.c.b16 %v4875, %v4873
    %v5516 = vpack.c.b16 %v4876, %v4874
    %v5517 = vpack.c.b16 %v4879, %v4877
    %v5518 = vpack.c.b16 %v4880, %v4878
    %v5519 = vpack.c.b16 %v4883, %v4881
    %v5520 = vpack.c.b16 %v4884, %v4882
    %v5521 = vpack.c.b16 %v4887, %v4885
    %v5522 = vpack.c.b16 %v4888, %v4886
    %v5523 = vpack.c.b16 %v4891, %v4889
    %v5524 = vpack.c.b16 %v4892, %v4890
    %v5525 = vpack.c.b16 %v4895, %v4893
    %v5526 = vpack.c.b16 %v4896, %v4894
    %v5527 = vpack.c.b16 %v4899, %v4897
    %v5528 = vpack.c.b16 %v4900, %v4898
    %v5529 = vpack.c.b16 %v4903, %v4901
    %v5530 = vpack.c.b16 %v4904, %v4902
    %v5531 = vpack.c.b16 %v4907, %v4905
    %v5532 = vpack.c.b16 %v4908, %v4906
    %v5533 = vpack.c.b16 %v4911, %v4909
    %v5534 = vpack.c.b16 %v4912, %v4910
    %v5535 = vpack.c.b16 %v4915, %v4913
    %v5536 = vpack.c.b16 %v4916, %v4914
    %v5537 = vpack.c.b16 %v4919, %v4917
    %v5538 = vpack.c.b16 %v4920, %v4918
    %v5539 = vpack.c.b16 %v4923, %v4921
    %v5540 = vpack.c.b16 %v4924, %v4922
    %v5541 = vpack.c.b16 %v4927, %v4925
    %v5542 = vpack.c.b16 %v4928, %v4926
    %v5543 = vpack.c.b16 %v4931, %v4929
    %v5544 = vpack.c.b16 %v4932, %v4930
    %v5545 = vpack.c.b16 %v4935, %v4933
    %v5546 = vpack.c.b16 %v4936, %v4934
    %v5547 = vpack.c.b16 %v4939, %v4937
    %v5548 = vpack.c.b16 %v4940, %v4938
    %v5549 = vpack.c.b16 %v4943, %v4941
    %v5550 = vpack.c.b16 %v4944, %v4942
    %v5551 = vpack.c.b16 %v4947, %v4945
    %v5552 = vpack.c.b16 %v4948, %v4946
    %v5553 = vpack.c.b16 %v4951, %v4949
    %v5554 = vpack.c.b16 %v4952, %v4950
    %v5555 = vpack.c.b16 %v4955, %v4953
    %v5556 = vpack.c.b16 %v4956, %v4954
    %v5557 = vpack.c.b16 %v4959, %v4957
    %v5558 = vpack.c.b16 %v4960, %v4958
    %v5559 = vpack.c.b16 %v4963, %v4961
    %v5560 = vpack.c.b16 %v4964, %v4962
    %v5561 = vpack.c.b16 %v4967, %v4965
    %v5562 = vpack.c.b16 %v4968, %v4966
    %v5563 = vpack.c.b16 %v4971, %v4969
    %v5564 = vpack.c.b16 %v4972, %v4970
    %v5565 = vpack.c.b16 %v4975, %v4973
    %v5566 = vpack.c.b16 %v4976, %v4974
    %v5567 = vpack.c.b16 %v4979, %v4977
    %v5568 = vpack.c.b16 %v4980, %v4978
    %v5569 = vpack.c.b16 %v4983, %v4981
    %v5570 = vpack.c.b16 %v4984, %v4982
    %v5571 = vpack.c.b16 %v4987, %v4985
    %v5572 = vpack.c.b16 %v4988, %v4986
    %v5573 = vpack.c.b16 %v4991, %v4989
    %v5574 = vpack.c.b16 %v4992, %v4990
    %v5575 = vpack.c.b16 %v4995, %v4993
    %v5576 = vpack.c.b16 %v4996, %v4994
    %v5577 = vpack.c.b16 %v4999, %v4997
    %v5578 = vpack.c.b16 %v5000, %v4998
    %v5579 = vpack.c.b16 %v5003, %v5001
    %v5580 = vpack.c.b16 %v5004, %v5002
    %v5581 = vpack.c.b16 %v5007, %v5005
    %v5582 = vpack.c.b16 %v5008, %v5006
    %v5583 = vpack.c.b16 %v5011, %v5009
    %v5584 = vpack.c.b16 %v5012, %v5010
    %v5585 = vpack.c.b16 %v5015, %v5013
    %v5586 = vpack.c.b16 %v5016, %v5014
    %v5587 = vpack.c.b16 %v5019, %v5017
    %v5588 = vpack.c.b16 %v5020, %v5018
    %v5589 = vpack.c.b16 %v5023, %v5021
    %v5590 = vpack.c.b16 %v5024, %v5022
    %v5591 = vpack.c.b16 %v5027, %v5025
    %v5592 = vpack.c.b16 %v5028, %v5026
    %v5593 = vpack.c.b16 %v5031, %v5029
    %v5594 = vpack.c.b16 %v5032, %v5030
    %v5595 = vpack.c.b16 %v5035, %v5033
    %v5596 = vpack.c.b16 %v5036, %v5034
    %v5597 = vpack.c.b16 %v5039, %v5037
    %v5598 = vpack.c.b16 %v5040, %v5038
    %v5599 = vpack.c.b16 %v5043, %v5041
    %v5600 = vpack.c.b16 %v5044, %v5042
    %v5601 = vpack.c.b16 %v5047, %v5045
    %v5602 = vpack.c.b16 %v5048, %v5046
    %v5603 = vpack.c.b16 %v5051, %v5049
    %v5604 = vpack.c.b16 %v5052, %v5050
    %v5605 = vpack.c.b16 %v5055, %v5053
    %v5606 = vpack.c.b16 %v5056, %v5054
    %v5607 = vpack.c.b16 %v5059, %v5057
    %v5608 = vpack.c.b16 %v5060, %v5058
    %v5609 = vpack.c.b16 %v5063, %v5061
    %v5610 = vpack.c.b16 %v5064, %v5062
    %v5611 = vpack.c.b16 %v5067, %v5065
    %v5612 = vpack.c.b16 %v5068, %v5066
    %v5613 = vpack.c.b16 %v5071, %v5069
    %v5614 = vpack.c.b16 %v5072, %v5070
    %v5615 = vpack.c.b16 %v5075, %v5073
    %v5616 = vpack.c.b16 %v5076, %v5074
    %v5617 = vpack.c.b16 %v5079, %v5077
    %v5618 = vpack.c.b16 %v5080, %v5078
    %v5619 = vpack.c.b16 %v5083, %v5081
    %v5620 = vpack.c.b16 %v5084, %v5082
    %v5621 = vpack.c.b16 %v5087, %v5085
    %v5622 = vpack.c.b16 %v5088, %v5086
    %v5623 = vpack.c.b16 %v5091, %v5089
    %v5624 = vpack.c.b16 %v5092, %v5090
    %v5625 = vpack.c.b16 %v5095, %v5093
    %v5626 = vpack.c.b16 %v5096, %v5094
    %v5627 = vpack.c.b16 %v5099, %v5097
    %v5628 = vpack.c.b16 %v5100, %v5098
    %v5629 = vpack.c.b16 %v5103, %v5101
    %v5630 = vpack.c.b16 %v5104, %v5102
    %v5631 = vpack.c.b16 %v5107, %v5105
    %v5632 = vpack.c.b16 %v5108, %v5106
    %v5633 = vpack.c.b16 %v5111, %v5109
    %v5634 = vpack.c.b16 %v5112, %v5110
    %v5635 = vpack.c.b16 %v5115, %v5113
    %v5636 = vpack.c.b16 %v5116, %v5114
    %v5637 = vpack.c.b16 %v5119, %v5117
    %v5638 = vpack.c.b16 %v5120, %v5118
    %v5639 = vpack.c.b16 %v5123, %v5121
    %v5640 = vpack.c.b16 %v5124, %v5122
    %v5641 = vpack.c.b16 %v5127, %v5125
    %v5642 = vpack.c.b16 %v5128, %v5126
    %v5643 = vpack.c.b16 %v5131, %v5129
    %v5644 = vpack.c.b16 %v5132, %v5130
    %v5645 = vpack.c.b16 %v5135, %v5133
    %v5646 = vpack.c.b16 %v5136, %v5134
    %v5647 = vpack.c.b16 %v5139, %v5137
    %v5648 = vpack.c.b16 %v5140, %v5138
    %v5649 = vpack.c.b16 %v5143, %v5141
    %v5650 = vpack.c.b16 %v5144, %v5142
    %v5651 = vpack.c.b16 %v5147, %v5145
    %v5652 = vpack.c.b16 %v5148, %v5146
    %v5653 = vpack.c.b16 %v5151, %v5149
    %v5654 = vpack.c.b16 %v5152, %v5150
    %v5655 = vpack.c.b16 %v5155, %v5153
    %v5656 = vpack.c.b16 %v5156, %v5154
    %v5657 = vpack.c.b16 %v5159, %v5157
    %v5658 = vpack.c.b16 %v5160, %v5158
    %v5659 = vpack.c.b16 %v5163, %v5161
    %v5660 = vpack.c.b16 %v5164, %v5162
    %v5661 = vpack.c.b16 %v5167, %v5165
    %v5662 = vpack.c.b16 %v5168, %v5166
    %v5663 = vpack.c.b16 %v5171, %v5169
    %v5664 = vpack.c.b16 %v5172, %v5170
    %v5665 = vpack.c.b16 %v5175, %v5173
    %v5666 = vpack.c.b16 %v5176, %v5174
    %v5667 = vpack.c.b16 %v5179, %v5177
    %v5668 = vpack.c.b16 %v5180, %v5178
    %v5669 = vpack.c.b16 %v5183, %v5181
    %v5670 = vpack.c.b16 %v5184, %v5182
    %v5671 = vpack.c.b16 %v5187, %v5185
    %v5672 = vpack.c.b16 %v5188, %v5186
    %v5673 = vpack.c.b16 %v5191, %v5189
    %v5674 = vpack.c.b16 %v5192, %v5190
    %v5675 = vpack.c.b16 %v5195, %v5193
    %v5676 = vpack.c.b16 %v5196, %v5194
    %v5677 = vpack.c.b16 %v5199, %v5197
    %v5678 = vpack.c.b16 %v5200, %v5198
    %v5679 = vpack.c.b16 %v5203, %v5201
    %v5680 = vpack.c.b16 %v5204, %v5202
    %v5681 = vpack.c.b16 %v5207, %v5205
    %v5682 = vpack.c.b16 %v5208, %v5206
    %v5683 = vpack.c.b16 %v5211, %v5209
    %v5684 = vpack.c.b16 %v5212, %v5210
    %v5685 = vpack.c.b16 %v5215, %v5213
    %v5686 = vpack.c.b16 %v5216, %v5214
    %v5687 = vpack.c.b16 %v5219, %v5217
    %v5688 = vpack.c.b16 %v5220, %v5218
    %v5689 = vpack.c.b16 %v5223, %v5221
    %v5690 = vpack.c.b16 %v5224, %v5222
    %v5691 = vpack.c.b16 %v5227, %v5225
    %v5692 = vpack.c.b16 %v5228, %v5226
    %v5693 = vpack.c.b16 %v5231, %v5229
    %v5694 = vpack.c.b16 %v5232, %v5230
    %v5695 = vpack.c.b16 %v5235, %v5233
    %v5696 = vpack.c.b16 %v5236, %v5234
    %v5697 = vpack.c.b16 %v5239, %v5237
    %v5698 = vpack.c.b16 %v5240, %v5238
    %v5699 = vpack.c.b16 %v5243, %v5241
    %v5700 = vpack.c.b16 %v5244, %v5242
    %v5701 = vpack.c.b16 %v5247, %v5245
    %v5702 = vpack.c.b16 %v5248, %v5246
    %v5703 = vpack.c.b16 %v5251, %v5249
    %v5704 = vpack.c.b16 %v5252, %v5250
    %v5705 = vpack.c.b16 %v5255, %v5253
    %v5706 = vpack.c.b16 %v5256, %v5254
    %v5707 = vpack.c.b16 %v5259, %v5257
    %v5708 = vpack.c.b16 %v5260, %v5258
    %v5709 = vpack.c.b16 %v5263, %v5261
    %v5710 = vpack.c.b16 %v5264, %v5262
    %v5711 = vpack.c.b16 %v5267, %v5265
    %v5712 = vpack.c.b16 %v5268, %v5266
    %v5713 = vpack.c.b16 %v5271, %v5269
    %v5714 = vpack.c.b16 %v5272, %v5270
    %v5715 = vpack.c.b16 %v5275, %v5273
    %v5716 = vpack.c.b16 %v5276, %v5274
    %v5717 = vpack.c.b16 %v5279, %v5277
    %v5718 = vpack.c.b16 %v5280, %v5278
    %v5719 = vpack.c.b16 %v5283, %v5281
    %v5720 = vpack.c.b16 %v5284, %v5282
    %v5721 = vpack.c.b16 %v5287, %v5285
    %v5722 = vpack.c.b16 %v5288, %v5286
    %v5723 = vpack.c.b16 %v5291, %v5289
    %v5724 = vpack.c.b16 %v5292, %v5290
    %v5725 = vpack.c.b16 %v5295, %v5293
    %v5726 = vpack.c.b16 %v5296, %v5294
    %v5727 = vpack.c.b16 %v5299, %v5297
    %v5728 = vpack.c.b16 %v5300, %v5298
    %v5729 = vpack.c.b16 %v5303, %v5301
    %v5730 = vpack.c.b16 %v5304, %v5302
    %v5731 = vpack.c.b16 %v5307, %v5305
    %v5732 = vpack.c.b16 %v5308, %v5306
    %v5733 = vpack.c.b16 %v5311, %v5309
    %v5734 = vpack.c.b16 %v5312, %v5310
    %v5735 = vpack.c.b16 %v5315, %v5313
    %v5736 = vpack.c.b16 %v5316, %v5314
    %v5737 = vpack.c.b16 %v5319, %v5317
    %v5738 = vpack.c.b16 %v5320, %v5318
    %v5739 = vpack.c.b16 %v5323, %v5321
    %v5740 = vpack.c.b16 %v5324, %v5322
    %v5741 = vpack.c.b16 %v5327, %v5325
    %v5742 = vpack.c.b16 %v5328, %v5326
    %v5743 = vpack.c.b16 %v5331, %v5329
    %v5744 = vpack.c.b16 %v5332, %v5330
    %v5745 = vpack.c.b16 %v5335, %v5333
    %v5746 = vpack.c.b16 %v5336, %v5334
    %v5747 = vpack.c.b16 %v5339, %v5337
    %v5748 = vpack.c.b16 %v5340, %v5338
    %v5749 = vpack.c.b16 %v5343, %v5341
    %v5750 = vpack.c.b16 %v5344, %v5342
    %v5751 = vpack.c.b16 %v5347, %v5345
    %v5752 = vpack.c.b16 %v5348, %v5346
    %v5753 = vpack.c.b16 %v5351, %v5349
    %v5754 = vpack.c.b16 %v5352, %v5350
    %v5755 = vpack.c.b16 %v5355, %v5353
    %v5756 = vpack.c.b16 %v5356, %v5354
    %6157 = vmatprep.subr.bf16.mxu0 %v5358
    %6158 = vmatpush1.bf16.msra.mxu0 %v5357
    %6159 = vmatprep.subr.bf16.mxu0 %v5360
    %6160 = vmatpush1.bf16.msra.mxu0 %v5359
    %6161 = vmatprep.subr.bf16.mxu0 %v5362
    %6162 = vmatpush1.bf16.msra.mxu0 %v5361
    %6163 = vmatprep.subr.bf16.mxu0 %v5364
    %6164 = vmatpush1.bf16.msra.mxu0 %v5363
    %6165 = vmatprep.subr.bf16.mxu0 %v5366
    %6166 = vmatpush1.bf16.msra.mxu0 %v5365
    %6167 = vmatprep.subr.bf16.mxu0 %v5368
    %6168 = vmatpush1.bf16.msra.mxu0 %v5367
    %6169 = vmatprep.subr.bf16.mxu0 %v5370
    %6170 = vmatpush1.bf16.msra.mxu0 %v5369
    %6171 = vmatprep.subr.bf16.mxu0 %v5372
    %6172 = vmatpush1.bf16.msra.mxu0 %v5371
    %6173 = vmatprep.subr.bf16.mxu0 %v5374
    %6174 = vmatpush1.bf16.msra.mxu0 %v5373
    %6175 = vmatprep.subr.bf16.mxu0 %v5376
    %6176 = vmatpush1.bf16.msra.mxu0 %v5375
    %6177 = vmatprep.subr.bf16.mxu0 %v5378
    %6178 = vmatpush1.bf16.msra.mxu0 %v5377
    %6179 = vmatprep.subr.bf16.mxu0 %v5380
    %6180 = vmatpush1.bf16.msra.mxu0 %v5379
    %6181 = vmatprep.subr.bf16.mxu0 %v5382
    %6182 = vmatpush1.bf16.msra.mxu0 %v5381
    %6183 = vmatprep.subr.bf16.mxu0 %v5384
    %6184 = vmatpush1.bf16.msra.mxu0 %v5383
    %6185 = vmatprep.subr.bf16.mxu0 %v5386
    %6186 = vmatpush1.bf16.msra.mxu0 %v5385
    %6187 = vmatprep.subr.bf16.mxu0 %v5388
    %6188 = vmatpush1.bf16.msra.mxu0 %v5387
    %6189 = vmatprep.mubr.bf16.mxu0 %v4008
    %6190 = vmatmul.mubr.bf16.gmra.mrb[0].mxu0 %v3994
    %v6191 = vpop.f32.mrb[0].mxu0
    %v6192 = vadd.f32 %v3960, %v6191
    %v6193 = vpop.f32.mrb[0].mxu0
    %v6194 = vadd.f32 %v3964, %v6193
    %v6195 = vpop.f32.mrb[0].mxu0
    %v6196 = vpop.f32.mrb[0].mxu0
    %6197 = vdwg.mxu0
    %6198 = vmatprep.subr.bf16.mxu0 %v5390
    %6199 = vmatpush1.bf16.msra.mxu0 %v5389
    %6200 = vmatprep.subr.bf16.mxu0 %v5392
    %6201 = vmatpush1.bf16.msra.mxu0 %v5391
    %6202 = vmatprep.subr.bf16.mxu0 %v5394
    %6203 = vmatpush1.bf16.msra.mxu0 %v5393
    %6204 = vmatprep.subr.bf16.mxu0 %v5396
    %6205 = vmatpush1.bf16.msra.mxu0 %v5395
    %6206 = vmatprep.subr.bf16.mxu0 %v5398
    %6207 = vmatpush1.bf16.msra.mxu0 %v5397
    %6208 = vmatprep.subr.bf16.mxu0 %v5400
    %6209 = vmatpush1.bf16.msra.mxu0 %v5399
    %6210 = vmatprep.subr.bf16.mxu0 %v5402
    %6211 = vmatpush1.bf16.msra.mxu0 %v5401
    %6212 = vmatprep.subr.bf16.mxu0 %v5404
    %6213 = vmatpush1.bf16.msra.mxu0 %v5403
    %6214 = vmatprep.subr.bf16.mxu0 %v5406
    %6215 = vmatpush1.bf16.msra.mxu0 %v5405
    %6216 = vmatprep.subr.bf16.mxu0 %v5408
    %6217 = vmatpush1.bf16.msra.mxu0 %v5407
    %6218 = vmatprep.subr.bf16.mxu0 %v5410
    %6219 = vmatpush1.bf16.msra.mxu0 %v5409
    %6220 = vmatprep.subr.bf16.mxu0 %v5412
    %6221 = vmatpush1.bf16.msra.mxu0 %v5411
    %6222 = vmatprep.subr.bf16.mxu0 %v5414
    %6223 = vmatpush1.bf16.msra.mxu0 %v5413
    %6224 = vmatprep.subr.bf16.mxu0 %v5416
    %6225 = vmatpush1.bf16.msra.mxu0 %v5415
    %6226 = vmatprep.subr.bf16.mxu0 %v5418
    %6227 = vmatpush1.bf16.msra.mxu0 %v5417
    %6228 = vmatprep.subr.bf16.mxu0 %v5420
    %6229 = vmatpush1.bf16.msra.mxu0 %v5419
    %6230 = vmatprep.mubr.bf16.mxu0 %v4018
    %6231 = vmatmul.mubr.bf16.gmra.mrb[0].mxu0 %v4016
    %v6232 = vpop.f32.mrb[0].mxu0
    %v6233 = vadd.f32 %v6192, %v6232
    %v6234 = vpop.f32.mrb[0].mxu0
    %v6235 = vadd.f32 %v6194, %v6234
    %v6236 = vpop.f32.mrb[0].mxu0
    %v6237 = vpop.f32.mrb[0].mxu0
    %6238 = vdwg.mxu0
    %6239 = vmatprep.subr.bf16.mxu0 %v5422
    %6240 = vmatpush1.bf16.msra.mxu0 %v5421
    %6241 = vmatprep.subr.bf16.mxu0 %v5424
    %6242 = vmatpush1.bf16.msra.mxu0 %v5423
    %6243 = vmatprep.subr.bf16.mxu0 %v5426
    %6244 = vmatpush1.bf16.msra.mxu0 %v5425
    %6245 = vmatprep.subr.bf16.mxu0 %v5428
    %6246 = vmatpush1.bf16.msra.mxu0 %v5427
    %6247 = vmatprep.subr.bf16.mxu0 %v5430
    %6248 = vmatpush1.bf16.msra.mxu0 %v5429
    %6249 = vmatprep.subr.bf16.mxu0 %v5432
    %6250 = vmatpush1.bf16.msra.mxu0 %v5431
    %6251 = vmatprep.subr.bf16.mxu0 %v5434
    %6252 = vmatpush1.bf16.msra.mxu0 %v5433
    %6253 = vmatprep.subr.bf16.mxu0 %v5436
    %6254 = vmatpush1.bf16.msra.mxu0 %v5435
    %6255 = vmatprep.subr.bf16.mxu0 %v5438
    %6256 = vmatpush1.bf16.msra.mxu0 %v5437
    %6257 = vmatprep.subr.bf16.mxu0 %v5440
    %6258 = vmatpush1.bf16.msra.mxu0 %v5439
    %6259 = vmatprep.subr.bf16.mxu0 %v5442
    %6260 = vmatpush1.bf16.msra.mxu0 %v5441
    %6261 = vmatprep.subr.bf16.mxu0 %v5444
    %6262 = vmatpush1.bf16.msra.mxu0 %v5443
    %6263 = vmatprep.subr.bf16.mxu0 %v5446
    %6264 = vmatpush1.bf16.msra.mxu0 %v5445
    %6265 = vmatprep.subr.bf16.mxu0 %v5448
    %6266 = vmatpush1.bf16.msra.mxu0 %v5447
    %6267 = vmatprep.subr.bf16.mxu0 %v5450
    %6268 = vmatpush1.bf16.msra.mxu0 %v5449
    %6269 = vmatprep.subr.bf16.mxu0 %v5452
    %6270 = vmatpush1.bf16.msra.mxu0 %v5451
    %6271 = vmatprep.mubr.bf16.mxu0 %v4015
    %6272 = vmatmul.mubr.bf16.gmra.mrb[0].mxu0 %v4001
    %v6273 = vpop.f32.mrb[0].mxu0
    %v6274 = vadd.f32 %v6233, %v6273
    %v6275 = vpop.f32.mrb[0].mxu0
    %v6276 = vadd.f32 %v6235, %v6275
    %v6277 = vpop.f32.mrb[0].mxu0
    %v6278 = vpop.f32.mrb[0].mxu0
    %6279 = vdwg.mxu0
    %6280 = vmatprep.subr.bf16.mxu0 %v5454
    %6281 = vmatpush1.bf16.msra.mxu0 %v5453
    %6282 = vmatprep.subr.bf16.mxu0 %v5456
    %6283 = vmatpush1.bf16.msra.mxu0 %v5455
    %6284 = vmatprep.subr.bf16.mxu0 %v5458
    %6285 = vmatpush1.bf16.msra.mxu0 %v5457
    %6286 = vmatprep.subr.bf16.mxu0 %v5460
    %6287 = vmatpush1.bf16.msra.mxu0 %v5459
    %6288 = vmatprep.subr.bf16.mxu0 %v5462
    %6289 = vmatpush1.bf16.msra.mxu0 %v5461
    %6290 = vmatprep.subr.bf16.mxu0 %v5464
    %6291 = vmatpush1.bf16.msra.mxu0 %v5463
    %6292 = vmatprep.subr.bf16.mxu0 %v5466
    %6293 = vmatpush1.bf16.msra.mxu0 %v5465
    %6294 = vmatprep.subr.bf16.mxu0 %v5468
    %6295 = vmatpush1.bf16.msra.mxu0 %v5467
    %6296 = vmatprep.subr.bf16.mxu0 %v5470
    %6297 = vmatpush1.bf16.msra.mxu0 %v5469
    %6298 = vmatprep.subr.bf16.mxu0 %v5472
    %6299 = vmatpush1.bf16.msra.mxu0 %v5471
    %6300 = vmatprep.subr.bf16.mxu0 %v5474
    %6301 = vmatpush1.bf16.msra.mxu0 %v5473
    %6302 = vmatprep.subr.bf16.mxu0 %v5476
    %6303 = vmatpush1.bf16.msra.mxu0 %v5475
    %6304 = vmatprep.subr.bf16.mxu0 %v5478
    %6305 = vmatpush1.bf16.msra.mxu0 %v5477
    %6306 = vmatprep.subr.bf16.mxu0 %v5480
    %6307 = vmatpush1.bf16.msra.mxu0 %v5479
    %6308 = vmatprep.subr.bf16.mxu0 %v5482
    %6309 = vmatpush1.bf16.msra.mxu0 %v5481
    %6310 = vmatprep.subr.bf16.mxu0 %v5484
    %6311 = vmatpush1.bf16.msra.mxu0 %v5483
    %6312 = vmatprep.mubr.bf16.mxu0 %v4019
    %6313 = vmatmul.mubr.bf16.gmra.mrb[0].mxu0 %v4017
    %v6314 = vpop.f32.mrb[0].mxu0
    %v6315 = vadd.f32 %v6274, %v6314
    %v6316 = vpop.f32.mrb[0].mxu0
    %v6317 = vadd.f32 %v6276, %v6316
    %v6318 = vpop.f32.mrb[0].mxu0
    %v6319 = vpop.f32.mrb[0].mxu0
    %6320 = vdwg.mxu0
    %6321 = vmatprep.subr.bf16.mxu0 %v5486
    %6322 = vmatpush1.bf16.msra.mxu0 %v5485
    %6323 = vmatprep.subr.bf16.mxu0 %v5488
    %6324 = vmatpush1.bf16.msra.mxu0 %v5487
    %6325 = vmatprep.subr.bf16.mxu0 %v5490
    %6326 = vmatpush1.bf16.msra.mxu0 %v5489
    %6327 = vmatprep.subr.bf16.mxu0 %v5492
    %6328 = vmatpush1.bf16.msra.mxu0 %v5491
    %6329 = vmatprep.subr.bf16.mxu0 %v5494
    %6330 = vmatpush1.bf16.msra.mxu0 %v5493
    %6331 = vmatprep.subr.bf16.mxu0 %v5496
    %6332 = vmatpush1.bf16.msra.mxu0 %v5495
    %6333 = vmatprep.subr.bf16.mxu0 %v5498
    %6334 = vmatpush1.bf16.msra.mxu0 %v5497
    %6335 = vmatprep.subr.bf16.mxu0 %v5500
    %6336 = vmatpush1.bf16.msra.mxu0 %v5499
    %6337 = vmatprep.subr.bf16.mxu0 %v5502
    %6338 = vmatpush1.bf16.msra.mxu0 %v5501
    %6339 = vmatprep.subr.bf16.mxu0 %v5504
    %6340 = vmatpush1.bf16.msra.mxu0 %v5503
    %6341 = vmatprep.subr.bf16.mxu0 %v5506
    %6342 = vmatpush1.bf16.msra.mxu0 %v5505
    %6343 = vmatprep.subr.bf16.mxu0 %v5508
    %6344 = vmatpush1.bf16.msra.mxu0 %v5507
    %6345 = vmatprep.subr.bf16.mxu0 %v5510
    %6346 = vmatpush1.bf16.msra.mxu0 %v5509
    %6347 = vmatprep.subr.bf16.mxu0 %v5512
    %6348 = vmatpush1.bf16.msra.mxu0 %v5511
    %6349 = vmatprep.subr.bf16.mxu0 %v5514
    %6350 = vmatpush1.bf16.msra.mxu0 %v5513
    %6351 = vmatprep.subr.bf16.mxu0 %v5516
    %6352 = vmatpush1.bf16.msra.mxu0 %v5515
    %6353 = vmatprep.mubr.bf16.mxu0 %v4057
    %6354 = vmatmul.mubr.bf16.gmra.mrb[0].mxu0 %v4043
    %v6355 = vpop.f32.mrb[0].mxu0
    %v6356 = vadd.f32 %v6315, %v6355
    %v6357 = vpop.f32.mrb[0].mxu0
    %v6358 = vadd.f32 %v6317, %v6357
    %v6359 = vpop.f32.mrb[0].mxu0
    %v6360 = vpop.f32.mrb[0].mxu0
    %6361 = vdwg.mxu0
    %6362 = vmatprep.subr.bf16.mxu0 %v5518
    %6363 = vmatpush1.bf16.msra.mxu0 %v5517
    %6364 = vmatprep.subr.bf16.mxu0 %v5520
    %6365 = vmatpush1.bf16.msra.mxu0 %v5519
    %6366 = vmatprep.subr.bf16.mxu0 %v5522
    %6367 = vmatpush1.bf16.msra.mxu0 %v5521
    %6368 = vmatprep.subr.bf16.mxu0 %v5524
    %6369 = vmatpush1.bf16.msra.mxu0 %v5523
    %6370 = vmatprep.subr.bf16.mxu0 %v5526
    %6371 = vmatpush1.bf16.msra.mxu0 %v5525
    %6372 = vmatprep.subr.bf16.mxu0 %v5528
    %6373 = vmatpush1.bf16.msra.mxu0 %v5527
    %6374 = vmatprep.subr.bf16.mxu0 %v5530
    %6375 = vmatpush1.bf16.msra.mxu0 %v5529
    %6376 = vmatprep.subr.bf16.mxu0 %v5532
    %6377 = vmatpush1.bf16.msra.mxu0 %v5531
    %6378 = vmatprep.subr.bf16.mxu0 %v5534
    %6379 = vmatpush1.bf16.msra.mxu0 %v5533
    %6380 = vmatprep.subr.bf16.mxu0 %v5536
    %6381 = vmatpush1.bf16.msra.mxu0 %v5535
    %6382 = vmatprep.subr.bf16.mxu0 %v5538
    %6383 = vmatpush1.bf16.msra.mxu0 %v5537
    %6384 = vmatprep.subr.bf16.mxu0 %v5540
    %6385 = vmatpush1.bf16.msra.mxu0 %v5539
    %6386 = vmatprep.subr.bf16.mxu0 %v5542
    %6387 = vmatpush1.bf16.msra.mxu0 %v5541
    %6388 = vmatprep.subr.bf16.mxu0 %v5544
    %6389 = vmatpush1.bf16.msra.mxu0 %v5543
    %6390 = vmatprep.subr.bf16.mxu0 %v5546
    %6391 = vmatpush1.bf16.msra.mxu0 %v5545
    %6392 = vmatprep.subr.bf16.mxu0 %v5548
    %6393 = vmatpush1.bf16.msra.mxu0 %v5547
    %6394 = vmatprep.mubr.bf16.mxu0 %v4067
    %6395 = vmatmul.mubr.bf16.gmra.mrb[0].mxu0 %v4065
    %v6396 = vpop.f32.mrb[0].mxu0
    %v6397 = vadd.f32 %v6356, %v6396
    %v6398 = vpop.f32.mrb[0].mxu0
    %v6399 = vadd.f32 %v6358, %v6398
    %v6400 = vpop.f32.mrb[0].mxu0
    %v6401 = vpop.f32.mrb[0].mxu0
    %6402 = vdwg.mxu0
    %6403 = vmatprep.subr.bf16.mxu0 %v5550
    %6404 = vmatpush1.bf16.msra.mxu0 %v5549
    %6405 = vmatprep.subr.bf16.mxu0 %v5552
    %6406 = vmatpush1.bf16.msra.mxu0 %v5551
    %6407 = vmatprep.subr.bf16.mxu0 %v5554
    %6408 = vmatpush1.bf16.msra.mxu0 %v5553
    %6409 = vmatprep.subr.bf16.mxu0 %v5556
    %6410 = vmatpush1.bf16.msra.mxu0 %v5555
    %6411 = vmatprep.subr.bf16.mxu0 %v5558
    %6412 = vmatpush1.bf16.msra.mxu0 %v5557
    %6413 = vmatprep.subr.bf16.mxu0 %v5560
    %6414 = vmatpush1.bf16.msra.mxu0 %v5559
    %6415 = vmatprep.subr.bf16.mxu0 %v5562
    %6416 = vmatpush1.bf16.msra.mxu0 %v5561
    %6417 = vmatprep.subr.bf16.mxu0 %v5564
    %6418 = vmatpush1.bf16.msra.mxu0 %v5563
    %6419 = vmatprep.subr.bf16.mxu0 %v5566
    %6420 = vmatpush1.bf16.msra.mxu0 %v5565
    %6421 = vmatprep.subr.bf16.mxu0 %v5568
    %6422 = vmatpush1.bf16.msra.mxu0 %v5567
    %6423 = vmatprep.subr.bf16.mxu0 %v5570
    %6424 = vmatpush1.bf16.msra.mxu0 %v5569
    %6425 = vmatprep.subr.bf16.mxu0 %v5572
    %6426 = vmatpush1.bf16.msra.mxu0 %v5571
    %6427 = vmatprep.subr.bf16.mxu0 %v5574
    %6428 = vmatpush1.bf16.msra.mxu0 %v5573
    %6429 = vmatprep.subr.bf16.mxu0 %v5576
    %6430 = vmatpush1.bf16.msra.mxu0 %v5575
    %6431 = vmatprep.subr.bf16.mxu0 %v5578
    %6432 = vmatpush1.bf16.msra.mxu0 %v5577
    %6433 = vmatprep.subr.bf16.mxu0 %v5580
    %6434 = vmatpush1.bf16.msra.mxu0 %v5579
    %6435 = vmatprep.mubr.bf16.mxu0 %v4064
    %6436 = vmatmul.mubr.bf16.gmra.mrb[0].mxu0 %v4050
    %v6437 = vpop.f32.mrb[0].mxu0
    %v6438 = vadd.f32 %v6397, %v6437
    %v6439 = vpop.f32.mrb[0].mxu0
    %v6440 = vadd.f32 %v6399, %v6439
    %v6441 = vpop.f32.mrb[0].mxu0
    %v6442 = vpop.f32.mrb[0].mxu0
    %6443 = vdwg.mxu0
    %6444 = vmatprep.subr.bf16.mxu0 %v5582
    %6445 = vmatpush1.bf16.msra.mxu0 %v5581
    %6446 = vmatprep.subr.bf16.mxu0 %v5584
    %6447 = vmatpush1.bf16.msra.mxu0 %v5583
    %6448 = vmatprep.subr.bf16.mxu0 %v5586
    %6449 = vmatpush1.bf16.msra.mxu0 %v5585
    %6450 = vmatprep.subr.bf16.mxu0 %v5588
    %6451 = vmatpush1.bf16.msra.mxu0 %v5587
    %6452 = vmatprep.subr.bf16.mxu0 %v5590
    %6453 = vmatpush1.bf16.msra.mxu0 %v5589
    %6454 = vmatprep.subr.bf16.mxu0 %v5592
    %6455 = vmatpush1.bf16.msra.mxu0 %v5591
    %6456 = vmatprep.subr.bf16.mxu0 %v5594
    %6457 = vmatpush1.bf16.msra.mxu0 %v5593
    %6458 = vmatprep.subr.bf16.mxu0 %v5596
    %6459 = vmatpush1.bf16.msra.mxu0 %v5595
    %6460 = vmatprep.subr.bf16.mxu0 %v5598
    %6461 = vmatpush1.bf16.msra.mxu0 %v5597
    %6462 = vmatprep.subr.bf16.mxu0 %v5600
    %6463 = vmatpush1.bf16.msra.mxu0 %v5599
    %6464 = vmatprep.subr.bf16.mxu0 %v5602
    %6465 = vmatpush1.bf16.msra.mxu0 %v5601
    %6466 = vmatprep.subr.bf16.mxu0 %v5604
    %6467 = vmatpush1.bf16.msra.mxu0 %v5603
    %6468 = vmatprep.subr.bf16.mxu0 %v5606
    %6469 = vmatpush1.bf16.msra.mxu0 %v5605
    %6470 = vmatprep.subr.bf16.mxu0 %v5608
    %6471 = vmatpush1.bf16.msra.mxu0 %v5607
    %6472 = vmatprep.subr.bf16.mxu0 %v5610
    %6473 = vmatpush1.bf16.msra.mxu0 %v5609
    %6474 = vmatprep.subr.bf16.mxu0 %v5612
    %6475 = vmatpush1.bf16.msra.mxu0 %v5611
    %6476 = vmatprep.mubr.bf16.mxu0 %v4068
    %6477 = vmatmul.mubr.bf16.gmra.mrb[0].mxu0 %v4066
    %v6478 = vpop.f32.mrb[0].mxu0
    %v6479 = vadd.f32 %v6438, %v6478
    %v6480 = vpop.f32.mrb[0].mxu0
    %v6481 = vadd.f32 %v6440, %v6480
    %v6482 = vpop.f32.mrb[0].mxu0
    %v6483 = vpop.f32.mrb[0].mxu0
    %6484 = vdwg.mxu0
    %6485 = vmatprep.subr.bf16.mxu0 %v5614
    %6486 = vmatpush1.bf16.msra.mxu0 %v5613
    %6487 = vmatprep.subr.bf16.mxu0 %v5616
    %6488 = vmatpush1.bf16.msra.mxu0 %v5615
    %6489 = vmatprep.subr.bf16.mxu0 %v5618
    %6490 = vmatpush1.bf16.msra.mxu0 %v5617
    %6491 = vmatprep.subr.bf16.mxu0 %v5620
    %6492 = vmatpush1.bf16.msra.mxu0 %v5619
    %6493 = vmatprep.subr.bf16.mxu0 %v5622
    %6494 = vmatpush1.bf16.msra.mxu0 %v5621
    %6495 = vmatprep.subr.bf16.mxu0 %v5624
    %6496 = vmatpush1.bf16.msra.mxu0 %v5623
    %6497 = vmatprep.subr.bf16.mxu0 %v5626
    %6498 = vmatpush1.bf16.msra.mxu0 %v5625
    %6499 = vmatprep.subr.bf16.mxu0 %v5628
    %6500 = vmatpush1.bf16.msra.mxu0 %v5627
    %6501 = vmatprep.subr.bf16.mxu0 %v5630
    %6502 = vmatpush1.bf16.msra.mxu0 %v5629
    %6503 = vmatprep.subr.bf16.mxu0 %v5632
    %6504 = vmatpush1.bf16.msra.mxu0 %v5631
    %6505 = vmatprep.subr.bf16.mxu0 %v5634
    %6506 = vmatpush1.bf16.msra.mxu0 %v5633
    %6507 = vmatprep.subr.bf16.mxu0 %v5636
    %6508 = vmatpush1.bf16.msra.mxu0 %v5635
    %6509 = vmatprep.subr.bf16.mxu0 %v5638
    %6510 = vmatpush1.bf16.msra.mxu0 %v5637
    %6511 = vmatprep.subr.bf16.mxu0 %v5640
    %6512 = vmatpush1.bf16.msra.mxu0 %v5639
    %6513 = vmatprep.subr.bf16.mxu0 %v5642
    %6514 = vmatpush1.bf16.msra.mxu0 %v5641
    %6515 = vmatprep.subr.bf16.mxu0 %v5644
    %6516 = vmatpush1.bf16.msra.mxu0 %v5643
    %6517 = vmatprep.mubr.bf16.mxu0 %v4106
    %6518 = vmatmul.mubr.bf16.gmra.mrb[0].mxu0 %v4092
    %v6519 = vpop.f32.mrb[0].mxu0
    %v6520 = vadd.f32 %v6479, %v6519
    %v6521 = vpop.f32.mrb[0].mxu0
    %v6522 = vadd.f32 %v6481, %v6521
    %v6523 = vpop.f32.mrb[0].mxu0
    %v6524 = vpop.f32.mrb[0].mxu0
    %6525 = vdwg.mxu0
    %6526 = vmatprep.subr.bf16.mxu0 %v5646
    %6527 = vmatpush1.bf16.msra.mxu0 %v5645
    %6528 = vmatprep.subr.bf16.mxu0 %v5648
    %6529 = vmatpush1.bf16.msra.mxu0 %v5647
    %6530 = vmatprep.subr.bf16.mxu0 %v5650
    %6531 = vmatpush1.bf16.msra.mxu0 %v5649
    %6532 = vmatprep.subr.bf16.mxu0 %v5652
    %6533 = vmatpush1.bf16.msra.mxu0 %v5651
    %6534 = vmatprep.subr.bf16.mxu0 %v5654
    %6535 = vmatpush1.bf16.msra.mxu0 %v5653
    %6536 = vmatprep.subr.bf16.mxu0 %v5656
    %6537 = vmatpush1.bf16.msra.mxu0 %v5655
    %6538 = vmatprep.subr.bf16.mxu0 %v5658
    %6539 = vmatpush1.bf16.msra.mxu0 %v5657
    %6540 = vmatprep.subr.bf16.mxu0 %v5660
    %6541 = vmatpush1.bf16.msra.mxu0 %v5659
    %6542 = vmatprep.subr.bf16.mxu0 %v5662
    %6543 = vmatpush1.bf16.msra.mxu0 %v5661
    %6544 = vmatprep.subr.bf16.mxu0 %v5664
    %6545 = vmatpush1.bf16.msra.mxu0 %v5663
    %6546 = vmatprep.subr.bf16.mxu0 %v5666
    %6547 = vmatpush1.bf16.msra.mxu0 %v5665
    %6548 = vmatprep.subr.bf16.mxu0 %v5668
    %6549 = vmatpush1.bf16.msra.mxu0 %v5667
    %6550 = vmatprep.subr.bf16.mxu0 %v5670
    %6551 = vmatpush1.bf16.msra.mxu0 %v5669
    %6552 = vmatprep.subr.bf16.mxu0 %v5672
    %6553 = vmatpush1.bf16.msra.mxu0 %v5671
    %6554 = vmatprep.subr.bf16.mxu0 %v5674
    %6555 = vmatpush1.bf16.msra.mxu0 %v5673
    %6556 = vmatprep.subr.bf16.mxu0 %v5676
    %6557 = vmatpush1.bf16.msra.mxu0 %v5675
    %6558 = vmatprep.mubr.bf16.mxu0 %v4116
    %6559 = vmatmul.mubr.bf16.gmra.mrb[0].mxu0 %v4114
    %v6560 = vpop.f32.mrb[0].mxu0
    %v6561 = vadd.f32 %v6520, %v6560
    %v6562 = vpop.f32.mrb[0].mxu0
    %v6563 = vadd.f32 %v6522, %v6562
    %v6564 = vpop.f32.mrb[0].mxu0
    %v6565 = vpop.f32.mrb[0].mxu0
    %6566 = vdwg.mxu0
    %6567 = vmatprep.subr.bf16.mxu0 %v5678
    %6568 = vmatpush1.bf16.msra.mxu0 %v5677
    %6569 = vmatprep.subr.bf16.mxu0 %v5680
    %6570 = vmatpush1.bf16.msra.mxu0 %v5679
    %6571 = vmatprep.subr.bf16.mxu0 %v5682
    %6572 = vmatpush1.bf16.msra.mxu0 %v5681
    %6573 = vmatprep.subr.bf16.mxu0 %v5684
    %6574 = vmatpush1.bf16.msra.mxu0 %v5683
    %6575 = vmatprep.subr.bf16.mxu0 %v5686
    %6576 = vmatpush1.bf16.msra.mxu0 %v5685
    %6577 = vmatprep.subr.bf16.mxu0 %v5688
    %6578 = vmatpush1.bf16.msra.mxu0 %v5687
    %6579 = vmatprep.subr.bf16.mxu0 %v5690
    %6580 = vmatpush1.bf16.msra.mxu0 %v5689
    %6581 = vmatprep.subr.bf16.mxu0 %v5692
    %6582 = vmatpush1.bf16.msra.mxu0 %v5691
    %6583 = vmatprep.subr.bf16.mxu0 %v5694
    %6584 = vmatpush1.bf16.msra.mxu0 %v5693
    %6585 = vmatprep.subr.bf16.mxu0 %v5696
    %6586 = vmatpush1.bf16.msra.mxu0 %v5695
    %6587 = vmatprep.subr.bf16.mxu0 %v5698
    %6588 = vmatpush1.bf16.msra.mxu0 %v5697
    %6589 = vmatprep.subr.bf16.mxu0 %v5700
    %6590 = vmatpush1.bf16.msra.mxu0 %v5699
    %6591 = vmatprep.subr.bf16.mxu0 %v5702
    %6592 = vmatpush1.bf16.msra.mxu0 %v5701
    %6593 = vmatprep.subr.bf16.mxu0 %v5704
    %6594 = vmatpush1.bf16.msra.mxu0 %v5703
    %6595 = vmatprep.subr.bf16.mxu0 %v5706
    %6596 = vmatpush1.bf16.msra.mxu0 %v5705
    %6597 = vmatprep.subr.bf16.mxu0 %v5708
    %6598 = vmatpush1.bf16.msra.mxu0 %v5707
    %6599 = vmatprep.mubr.bf16.mxu0 %v4113
    %6600 = vmatmul.mubr.bf16.gmra.mrb[0].mxu0 %v4099
    %v6601 = vpop.f32.mrb[0].mxu0
    %v6602 = vadd.f32 %v6561, %v6601
    %v6603 = vpop.f32.mrb[0].mxu0
    %v6604 = vadd.f32 %v6563, %v6603
    %v6605 = vpop.f32.mrb[0].mxu0
    %v6606 = vpop.f32.mrb[0].mxu0
    %6607 = vdwg.mxu0
    %6608 = vmatprep.subr.bf16.mxu0 %v5710
    %6609 = vmatpush1.bf16.msra.mxu0 %v5709
    %6610 = vmatprep.subr.bf16.mxu0 %v5712
    %6611 = vmatpush1.bf16.msra.mxu0 %v5711
    %6612 = vmatprep.subr.bf16.mxu0 %v5714
    %6613 = vmatpush1.bf16.msra.mxu0 %v5713
    %6614 = vmatprep.subr.bf16.mxu0 %v5716
    %6615 = vmatpush1.bf16.msra.mxu0 %v5715
    %6616 = vmatprep.subr.bf16.mxu0 %v5718
    %6617 = vmatpush1.bf16.msra.mxu0 %v5717
    %6618 = vmatprep.subr.bf16.mxu0 %v5720
    %6619 = vmatpush1.bf16.msra.mxu0 %v5719
    %6620 = vmatprep.subr.bf16.mxu0 %v5722
    %6621 = vmatpush1.bf16.msra.mxu0 %v5721
    %6622 = vmatprep.subr.bf16.mxu0 %v5724
    %6623 = vmatpush1.bf16.msra.mxu0 %v5723
    %6624 = vmatprep.subr.bf16.mxu0 %v5726
    %6625 = vmatpush1.bf16.msra.mxu0 %v5725
    %6626 = vmatprep.subr.bf16.mxu0 %v5728
    %6627 = vmatpush1.bf16.msra.mxu0 %v5727
    %6628 = vmatprep.subr.bf16.mxu0 %v5730
    %6629 = vmatpush1.bf16.msra.mxu0 %v5729
    %6630 = vmatprep.subr.bf16.mxu0 %v5732
    %6631 = vmatpush1.bf16.msra.mxu0 %v5731
    %6632 = vmatprep.subr.bf16.mxu0 %v5734
    %6633 = vmatpush1.bf16.msra.mxu0 %v5733
    %6634 = vmatprep.subr.bf16.mxu0 %v5736
    %6635 = vmatpush1.bf16.msra.mxu0 %v5735
    %6636 = vmatprep.subr.bf16.mxu0 %v5738
    %6637 = vmatpush1.bf16.msra.mxu0 %v5737
    %6638 = vmatprep.subr.bf16.mxu0 %v5740
    %6639 = vmatpush1.bf16.msra.mxu0 %v5739
    %6640 = vmatprep.mubr.bf16.mxu0 %v4117
    %6641 = vmatmul.mubr.bf16.gmra.mrb[0].mxu0 %v4115
    %v6642 = vpop.f32.mrb[0].mxu0
    %v6643 = vadd.f32 %v6602, %v6642
    %v6644 = vpop.f32.mrb[0].mxu0
    %v6645 = vadd.f32 %v6604, %v6644
    %v6646 = vpop.f32.mrb[0].mxu0
    %v6647 = vpop.f32.mrb[0].mxu0
    %6648 = vdwg.mxu0
    %6649 = vmatprep.subr.bf16.mxu0 %v5742
    %6650 = vmatpush1.bf16.msra.mxu0 %v5741
    %6651 = vmatprep.subr.bf16.mxu0 %v5744
    %6652 = vmatpush1.bf16.msra.mxu0 %v5743
    %6653 = vmatprep.subr.bf16.mxu0 %v5746
    %6654 = vmatpush1.bf16.msra.mxu0 %v5745
    %6655 = vmatprep.subr.bf16.mxu0 %v5748
    %6656 = vmatpush1.bf16.msra.mxu0 %v5747
    %6657 = vmatprep.subr.bf16.mxu0 %v5750
    %6658 = vmatpush1.bf16.msra.mxu0 %v5749
    %6659 = vmatprep.subr.bf16.mxu0 %v5752
    %6660 = vmatpush1.bf16.msra.mxu0 %v5751
    %6661 = vmatprep.subr.bf16.mxu0 %v5754
    %6662 = vmatpush1.bf16.msra.mxu0 %v5753
    %6663 = vmatprep.subr.bf16.mxu0 %v5756
    %6664 = vmatpush1.bf16.msra.mxu0 %v5755
    %6665 = vmatprep.subr.bf16.mxu0 0
    %6666 = vmatpush1.bf16.msra.mxu0 0
    %6667 = vmatprep.subr.bf16.mxu0 0
    %6668 = vmatpush1.bf16.msra.mxu0 0
    %6669 = vmatprep.subr.bf16.mxu0 0
    %6670 = vmatpush1.bf16.msra.mxu0 0
    %6671 = vmatprep.subr.bf16.mxu0 0
    %6672 = vmatpush1.bf16.msra.mxu0 0
    %6673 = vmatprep.subr.bf16.mxu0 0
    %6674 = vmatpush1.bf16.msra.mxu0 0
    %6675 = vmatprep.subr.bf16.mxu0 0
    %6676 = vmatpush1.bf16.msra.mxu0 0
    %6677 = vmatprep.subr.bf16.mxu0 0
    %6678 = vmatpush1.bf16.msra.mxu0 0
    %6679 = vmatprep.subr.bf16.mxu0 0
    %6680 = vmatpush1.bf16.msra.mxu0 0
    %6681 = vmatprep.mubr.bf16.mxu0 0
    %6682 = vmatmul.mubr.bf16.gmra.mrb[0].mxu0 %v4131
    %v6683 = vpop.f32.mrb[0].mxu0
    %v6684 = vadd.f32 %v6643, %v6683
    %v6685 = vpop.f32.mrb[0].mxu0
    %v6686 = vadd.f32 %v6645, %v6685
    %v6687 = vpop.f32.mrb[0].mxu0
    %v6688 = vpop.f32.mrb[0].mxu0
    %6689 = vdwg.mxu0
    %v6690 = vsub.f32 0.0, %v6684
    %v6691 = vsub.f32 0.0, %v6686
    %v6692 = vmul.f32 %v6690, 1.442695
    %v6693 = vpow.pop %v6692
    %v6694 = vmul.f32 %v6691, 1.442695
    %v6695 = vpow.pop %v6694
    %v6696 = vadd.f32 %v6693, 1.0
    %v6697 = vadd.f32 %v6695, 1.0
    %v6698 = vrcp.pop %v6696
    %v6699 = vrcp.pop %v6697
    %v6702 = vcombine.low %v6698, %v6699
    %v6704 = vunpack.c.l.s4 1983009808
    %v6705 = vunpack.c.0.s8 %v6704
    %v6706 = vlaneseq
    %v6707 = vshrl.u32 %v6706, 7
    %v6708 = vsub.s32 %v6705, %v6707
    %v6709 = vrot.slane %v6702, %v6708
    %6711 = vst [vmem:[%s7] sm:$0xf] %v6709
    // Predicated region
    $region58: #{image_decoder_forward.1} parent=1 // pred_check
      _
    $region59: #{image_decoder_forward.1} parent=1 // pred_check_branch
      %6713 = sbr.rel (0) target = $region61
    $region60: #{image_decoder_forward.1} parent=1 // pred_region
      _
    $region61: #{image_decoder_forward.1} parent=1 // pred_fallthru
      _
    // Predicated region
    $region62: #{image_decoder_forward.1} parent=1 // pred_check
      _
    $region63: #{image_decoder_forward.1} parent=1 // pred_check_branch
      %6715 = sbr.rel (0) target = $region65
    $region64: #{image_decoder_forward.1} parent=1 // pred_region
      _
    $region65: #{image_decoder_forward.1} parent=1 // pred_fallthru
      _
    %6716 = vsyncpa [#allocation4], 1
    %6717 = vsyncpa [#allocation6], 1
    %6718 = vsyncpa [#allocation9], 1
    %6719 = vsyncpa [#allocation12], 1

</llo_original>
